<compile_context>
chip_gen: v5e
topology: v5e:2x2
jax: 0.10.0
libtpu: 0.0.40
codegen_flags: <defaults>
</compile_context>

<pallas_src>
import functools

import jax
import jax.numpy as jnp
from jax import lax
from jax.experimental import pallas as pl
from jax.experimental.pallas import tpu as pltpu

DROPOUT_P = 0.5  # nn.Dropout(0.5); module is in training mode by default


def _round_up(x, m):
    return ((x + m - 1) // m) * m


def lstm_dropout_kernel(x_ref, mask_ref, wih_ref, whh_ref, b_ref,
                        h0_ref, c0_ref,
                        out_ref, hn_ref, cn_ref,
                        h_scr, c_scr, xproj_ref,
                        *, seq_len, batch_pad, need_tail_guard):
    """One time-chunk of a single-layer LSTM (PyTorch gate order i,f,g,o)
    followed by inverted dropout on the per-step outputs.

    Shapes (Bp = padded batch, Hp = padded hidden, tT = time chunk):
      x_ref    : (tT*Bp, E)    bf16   embedded inputs, time-major, flattened
      mask_ref : (tT*Bp, Hp)   f32    precomputed inverted-dropout mask
      wih_ref  : (E, 4*Hp)     bf16   gate-stacked W_ih^T (zero-padded)
      whh_ref  : (Hp, 4*Hp)    bf16   gate-stacked W_hh^T (zero-padded)
      b_ref    : (1, 4*Hp)     f32    b_ih + b_hh (zero-padded)
      h0/c0    : (Bp, Hp)      f32    initial state
      out_ref  : (tT*Bp, Hp)   f32    dropped-out per-step hidden states
      hn/cn    : (Bp, Hp)      f32    final state (no dropout)
      h_scr/c_scr : (Bp, Hp)   f32    carry across time chunks (VMEM scratch)
      xproj_ref   : (tT*Bp, 4*Hp) f32 hoisted input projection for this chunk
    """
    Bp = batch_pad
    tT = x_ref.shape[0] // Bp
    Hp = h_scr.shape[1]
    chunk = pl.program_id(0)

    # Initialize the carried state on the first chunk only.
    @pl.when(chunk == 0)
    def _():
        h_scr[...] = h0_ref[...]
        c_scr[...] = c0_ref[...]

    # Hoisted input projection: one big MXU matmul for the whole chunk,
    # bias folded in once (not re-broadcast per step).
    xproj_ref[...] = (
        jnp.dot(x_ref[...], wih_ref[...], preferred_element_type=jnp.float32)
        + b_ref[...])

    def step(i, carry):
        h, c = carry
        row = pl.multiple_of(i * Bp, Bp)
        # Only the recurrent matmul stays inside the serial loop.
        gates = xproj_ref[pl.ds(row, Bp), :] + jnp.dot(
            h.astype(whh_ref.dtype), whh_ref[...],
            preferred_element_type=jnp.float32)              # (Bp, 4Hp)

        i_g = jax.nn.sigmoid(gates[:, 0 * Hp:1 * Hp])
        f_g = jax.nn.sigmoid(gates[:, 1 * Hp:2 * Hp])
        g_g = jnp.tanh(gates[:, 2 * Hp:3 * Hp])
        o_g = jax.nn.sigmoid(gates[:, 3 * Hp:4 * Hp])

        c_new = f_g * c + i_g * g_g
        h_new = o_g * jnp.tanh(c_new)

        # Inverted dropout on the output sequence only (matches nn.Dropout in
        # training mode); lane-dense (Bp, 128k) store.
        out_ref[pl.ds(row, Bp), :] = h_new * mask_ref[pl.ds(row, Bp), :]

        if need_tail_guard:
            # Ignore zero-padded time steps so the final state matches T.
            valid = (chunk * tT + i) < seq_len
            return jnp.where(valid, h_new, h), jnp.where(valid, c_new, c)
        return h_new, c_new

    h_fin, c_fin = lax.fori_loop(0, tT, step, (h_scr[...], c_scr[...]),
                                 unroll=True)

    h_scr[...] = h_fin
    c_scr[...] = c_fin
    hn_ref[...] = h_fin
    cn_ref[...] = c_fin


def init_params(key, input_dim, emb_dim, hidn_dim):
    """Deterministic parameter init matching the shapes of Encoder.__init__."""
    k1, k2, k3, k4, k5 = jax.random.split(key, 5)
    emb = jax.random.normal(k1, (input_dim, emb_dim), jnp.float32)
    emb = emb.at[0].set(0.0)  # padding_idx=0 -> zero row
    bound = 1.0 / (hidn_dim ** 0.5)
    w_ih = jax.random.uniform(k2, (4 * hidn_dim, emb_dim), jnp.float32,
                              -bound, bound)
    w_hh = jax.random.uniform(k3, (4 * hidn_dim, hidn_dim), jnp.float32,
                              -bound, bound)
    b_ih = jax.random.uniform(k4, (4 * hidn_dim,), jnp.float32, -bound, bound)
    b_hh = jax.random.uniform(k5, (4 * hidn_dim,), jnp.float32, -bound, bound)
    return {"embedding": emb, "w_ih": w_ih, "w_hh": w_hh,
            "b_ih": b_ih, "b_hh": b_hh}


def prepare_encoder_params(params, hidn_dim):
    """One-time layout work: transpose, gate-stack, zero-pad H->Hp, bf16 cast.

    Zero padding is exact: padded gate columns see zero weights/bias, so the
    padded hidden/cell entries stay exactly 0 through the recurrence.
    """
    emb = params["embedding"].astype(jnp.float32)
    E = emb.shape[1]
    H = hidn_dim
    Hp = _round_up(H, 128)

    def pad_gates(w, in_dim, in_pad):
        # w: (4H, in_dim) PyTorch layout -> (in_pad, 4*Hp) gate-stacked.
        w = w.reshape(4, H, in_dim)
        w = jnp.pad(w, ((0, 0), (0, Hp - H), (0, in_pad - in_dim)))
        return jnp.transpose(w.reshape(4 * Hp, in_pad))

    wih_t = pad_gates(params["w_ih"], E, E).astype(jnp.bfloat16)   # (E, 4Hp)
    whh_t = pad_gates(params["w_hh"], H, Hp).astype(jnp.bfloat16)  # (Hp, 4Hp)
    b = (params["b_ih"] + params["b_hh"]).reshape(4, H)
    b = jnp.pad(b, ((0, 0), (0, Hp - H))).reshape(1, 4 * Hp)
    return {"embedding": emb, "wih_t": wih_t, "whh_t": whh_t,
            "b": b.astype(jnp.float32), "H": H, "Hp": Hp, "E": E}


def encoder_forward(prep, inputs, prev_hidden, prev_cell, dropout_seed=0,
                    dropout_p=DROPOUT_P, training=True, time_chunk=16):
    """inputs: (B, T) int32 token ids; prev_hidden/prev_cell: (1, B, H).

    Returns output (B, T, H), hidden (1, B, H), cell (1, B, H) in float32,
    matching nn.LSTM(batch_first=True) + nn.Dropout (training mode) semantics.
    """
    emb = prep["embedding"]
    H, Hp, E = prep["H"], prep["Hp"], prep["E"]
    B, T = inputs.shape

    Bp = _round_up(max(B, 8), 8)        # f32 sublane multiple
    tT = max(1, min(time_chunk, T))     # time-chunk size
    T_pad = _round_up(T, tT)
    n_chunks = T_pad // tT
    need_tail_guard = (T_pad != T)

    # Embedding lookup, produced directly time-major (no post-hoc transpose of
    # the embedded tensor).  padding_idx=0 handled via zeroed row 0.
    x_tm = jnp.take(emb, inputs.T, axis=0).astype(jnp.bfloat16)    # (T, B, E)
    x_pad = jnp.zeros((T_pad, Bp, E), jnp.bfloat16).at[:T, :B].set(x_tm)
    x2d = x_pad.reshape(T_pad * Bp, E)

    # Inverted-dropout mask precomputed in the wrapper, applied in-kernel.
    # TODO(synk): switch to in-kernel pltpu.prng_random_bits on hardware; the
    # TPU PRNG primitive has no generic-interpret lowering.
    if training and dropout_p > 0.0:
        keep = jax.random.bernoulli(jax.random.PRNGKey(dropout_seed),
                                    1.0 - dropout_p, (T_pad * Bp, Hp))
        mask2d = keep.astype(jnp.float32) * (1.0 / (1.0 - dropout_p))
    else:
        mask2d = jnp.ones((T_pad * Bp, Hp), jnp.float32)

    h0 = jnp.zeros((Bp, Hp), jnp.float32).at[:B, :H].set(
        prev_hidden[0].astype(jnp.float32))
    c0 = jnp.zeros((Bp, Hp), jnp.float32).at[:B, :H].set(
        prev_cell[0].astype(jnp.float32))

    kernel = functools.partial(lstm_dropout_kernel, seq_len=T, batch_pad=Bp,
                               need_tail_guard=need_tail_guard)

    out2d, h_n, c_n = pl.pallas_call(
        kernel,
        out_shape=(
            jax.ShapeDtypeStruct((T_pad * Bp, Hp), jnp.float32),
            jax.ShapeDtypeStruct((Bp, Hp), jnp.float32),
            jax.ShapeDtypeStruct((Bp, Hp), jnp.float32),
        ),
        grid=(n_chunks,),
        in_specs=[
            pl.BlockSpec((tT * Bp, E), lambda t: (t, 0)),     # x chunk
            pl.BlockSpec((tT * Bp, Hp), lambda t: (t, 0)),    # dropout mask
            pl.BlockSpec((E, 4 * Hp), lambda t: (0, 0)),      # W_ih^T
            pl.BlockSpec((Hp, 4 * Hp), lambda t: (0, 0)),     # W_hh^T
            pl.BlockSpec((1, 4 * Hp), lambda t: (0, 0)),      # bias
            pl.BlockSpec((Bp, Hp), lambda t: (0, 0)),         # h0
            pl.BlockSpec((Bp, Hp), lambda t: (0, 0)),         # c0
        ],
        out_specs=(
            pl.BlockSpec((tT * Bp, Hp), lambda t: (t, 0)),    # output chunk
            pl.BlockSpec((Bp, Hp), lambda t: (0, 0)),         # final hidden
            pl.BlockSpec((Bp, Hp), lambda t: (0, 0)),         # final cell
        ),
        scratch_shapes=[
            pltpu.VMEM((Bp, Hp), jnp.float32),                # h carry
            pltpu.VMEM((Bp, Hp), jnp.float32),                # c carry
            pltpu.VMEM((tT * Bp, 4 * Hp), jnp.float32),       # input projection
        ],
        compiler_params=pltpu.CompilerParams(
            dimension_semantics=("arbitrary",)),              # serial time axis
    )(x2d, mask2d, prep["wih_t"], prep["whh_t"], prep["b"], h0, c0)

    out_tm = out2d.reshape(T_pad, Bp, Hp)[:T, :B, :H]         # (T, B, H)
    output = jnp.transpose(out_tm, (1, 0, 2))                 # (B, T, H)
    hidden = h_n[:B, :H][None]                                # (1, B, H)
    cell = c_n[:B, :H][None]                                  # (1, B, H)
    return output, hidden, cell


if __name__ == "__main__":
    # Small shapes consistent with the module: vocab=16, emb=32, hidden=32,
    # batch=2, seq_len=8.  (nn.LSTM with num_layers=1 takes prev_hidden /
    # prev_cell of shape (1, B, H); we follow actual PyTorch LSTM semantics.)
    INPUT_DIM, EMB_DIM, HIDN_DIM = 16, 32, 32
    B, T = 2, 8

    key = jax.random.PRNGKey(0)
    pkey, ikey, hkey, ckey = jax.random.split(key, 4)

    params = init_params(pkey, INPUT_DIM, EMB_DIM, HIDN_DIM)
    prep = prepare_encoder_params(params, HIDN_DIM)

    inputs = jax.random.randint(ikey, (B, T), 0, INPUT_DIM, dtype=jnp.int32)
    prev_hidden = jax.random.normal(hkey, (1, B, HIDN_DIM), jnp.float32)
    prev_cell = jax.random.normal(ckey, (1, B, HIDN_DIM), jnp.float32)

    output, hidden, cell = encoder_forward(prep, inputs, prev_hidden,
                                           prev_cell, dropout_seed=0)
    jax.block_until_ready((output, hidden, cell))

    assert output.shape == (B, T, HIDN_DIM)
    assert hidden.shape == (1, B, HIDN_DIM)
    assert cell.shape == (1, B, HIDN_DIM)
    assert bool(jnp.all(jnp.isfinite(output)))
    print("KERNEL_OK")
</pallas_src>

<mosaic_0001>
module attributes {stable_mosaic.version = 11 : i64} {
  func.func @lstm_dropout_kernel(%arg0: i32, %arg1: memref<64x32xbf16, #tpu.memory_space<vmem>>, %arg2: memref<64x128xf32, #tpu.memory_space<vmem>>, %arg3: memref<32x512xbf16, #tpu.memory_space<vmem>>, %arg4: memref<128x512xbf16, #tpu.memory_space<vmem>>, %arg5: memref<1x512xf32, #tpu.memory_space<vmem>>, %arg6: memref<8x128xf32, #tpu.memory_space<vmem>>, %arg7: memref<8x128xf32, #tpu.memory_space<vmem>>, %arg8: memref<64x128xf32, #tpu.memory_space<vmem>>, %arg9: memref<8x128xf32, #tpu.memory_space<vmem>>, %arg10: memref<8x128xf32, #tpu.memory_space<vmem>>, %arg11: memref<8x128xf32, #tpu.memory_space<vmem>>, %arg12: memref<8x128xf32, #tpu.memory_space<vmem>>, %arg13: memref<64x512xf32, #tpu.memory_space<vmem>>) attributes {dimension_semantics = [#tpu.dimension_semantics<arbitrary>], iteration_bounds = array<i64: 1>, scalar_prefetch = 0 : i64, scratch_operands = 3 : i64, tpu.core_type = #tpu.core_type<tc>, window_params = [{transform_indices = @transform_0, window_bounds = array<i64: 64, 32>}, {transform_indices = @transform_1, window_bounds = array<i64: 64, 128>}, {pipeline_mode = #tpu.pipeline_mode<synchronous>, transform_indices = @transform_2, window_bounds = array<i64: 32, 512>}, {pipeline_mode = #tpu.pipeline_mode<synchronous>, transform_indices = @transform_3, window_bounds = array<i64: 128, 512>}, {pipeline_mode = #tpu.pipeline_mode<synchronous>, transform_indices = @transform_4, window_bounds = array<i64: 1, 512>}, {pipeline_mode = #tpu.pipeline_mode<synchronous>, transform_indices = @transform_5, window_bounds = array<i64: 8, 128>}, {pipeline_mode = #tpu.pipeline_mode<synchronous>, transform_indices = @transform_6, window_bounds = array<i64: 8, 128>}, {transform_indices = @transform_7, window_bounds = array<i64: 64, 128>}, {pipeline_mode = #tpu.pipeline_mode<synchronous>, transform_indices = @transform_8, window_bounds = array<i64: 8, 128>}, {pipeline_mode = #tpu.pipeline_mode<synchronous>, transform_indices = @transform_9, window_bounds = array<i64: 8, 128>}]} {
    %c0_i32 = arith.constant 0 : i32
    %0 = arith.cmpi eq, %arg0, %c0_i32 : i32
    %1 = arith.extui %0 : i1 to i32
    %c0_i32_0 = arith.constant 0 : i32
    %2 = arith.cmpi ne, %1, %c0_i32_0 : i32
    scf.if %2 {
      %c0_101 = arith.constant 0 : index
      %c0_102 = arith.constant 0 : index
      %320 = vector.load %arg6[%c0_101, %c0_102] : memref<8x128xf32, #tpu.memory_space<vmem>>, vector<8x128xf32>
      %c0_103 = arith.constant 0 : index
      %c0_104 = arith.constant 0 : index
      %321 = vector.load %arg11[%c0_103, %c0_104] : memref<8x128xf32, #tpu.memory_space<vmem>>, vector<8x128xf32>
      tpu.vector_store %arg11[%c0_103, %c0_104], %320 {strides = array<i32>} : memref<8x128xf32, #tpu.memory_space<vmem>>, vector<8x128xf32>,
      %c0_105 = arith.constant 0 : index
      %c0_106 = arith.constant 0 : index
      %322 = vector.load %arg7[%c0_105, %c0_106] : memref<8x128xf32, #tpu.memory_space<vmem>>, vector<8x128xf32>
      %c0_107 = arith.constant 0 : index
      %c0_108 = arith.constant 0 : index
      %323 = vector.load %arg12[%c0_107, %c0_108] : memref<8x128xf32, #tpu.memory_space<vmem>>, vector<8x128xf32>
      tpu.vector_store %arg12[%c0_107, %c0_108], %322 {strides = array<i32>} : memref<8x128xf32, #tpu.memory_space<vmem>>, vector<8x128xf32>,
    } else {
    }
    %c0 = arith.constant 0 : index
    %c0_1 = arith.constant 0 : index
    %3 = vector.load %arg1[%c0, %c0_1] : memref<64x32xbf16, #tpu.memory_space<vmem>>, vector<64x32xbf16>
    %c0_2 = arith.constant 0 : index
    %c0_3 = arith.constant 0 : index
    %4 = vector.load %arg3[%c0_2, %c0_3] : memref<32x512xbf16, #tpu.memory_space<vmem>>, vector<32x512xbf16>
    %cst = arith.constant dense<0.000000e+00> : vector<64x512xf32>
    %5 = tpu.matmul %3, %4, %cst {dimension_numbers = #tpu.dot_dimension_numbers<[1], [0], [0], [1], [0, 0, 1, 1], [], []>} : vector<64x32xbf16>, vector<32x512xbf16>, vector<64x512xf32> -> vector<64x512xf32>
    %c0_4 = arith.constant 0 : index
    %c0_5 = arith.constant 0 : index
    %6 = vector.load %arg5[%c0_4, %c0_5] : memref<1x512xf32, #tpu.memory_space<vmem>>, vector<1x512xf32>
    %7 = vector.broadcast %6 : vector<1x512xf32> to vector<64x512xf32>
    %8 = arith.addf %5, %7 : vector<64x512xf32>
    %c0_6 = arith.constant 0 : index
    %c0_7 = arith.constant 0 : index
    %9 = vector.load %arg13[%c0_6, %c0_7] : memref<64x512xf32, #tpu.memory_space<vmem>>, vector<64x512xf32>
    tpu.vector_store %arg13[%c0_6, %c0_7], %8 {strides = array<i32>} : memref<64x512xf32, #tpu.memory_space<vmem>>, vector<64x512xf32>,
    %c0_8 = arith.constant 0 : index
    %c0_9 = arith.constant 0 : index
    %10 = vector.load %arg11[%c0_8, %c0_9] : memref<8x128xf32, #tpu.memory_space<vmem>>, vector<8x128xf32>
    %c0_10 = arith.constant 0 : index
    %c0_11 = arith.constant 0 : index
    %11 = vector.load %arg12[%c0_10, %c0_11] : memref<8x128xf32, #tpu.memory_space<vmem>>, vector<8x128xf32>
    %c0_i32_12 = arith.constant 0 : i32
    %c8_i32 = arith.constant 8 : i32
    %12 = arith.muli %c0_i32_12, %c8_i32 : i32
    %13 = tpu.assume_multiple %12, 8 : i32
    %14 = arith.index_cast %13 : i32 to index
    %c0_13 = arith.constant 0 : index
    %15 = vector.load %arg13[%14, %c0_13] : memref<64x512xf32, #tpu.memory_space<vmem>>, vector<8x512xf32>
    %16 = arith.truncf %10 : vector<8x128xf32> to vector<8x128xbf16>
    %c0_14 = arith.constant 0 : index
    %c0_15 = arith.constant 0 : index
    %17 = vector.load %arg4[%c0_14, %c0_15] : memref<128x512xbf16, #tpu.memory_space<vmem>>, vector<128x512xbf16>
    %cst_16 = arith.constant dense<0.000000e+00> : vector<8x512xf32>
    %18 = tpu.matmul %16, %17, %cst_16 {dimension_numbers = #tpu.dot_dimension_numbers<[1], [0], [0], [1], [0, 0, 1, 1], [], []>} : vector<8x128xbf16>, vector<128x512xbf16>, vector<8x512xf32> -> vector<8x512xf32>
    %19 = arith.addf %15, %18 : vector<8x512xf32>
    %20 = vector.extract_strided_slice %19 {offsets = [0, 0], sizes = [8, 128], strides = [1, 1]} : vector<8x512xf32> to vector<8x128xf32>
    %21 = arith.negf %20 : vector<8x128xf32>
    %22 = math.exp %21 : vector<8x128xf32>
    %cst_17 = arith.constant 1.000000e+00 : f32
    %23 = vector.broadcast %cst_17 : f32 to vector<8x128xf32>
    %24 = arith.addf %23, %22 : vector<8x128xf32>
    %25 = arith.divf %23, %24 : vector<8x128xf32>
    %26 = vector.extract_strided_slice %19 {offsets = [0, 128], sizes = [8, 128], strides = [1, 1]} : vector<8x512xf32> to vector<8x128xf32>
    %27 = arith.negf %26 : vector<8x128xf32>
    %28 = math.exp %27 : vector<8x128xf32>
    %cst_18 = arith.constant 1.000000e+00 : f32
    %29 = vector.broadcast %cst_18 : f32 to vector<8x128xf32>
    %30 = arith.addf %29, %28 : vector<8x128xf32>
    %31 = arith.divf %29, %30 : vector<8x128xf32>
    %32 = vector.extract_strided_slice %19 {offsets = [0, 256], sizes = [8, 128], strides = [1, 1]} : vector<8x512xf32> to vector<8x128xf32>
    %33 = math.tanh %32 : vector<8x128xf32>
    %34 = vector.extract_strided_slice %19 {offsets = [0, 384], sizes = [8, 128], strides = [1, 1]} : vector<8x512xf32> to vector<8x128xf32>
    %35 = arith.negf %34 : vector<8x128xf32>
    %36 = math.exp %35 : vector<8x128xf32>
    %cst_19 = arith.constant 1.000000e+00 : f32
    %37 = vector.broadcast %cst_19 : f32 to vector<8x128xf32>
    %38 = arith.addf %37, %36 : vector<8x128xf32>
    %39 = arith.divf %37, %38 : vector<8x128xf32>
    %40 = arith.mulf %31, %11 : vector<8x128xf32>
    %41 = arith.mulf %25, %33 : vector<8x128xf32>
    %42 = arith.addf %40, %41 : vector<8x128xf32>
    %43 = math.tanh %42 : vector<8x128xf32>
    %44 = arith.mulf %39, %43 : vector<8x128xf32>
    %45 = arith.index_cast %13 : i32 to index
    %c0_20 = arith.constant 0 : index
    %46 = vector.load %arg2[%45, %c0_20] : memref<64x128xf32, #tpu.memory_space<vmem>>, vector<8x128xf32>
    %47 = arith.mulf %44, %46 : vector<8x128xf32>
    %48 = arith.index_cast %13 : i32 to index
    %c0_21 = arith.constant 0 : index
    %49 = vector.load %arg8[%48, %c0_21] : memref<64x128xf32, #tpu.memory_space<vmem>>, vector<8x128xf32>
    tpu.vector_store %arg8[%48, %c0_21], %47 {strides = array<i32>} : memref<64x128xf32, #tpu.memory_space<vmem>>, vector<8x128xf32>,
    %c1_i32 = arith.constant 1 : i32
    %c8_i32_22 = arith.constant 8 : i32
    %50 = arith.muli %c1_i32, %c8_i32_22 : i32
    %51 = tpu.assume_multiple %50, 8 : i32
    %52 = arith.index_cast %51 : i32 to index
    %c0_23 = arith.constant 0 : index
    %53 = vector.load %arg13[%52, %c0_23] : memref<64x512xf32, #tpu.memory_space<vmem>>, vector<8x512xf32>
    %54 = arith.truncf %44 : vector<8x128xf32> to vector<8x128xbf16>
    %c0_24 = arith.constant 0 : index
    %c0_25 = arith.constant 0 : index
    %55 = vector.load %arg4[%c0_24, %c0_25] : memref<128x512xbf16, #tpu.memory_space<vmem>>, vector<128x512xbf16>
    %cst_26 = arith.constant dense<0.000000e+00> : vector<8x512xf32>
    %56 = tpu.matmul %54, %55, %cst_26 {dimension_numbers = #tpu.dot_dimension_numbers<[1], [0], [0], [1], [0, 0, 1, 1], [], []>} : vector<8x128xbf16>, vector<128x512xbf16>, vector<8x512xf32> -> vector<8x512xf32>
    %57 = arith.addf %53, %56 : vector<8x512xf32>
    %58 = vector.extract_strided_slice %57 {offsets = [0, 0], sizes = [8, 128], strides = [1, 1]} : vector<8x512xf32> to vector<8x128xf32>
    %59 = arith.negf %58 : vector<8x128xf32>
    %60 = math.exp %59 : vector<8x128xf32>
    %cst_27 = arith.constant 1.000000e+00 : f32
    %61 = vector.broadcast %cst_27 : f32 to vector<8x128xf32>
    %62 = arith.addf %61, %60 : vector<8x128xf32>
    %63 = arith.divf %61, %62 : vector<8x128xf32>
    %64 = vector.extract_strided_slice %57 {offsets = [0, 128], sizes = [8, 128], strides = [1, 1]} : vector<8x512xf32> to vector<8x128xf32>
    %65 = arith.negf %64 : vector<8x128xf32>
    %66 = math.exp %65 : vector<8x128xf32>
    %cst_28 = arith.constant 1.000000e+00 : f32
    %67 = vector.broadcast %cst_28 : f32 to vector<8x128xf32>
    %68 = arith.addf %67, %66 : vector<8x128xf32>
    %69 = arith.divf %67, %68 : vector<8x128xf32>
    %70 = vector.extract_strided_slice %57 {offsets = [0, 256], sizes = [8, 128], strides = [1, 1]} : vector<8x512xf32> to vector<8x128xf32>
    %71 = math.tanh %70 : vector<8x128xf32>
    %72 = vector.extract_strided_slice %57 {offsets = [0, 384], sizes = [8, 128], strides = [1, 1]} : vector<8x512xf32> to vector<8x128xf32>
    %73 = arith.negf %72 : vector<8x128xf32>
    %74 = math.exp %73 : vector<8x128xf32>
    %cst_29 = arith.constant 1.000000e+00 : f32
    %75 = vector.broadcast %cst_29 : f32 to vector<8x128xf32>
    %76 = arith.addf %75, %74 : vector<8x128xf32>
    %77 = arith.divf %75, %76 : vector<8x128xf32>
    %78 = arith.mulf %69, %42 : vector<8x128xf32>
    %79 = arith.mulf %63, %71 : vector<8x128xf32>
    %80 = arith.addf %78, %79 : vector<8x128xf32>
    %81 = math.tanh %80 : vector<8x128xf32>
    %82 = arith.mulf %77, %81 : vector<8x128xf32>
    %83 = arith.index_cast %51 : i32 to index
    %c0_30 = arith.constant 0 : index
    %84 = vector.load %arg2[%83, %c0_30] : memref<64x128xf32, #tpu.memory_space<vmem>>, vector<8x128xf32>
    %85 = arith.mulf %82, %84 : vector<8x128xf32>
    %86 = arith.index_cast %51 : i32 to index
    %c0_31 = arith.constant 0 : index
    %87 = vector.load %arg8[%86, %c0_31] : memref<64x128xf32, #tpu.memory_space<vmem>>, vector<8x128xf32>
    tpu.vector_store %arg8[%86, %c0_31], %85 {strides = array<i32>} : memref<64x128xf32, #tpu.memory_space<vmem>>, vector<8x128xf32>,
    %c2_i32 = arith.constant 2 : i32
    %c8_i32_32 = arith.constant 8 : i32
    %88 = arith.muli %c2_i32, %c8_i32_32 : i32
    %89 = tpu.assume_multiple %88, 8 : i32
    %90 = arith.index_cast %89 : i32 to index
    %c0_33 = arith.constant 0 : index
    %91 = vector.load %arg13[%90, %c0_33] : memref<64x512xf32, #tpu.memory_space<vmem>>, vector<8x512xf32>
    %92 = arith.truncf %82 : vector<8x128xf32> to vector<8x128xbf16>
    %c0_34 = arith.constant 0 : index
    %c0_35 = arith.constant 0 : index
    %93 = vector.load %arg4[%c0_34, %c0_35] : memref<128x512xbf16, #tpu.memory_space<vmem>>, vector<128x512xbf16>
    %cst_36 = arith.constant dense<0.000000e+00> : vector<8x512xf32>
    %94 = tpu.matmul %92, %93, %cst_36 {dimension_numbers = #tpu.dot_dimension_numbers<[1], [0], [0], [1], [0, 0, 1, 1], [], []>} : vector<8x128xbf16>, vector<128x512xbf16>, vector<8x512xf32> -> vector<8x512xf32>
    %95 = arith.addf %91, %94 : vector<8x512xf32>
    %96 = vector.extract_strided_slice %95 {offsets = [0, 0], sizes = [8, 128], strides = [1, 1]} : vector<8x512xf32> to vector<8x128xf32>
    %97 = arith.negf %96 : vector<8x128xf32>
    %98 = math.exp %97 : vector<8x128xf32>
    %cst_37 = arith.constant 1.000000e+00 : f32
    %99 = vector.broadcast %cst_37 : f32 to vector<8x128xf32>
    %100 = arith.addf %99, %98 : vector<8x128xf32>
    %101 = arith.divf %99, %100 : vector<8x128xf32>
    %102 = vector.extract_strided_slice %95 {offsets = [0, 128], sizes = [8, 128], strides = [1, 1]} : vector<8x512xf32> to vector<8x128xf32>
    %103 = arith.negf %102 : vector<8x128xf32>
    %104 = math.exp %103 : vector<8x128xf32>
    %cst_38 = arith.constant 1.000000e+00 : f32
    %105 = vector.broadcast %cst_38 : f32 to vector<8x128xf32>
    %106 = arith.addf %105, %104 : vector<8x128xf32>
    %107 = arith.divf %105, %106 : vector<8x128xf32>
    %108 = vector.extract_strided_slice %95 {offsets = [0, 256], sizes = [8, 128], strides = [1, 1]} : vector<8x512xf32> to vector<8x128xf32>
    %109 = math.tanh %108 : vector<8x128xf32>
    %110 = vector.extract_strided_slice %95 {offsets = [0, 384], sizes = [8, 128], strides = [1, 1]} : vector<8x512xf32> to vector<8x128xf32>
    %111 = arith.negf %110 : vector<8x128xf32>
    %112 = math.exp %111 : vector<8x128xf32>
    %cst_39 = arith.constant 1.000000e+00 : f32
    %113 = vector.broadcast %cst_39 : f32 to vector<8x128xf32>
    %114 = arith.addf %113, %112 : vector<8x128xf32>
    %115 = arith.divf %113, %114 : vector<8x128xf32>
    %116 = arith.mulf %107, %80 : vector<8x128xf32>
    %117 = arith.mulf %101, %109 : vector<8x128xf32>
    %118 = arith.addf %116, %117 : vector<8x128xf32>
    %119 = math.tanh %118 : vector<8x128xf32>
    %120 = arith.mulf %115, %119 : vector<8x128xf32>
    %121 = arith.index_cast %89 : i32 to index
    %c0_40 = arith.constant 0 : index
    %122 = vector.load %arg2[%121, %c0_40] : memref<64x128xf32, #tpu.memory_space<vmem>>, vector<8x128xf32>
    %123 = arith.mulf %120, %122 : vector<8x128xf32>
    %124 = arith.index_cast %89 : i32 to index
    %c0_41 = arith.constant 0 : index
    %125 = vector.load %arg8[%124, %c0_41] : memref<64x128xf32, #tpu.memory_space<vmem>>, vector<8x128xf32>
    tpu.vector_store %arg8[%124, %c0_41], %123 {strides = array<i32>} : memref<64x128xf32, #tpu.memory_space<vmem>>, vector<8x128xf32>,
    %c3_i32 = arith.constant 3 : i32
    %c8_i32_42 = arith.constant 8 : i32
    %126 = arith.muli %c3_i32, %c8_i32_42 : i32
    %127 = tpu.assume_multiple %126, 8 : i32
    %128 = arith.index_cast %127 : i32 to index
    %c0_43 = arith.constant 0 : index
    %129 = vector.load %arg13[%128, %c0_43] : memref<64x512xf32, #tpu.memory_space<vmem>>, vector<8x512xf32>
    %130 = arith.truncf %120 : vector<8x128xf32> to vector<8x128xbf16>
    %c0_44 = arith.constant 0 : index
    %c0_45 = arith.constant 0 : index
    %131 = vector.load %arg4[%c0_44, %c0_45] : memref<128x512xbf16, #tpu.memory_space<vmem>>, vector<128x512xbf16>
    %cst_46 = arith.constant dense<0.000000e+00> : vector<8x512xf32>
    %132 = tpu.matmul %130, %131, %cst_46 {dimension_numbers = #tpu.dot_dimension_numbers<[1], [0], [0], [1], [0, 0, 1, 1], [], []>} : vector<8x128xbf16>, vector<128x512xbf16>, vector<8x512xf32> -> vector<8x512xf32>
    %133 = arith.addf %129, %132 : vector<8x512xf32>
    %134 = vector.extract_strided_slice %133 {offsets = [0, 0], sizes = [8, 128], strides = [1, 1]} : vector<8x512xf32> to vector<8x128xf32>
    %135 = arith.negf %134 : vector<8x128xf32>
    %136 = math.exp %135 : vector<8x128xf32>
    %cst_47 = arith.constant 1.000000e+00 : f32
    %137 = vector.broadcast %cst_47 : f32 to vector<8x128xf32>
    %138 = arith.addf %137, %136 : vector<8x128xf32>
    %139 = arith.divf %137, %138 : vector<8x128xf32>
    %140 = vector.extract_strided_slice %133 {offsets = [0, 128], sizes = [8, 128], strides = [1, 1]} : vector<8x512xf32> to vector<8x128xf32>
    %141 = arith.negf %140 : vector<8x128xf32>
    %142 = math.exp %141 : vector<8x128xf32>
    %cst_48 = arith.constant 1.000000e+00 : f32
    %143 = vector.broadcast %cst_48 : f32 to vector<8x128xf32>
    %144 = arith.addf %143, %142 : vector<8x128xf32>
    %145 = arith.divf %143, %144 : vector<8x128xf32>
    %146 = vector.extract_strided_slice %133 {offsets = [0, 256], sizes = [8, 128], strides = [1, 1]} : vector<8x512xf32> to vector<8x128xf32>
    %147 = math.tanh %146 : vector<8x128xf32>
    %148 = vector.extract_strided_slice %133 {offsets = [0, 384], sizes = [8, 128], strides = [1, 1]} : vector<8x512xf32> to vector<8x128xf32>
    %149 = arith.negf %148 : vector<8x128xf32>
    %150 = math.exp %149 : vector<8x128xf32>
    %cst_49 = arith.constant 1.000000e+00 : f32
    %151 = vector.broadcast %cst_49 : f32 to vector<8x128xf32>
    %152 = arith.addf %151, %150 : vector<8x128xf32>
    %153 = arith.divf %151, %152 : vector<8x128xf32>
    %154 = arith.mulf %145, %118 : vector<8x128xf32>
    %155 = arith.mulf %139, %147 : vector<8x128xf32>
    %156 = arith.addf %154, %155 : vector<8x128xf32>
    %157 = math.tanh %156 : vector<8x128xf32>
    %158 = arith.mulf %153, %157 : vector<8x128xf32>
    %159 = arith.index_cast %127 : i32 to index
    %c0_50 = arith.constant 0 : index
    %160 = vector.load %arg2[%159, %c0_50] : memref<64x128xf32, #tpu.memory_space<vmem>>, vector<8x128xf32>
    %161 = arith.mulf %158, %160 : vector<8x128xf32>
    %162 = arith.index_cast %127 : i32 to index
    %c0_51 = arith.constant 0 : index
    %163 = vector.load %arg8[%162, %c0_51] : memref<64x128xf32, #tpu.memory_space<vmem>>, vector<8x128xf32>
    tpu.vector_store %arg8[%162, %c0_51], %161 {strides = array<i32>} : memref<64x128xf32, #tpu.memory_space<vmem>>, vector<8x128xf32>,
    %c4_i32 = arith.constant 4 : i32
    %c8_i32_52 = arith.constant 8 : i32
    %164 = arith.muli %c4_i32, %c8_i32_52 : i32
    %165 = tpu.assume_multiple %164, 8 : i32
    %166 = arith.index_cast %165 : i32 to index
    %c0_53 = arith.constant 0 : index
    %167 = vector.load %arg13[%166, %c0_53] : memref<64x512xf32, #tpu.memory_space<vmem>>, vector<8x512xf32>
    %168 = arith.truncf %158 : vector<8x128xf32> to vector<8x128xbf16>
    %c0_54 = arith.constant 0 : index
    %c0_55 = arith.constant 0 : index
    %169 = vector.load %arg4[%c0_54, %c0_55] : memref<128x512xbf16, #tpu.memory_space<vmem>>, vector<128x512xbf16>
    %cst_56 = arith.constant dense<0.000000e+00> : vector<8x512xf32>
    %170 = tpu.matmul %168, %169, %cst_56 {dimension_numbers = #tpu.dot_dimension_numbers<[1], [0], [0], [1], [0, 0, 1, 1], [], []>} : vector<8x128xbf16>, vector<128x512xbf16>, vector<8x512xf32> -> vector<8x512xf32>
    %171 = arith.addf %167, %170 : vector<8x512xf32>
    %172 = vector.extract_strided_slice %171 {offsets = [0, 0], sizes = [8, 128], strides = [1, 1]} : vector<8x512xf32> to vector<8x128xf32>
    %173 = arith.negf %172 : vector<8x128xf32>
    %174 = math.exp %173 : vector<8x128xf32>
    %cst_57 = arith.constant 1.000000e+00 : f32
    %175 = vector.broadcast %cst_57 : f32 to vector<8x128xf32>
    %176 = arith.addf %175, %174 : vector<8x128xf32>
    %177 = arith.divf %175, %176 : vector<8x128xf32>
    %178 = vector.extract_strided_slice %171 {offsets = [0, 128], sizes = [8, 128], strides = [1, 1]} : vector<8x512xf32> to vector<8x128xf32>
    %179 = arith.negf %178 : vector<8x128xf32>
    %180 = math.exp %179 : vector<8x128xf32>
    %cst_58 = arith.constant 1.000000e+00 : f32
    %181 = vector.broadcast %cst_58 : f32 to vector<8x128xf32>
    %182 = arith.addf %181, %180 : vector<8x128xf32>
    %183 = arith.divf %181, %182 : vector<8x128xf32>
    %184 = vector.extract_strided_slice %171 {offsets = [0, 256], sizes = [8, 128], strides = [1, 1]} : vector<8x512xf32> to vector<8x128xf32>
    %185 = math.tanh %184 : vector<8x128xf32>
    %186 = vector.extract_strided_slice %171 {offsets = [0, 384], sizes = [8, 128], strides = [1, 1]} : vector<8x512xf32> to vector<8x128xf32>
    %187 = arith.negf %186 : vector<8x128xf32>
    %188 = math.exp %187 : vector<8x128xf32>
    %cst_59 = arith.constant 1.000000e+00 : f32
    %189 = vector.broadcast %cst_59 : f32 to vector<8x128xf32>
    %190 = arith.addf %189, %188 : vector<8x128xf32>
    %191 = arith.divf %189, %190 : vector<8x128xf32>
    %192 = arith.mulf %183, %156 : vector<8x128xf32>
    %193 = arith.mulf %177, %185 : vector<8x128xf32>
    %194 = arith.addf %192, %193 : vector<8x128xf32>
    %195 = math.tanh %194 : vector<8x128xf32>
    %196 = arith.mulf %191, %195 : vector<8x128xf32>
    %197 = arith.index_cast %165 : i32 to index
    %c0_60 = arith.constant 0 : index
    %198 = vector.load %arg2[%197, %c0_60] : memref<64x128xf32, #tpu.memory_space<vmem>>, vector<8x128xf32>
    %199 = arith.mulf %196, %198 : vector<8x128xf32>
    %200 = arith.index_cast %165 : i32 to index
    %c0_61 = arith.constant 0 : index
    %201 = vector.load %arg8[%200, %c0_61] : memref<64x128xf32, #tpu.memory_space<vmem>>, vector<8x128xf32>
    tpu.vector_store %arg8[%200, %c0_61], %199 {strides = array<i32>} : memref<64x128xf32, #tpu.memory_space<vmem>>, vector<8x128xf32>,
    %c5_i32 = arith.constant 5 : i32
    %c8_i32_62 = arith.constant 8 : i32
    %202 = arith.muli %c5_i32, %c8_i32_62 : i32
    %203 = tpu.assume_multiple %202, 8 : i32
    %204 = arith.index_cast %203 : i32 to index
    %c0_63 = arith.constant 0 : index
    %205 = vector.load %arg13[%204, %c0_63] : memref<64x512xf32, #tpu.memory_space<vmem>>, vector<8x512xf32>
    %206 = arith.truncf %196 : vector<8x128xf32> to vector<8x128xbf16>
    %c0_64 = arith.constant 0 : index
    %c0_65 = arith.constant 0 : index
    %207 = vector.load %arg4[%c0_64, %c0_65] : memref<128x512xbf16, #tpu.memory_space<vmem>>, vector<128x512xbf16>
    %cst_66 = arith.constant dense<0.000000e+00> : vector<8x512xf32>
    %208 = tpu.matmul %206, %207, %cst_66 {dimension_numbers = #tpu.dot_dimension_numbers<[1], [0], [0], [1], [0, 0, 1, 1], [], []>} : vector<8x128xbf16>, vector<128x512xbf16>, vector<8x512xf32> -> vector<8x512xf32>
    %209 = arith.addf %205, %208 : vector<8x512xf32>
    %210 = vector.extract_strided_slice %209 {offsets = [0, 0], sizes = [8, 128], strides = [1, 1]} : vector<8x512xf32> to vector<8x128xf32>
    %211 = arith.negf %210 : vector<8x128xf32>
    %212 = math.exp %211 : vector<8x128xf32>
    %cst_67 = arith.constant 1.000000e+00 : f32
    %213 = vector.broadcast %cst_67 : f32 to vector<8x128xf32>
    %214 = arith.addf %213, %212 : vector<8x128xf32>
    %215 = arith.divf %213, %214 : vector<8x128xf32>
    %216 = vector.extract_strided_slice %209 {offsets = [0, 128], sizes = [8, 128], strides = [1, 1]} : vector<8x512xf32> to vector<8x128xf32>
    %217 = arith.negf %216 : vector<8x128xf32>
    %218 = math.exp %217 : vector<8x128xf32>
    %cst_68 = arith.constant 1.000000e+00 : f32
    %219 = vector.broadcast %cst_68 : f32 to vector<8x128xf32>
    %220 = arith.addf %219, %218 : vector<8x128xf32>
    %221 = arith.divf %219, %220 : vector<8x128xf32>
    %222 = vector.extract_strided_slice %209 {offsets = [0, 256], sizes = [8, 128], strides = [1, 1]} : vector<8x512xf32> to vector<8x128xf32>
    %223 = math.tanh %222 : vector<8x128xf32>
    %224 = vector.extract_strided_slice %209 {offsets = [0, 384], sizes = [8, 128], strides = [1, 1]} : vector<8x512xf32> to vector<8x128xf32>
    %225 = arith.negf %224 : vector<8x128xf32>
    %226 = math.exp %225 : vector<8x128xf32>
    %cst_69 = arith.constant 1.000000e+00 : f32
    %227 = vector.broadcast %cst_69 : f32 to vector<8x128xf32>
    %228 = arith.addf %227, %226 : vector<8x128xf32>
    %229 = arith.divf %227, %228 : vector<8x128xf32>
    %230 = arith.mulf %221, %194 : vector<8x128xf32>
    %231 = arith.mulf %215, %223 : vector<8x128xf32>
    %232 = arith.addf %230, %231 : vector<8x128xf32>
    %233 = math.tanh %232 : vector<8x128xf32>
    %234 = arith.mulf %229, %233 : vector<8x128xf32>
    %235 = arith.index_cast %203 : i32 to index
    %c0_70 = arith.constant 0 : index
    %236 = vector.load %arg2[%235, %c0_70] : memref<64x128xf32, #tpu.memory_space<vmem>>, vector<8x128xf32>
    %237 = arith.mulf %234, %236 : vector<8x128xf32>
    %238 = arith.index_cast %203 : i32 to index
    %c0_71 = arith.constant 0 : index
    %239 = vector.load %arg8[%238, %c0_71] : memref<64x128xf32, #tpu.memory_space<vmem>>, vector<8x128xf32>
    tpu.vector_store %arg8[%238, %c0_71], %237 {strides = array<i32>} : memref<64x128xf32, #tpu.memory_space<vmem>>, vector<8x128xf32>,
    %c6_i32 = arith.constant 6 : i32
    %c8_i32_72 = arith.constant 8 : i32
    %240 = arith.muli %c6_i32, %c8_i32_72 : i32
    %241 = tpu.assume_multiple %240, 8 : i32
    %242 = arith.index_cast %241 : i32 to index
    %c0_73 = arith.constant 0 : index
    %243 = vector.load %arg13[%242, %c0_73] : memref<64x512xf32, #tpu.memory_space<vmem>>, vector<8x512xf32>
    %244 = arith.truncf %234 : vector<8x128xf32> to vector<8x128xbf16>
    %c0_74 = arith.constant 0 : index
    %c0_75 = arith.constant 0 : index
    %245 = vector.load %arg4[%c0_74, %c0_75] : memref<128x512xbf16, #tpu.memory_space<vmem>>, vector<128x512xbf16>
    %cst_76 = arith.constant dense<0.000000e+00> : vector<8x512xf32>
    %246 = tpu.matmul %244, %245, %cst_76 {dimension_numbers = #tpu.dot_dimension_numbers<[1], [0], [0], [1], [0, 0, 1, 1], [], []>} : vector<8x128xbf16>, vector<128x512xbf16>, vector<8x512xf32> -> vector<8x512xf32>
    %247 = arith.addf %243, %246 : vector<8x512xf32>
    %248 = vector.extract_strided_slice %247 {offsets = [0, 0], sizes = [8, 128], strides = [1, 1]} : vector<8x512xf32> to vector<8x128xf32>
    %249 = arith.negf %248 : vector<8x128xf32>
    %250 = math.exp %249 : vector<8x128xf32>
    %cst_77 = arith.constant 1.000000e+00 : f32
    %251 = vector.broadcast %cst_77 : f32 to vector<8x128xf32>
    %252 = arith.addf %251, %250 : vector<8x128xf32>
    %253 = arith.divf %251, %252 : vector<8x128xf32>
    %254 = vector.extract_strided_slice %247 {offsets = [0, 128], sizes = [8, 128], strides = [1, 1]} : vector<8x512xf32> to vector<8x128xf32>
    %255 = arith.negf %254 : vector<8x128xf32>
    %256 = math.exp %255 : vector<8x128xf32>
    %cst_78 = arith.constant 1.000000e+00 : f32
    %257 = vector.broadcast %cst_78 : f32 to vector<8x128xf32>
    %258 = arith.addf %257, %256 : vector<8x128xf32>
    %259 = arith.divf %257, %258 : vector<8x128xf32>
    %260 = vector.extract_strided_slice %247 {offsets = [0, 256], sizes = [8, 128], strides = [1, 1]} : vector<8x512xf32> to vector<8x128xf32>
    %261 = math.tanh %260 : vector<8x128xf32>
    %262 = vector.extract_strided_slice %247 {offsets = [0, 384], sizes = [8, 128], strides = [1, 1]} : vector<8x512xf32> to vector<8x128xf32>
    %263 = arith.negf %262 : vector<8x128xf32>
    %264 = math.exp %263 : vector<8x128xf32>
    %cst_79 = arith.constant 1.000000e+00 : f32
    %265 = vector.broadcast %cst_79 : f32 to vector<8x128xf32>
    %266 = arith.addf %265, %264 : vector<8x128xf32>
    %267 = arith.divf %265, %266 : vector<8x128xf32>
    %268 = arith.mulf %259, %232 : vector<8x128xf32>
    %269 = arith.mulf %253, %261 : vector<8x128xf32>
    %270 = arith.addf %268, %269 : vector<8x128xf32>
    %271 = math.tanh %270 : vector<8x128xf32>
    %272 = arith.mulf %267, %271 : vector<8x128xf32>
    %273 = arith.index_cast %241 : i32 to index
    %c0_80 = arith.constant 0 : index
    %274 = vector.load %arg2[%273, %c0_80] : memref<64x128xf32, #tpu.memory_space<vmem>>, vector<8x128xf32>
    %275 = arith.mulf %272, %274 : vector<8x128xf32>
    %276 = arith.index_cast %241 : i32 to index
    %c0_81 = arith.constant 0 : index
    %277 = vector.load %arg8[%276, %c0_81] : memref<64x128xf32, #tpu.memory_space<vmem>>, vector<8x128xf32>
    tpu.vector_store %arg8[%276, %c0_81], %275 {strides = array<i32>} : memref<64x128xf32, #tpu.memory_space<vmem>>, vector<8x128xf32>,
    %c7_i32 = arith.constant 7 : i32
    %c8_i32_82 = arith.constant 8 : i32
    %278 = arith.muli %c7_i32, %c8_i32_82 : i32
    %279 = tpu.assume_multiple %278, 8 : i32
    %280 = arith.index_cast %279 : i32 to index
    %c0_83 = arith.constant 0 : index
    %281 = vector.load %arg13[%280, %c0_83] : memref<64x512xf32, #tpu.memory_space<vmem>>, vector<8x512xf32>
    %282 = arith.truncf %272 : vector<8x128xf32> to vector<8x128xbf16>
    %c0_84 = arith.constant 0 : index
    %c0_85 = arith.constant 0 : index
    %283 = vector.load %arg4[%c0_84, %c0_85] : memref<128x512xbf16, #tpu.memory_space<vmem>>, vector<128x512xbf16>
    %cst_86 = arith.constant dense<0.000000e+00> : vector<8x512xf32>
    %284 = tpu.matmul %282, %283, %cst_86 {dimension_numbers = #tpu.dot_dimension_numbers<[1], [0], [0], [1], [0, 0, 1, 1], [], []>} : vector<8x128xbf16>, vector<128x512xbf16>, vector<8x512xf32> -> vector<8x512xf32>
    %285 = arith.addf %281, %284 : vector<8x512xf32>
    %286 = vector.extract_strided_slice %285 {offsets = [0, 0], sizes = [8, 128], strides = [1, 1]} : vector<8x512xf32> to vector<8x128xf32>
    %287 = arith.negf %286 : vector<8x128xf32>
    %288 = math.exp %287 : vector<8x128xf32>
    %cst_87 = arith.constant 1.000000e+00 : f32
    %289 = vector.broadcast %cst_87 : f32 to vector<8x128xf32>
    %290 = arith.addf %289, %288 : vector<8x128xf32>
    %291 = arith.divf %289, %290 : vector<8x128xf32>
    %292 = vector.extract_strided_slice %285 {offsets = [0, 128], sizes = [8, 128], strides = [1, 1]} : vector<8x512xf32> to vector<8x128xf32>
    %293 = arith.negf %292 : vector<8x128xf32>
    %294 = math.exp %293 : vector<8x128xf32>
    %cst_88 = arith.constant 1.000000e+00 : f32
    %295 = vector.broadcast %cst_88 : f32 to vector<8x128xf32>
    %296 = arith.addf %295, %294 : vector<8x128xf32>
    %297 = arith.divf %295, %296 : vector<8x128xf32>
    %298 = vector.extract_strided_slice %285 {offsets = [0, 256], sizes = [8, 128], strides = [1, 1]} : vector<8x512xf32> to vector<8x128xf32>
    %299 = math.tanh %298 : vector<8x128xf32>
    %300 = vector.extract_strided_slice %285 {offsets = [0, 384], sizes = [8, 128], strides = [1, 1]} : vector<8x512xf32> to vector<8x128xf32>
    %301 = arith.negf %300 : vector<8x128xf32>
    %302 = math.exp %301 : vector<8x128xf32>
    %cst_89 = arith.constant 1.000000e+00 : f32
    %303 = vector.broadcast %cst_89 : f32 to vector<8x128xf32>
    %304 = arith.addf %303, %302 : vector<8x128xf32>
    %305 = arith.divf %303, %304 : vector<8x128xf32>
    %306 = arith.mulf %297, %270 : vector<8x128xf32>
    %307 = arith.mulf %291, %299 : vector<8x128xf32>
    %308 = arith.addf %306, %307 : vector<8x128xf32>
    %309 = math.tanh %308 : vector<8x128xf32>
    %310 = arith.mulf %305, %309 : vector<8x128xf32>
    %311 = arith.index_cast %279 : i32 to index
    %c0_90 = arith.constant 0 : index
    %312 = vector.load %arg2[%311, %c0_90] : memref<64x128xf32, #tpu.memory_space<vmem>>, vector<8x128xf32>
    %313 = arith.mulf %310, %312 : vector<8x128xf32>
    %314 = arith.index_cast %279 : i32 to index
    %c0_91 = arith.constant 0 : index
    %315 = vector.load %arg8[%314, %c0_91] : memref<64x128xf32, #tpu.memory_space<vmem>>, vector<8x128xf32>
    tpu.vector_store %arg8[%314, %c0_91], %313 {strides = array<i32>} : memref<64x128xf32, #tpu.memory_space<vmem>>, vector<8x128xf32>,
    %c8_i32_92 = arith.constant 8 : i32
    %c0_93 = arith.constant 0 : index
    %c0_94 = arith.constant 0 : index
    %316 = vector.load %arg11[%c0_93, %c0_94] : memref<8x128xf32, #tpu.memory_space<vmem>>, vector<8x128xf32>
    tpu.vector_store %arg11[%c0_93, %c0_94], %310 {strides = array<i32>} : memref<8x128xf32, #tpu.memory_space<vmem>>, vector<8x128xf32>,
    %c0_95 = arith.constant 0 : index
    %c0_96 = arith.constant 0 : index
    %317 = vector.load %arg12[%c0_95, %c0_96] : memref<8x128xf32, #tpu.memory_space<vmem>>, vector<8x128xf32>
    tpu.vector_store %arg12[%c0_95, %c0_96], %308 {strides = array<i32>} : memref<8x128xf32, #tpu.memory_space<vmem>>, vector<8x128xf32>,
    %c0_97 = arith.constant 0 : index
    %c0_98 = arith.constant 0 : index
    %318 = vector.load %arg9[%c0_97, %c0_98] : memref<8x128xf32, #tpu.memory_space<vmem>>, vector<8x128xf32>
    tpu.vector_store %arg9[%c0_97, %c0_98], %310 {strides = array<i32>} : memref<8x128xf32, #tpu.memory_space<vmem>>, vector<8x128xf32>,
    %c0_99 = arith.constant 0 : index
    %c0_100 = arith.constant 0 : index
    %319 = vector.load %arg10[%c0_99, %c0_100] : memref<8x128xf32, #tpu.memory_space<vmem>>, vector<8x128xf32>
    tpu.vector_store %arg10[%c0_99, %c0_100], %308 {strides = array<i32>} : memref<8x128xf32, #tpu.memory_space<vmem>>, vector<8x128xf32>,
    return
  }
  func.func @transform_0(%arg0: i32) -> (i32, i32) {
    %c0_i32 = arith.constant 0 : i32
    %c0_i32_0 = arith.constant 0 : i32
    return %arg0, %c0_i32 : i32, i32
  }
  func.func @transform_1(%arg0: i32) -> (i32, i32) {
    %c0_i32 = arith.constant 0 : i32
    %c0_i32_0 = arith.constant 0 : i32
    return %arg0, %c0_i32 : i32, i32
  }
  func.func @transform_2(%arg0: i32) -> (i32, i32) {
    %c0_i32 = arith.constant 0 : i32
    %c0_i32_0 = arith.constant 0 : i32
    %c0_i32_1 = arith.constant 0 : i32
    return %c0_i32, %c0_i32_0 : i32, i32
  }
  func.func @transform_3(%arg0: i32) -> (i32, i32) {
    %c0_i32 = arith.constant 0 : i32
    %c0_i32_0 = arith.constant 0 : i32
    %c0_i32_1 = arith.constant 0 : i32
    return %c0_i32, %c0_i32_0 : i32, i32
  }
  func.func @transform_4(%arg0: i32) -> (i32, i32) {
    %c0_i32 = arith.constant 0 : i32
    %c0_i32_0 = arith.constant 0 : i32
    %c0_i32_1 = arith.constant 0 : i32
    return %c0_i32, %c0_i32_0 : i32, i32
  }
  func.func @transform_5(%arg0: i32) -> (i32, i32) {
    %c0_i32 = arith.constant 0 : i32
    %c0_i32_0 = arith.constant 0 : i32
    %c0_i32_1 = arith.constant 0 : i32
    return %c0_i32, %c0_i32_0 : i32, i32
  }
  func.func @transform_6(%arg0: i32) -> (i32, i32) {
    %c0_i32 = arith.constant 0 : i32
    %c0_i32_0 = arith.constant 0 : i32
    %c0_i32_1 = arith.constant 0 : i32
    return %c0_i32, %c0_i32_0 : i32, i32
  }
  func.func @transform_7(%arg0: i32) -> (i32, i32) {
    %c0_i32 = arith.constant 0 : i32
    %c0_i32_0 = arith.constant 0 : i32
    return %arg0, %c0_i32 : i32, i32
  }
  func.func @transform_8(%arg0: i32) -> (i32, i32) {
    %c0_i32 = arith.constant 0 : i32
    %c0_i32_0 = arith.constant 0 : i32
    %c0_i32_1 = arith.constant 0 : i32
    return %c0_i32, %c0_i32_0 : i32, i32
  }
  func.func @transform_9(%arg0: i32) -> (i32, i32) {
    %c0_i32 = arith.constant 0 : i32
    %c0_i32_0 = arith.constant 0 : i32
    %c0_i32_1 = arith.constant 0 : i32
    return %c0_i32, %c0_i32_0 : i32, i32
  }
}

</mosaic_0001>

<llo_original>
// kernel: tpu_custom_call.1
$region0: #{tpu_custom_call.1}
  #allocation0 [shape = 'u32[]', space=smem, size = 0x4, offset = 0x4, fixed_abs, tag = 'smem constant byte address 0x4 - core index']
  #allocation1 [shape = 'u32[72,128]{1,0:T(1,128)}', space=vmem, size = 0x9000, scoped, tag = 'internal scratch']
  #allocation2 [shape = 'f32[8,128]{1,0:T(8,128)}', space=vmem, size = 0x1000, scoped, tag = 'scratch operand']
  #allocation3 [shape = 'f32[8,128]{1,0:T(8,128)}', space=vmem, size = 0x1000, scoped, tag = 'scratch operand']
  #allocation4 [shape = 'f32[64,512]{1,0:T(8,128)}', space=vmem, size = 0x20000, scoped, tag = 'scratch operand']
  %s0 = inlined_call_operand.vmem [shape: bf16[64,32], index: 0, kind: input, shape index: {}]
  %s1 = inlined_call_operand.hbm [shape: f32[64,128], index: 1, kind: input, shape index: {}]
  %s2 = inlined_call_operand.hbm [shape: bf16[32,512], index: 2, kind: input, shape index: {}]
  %s3 = inlined_call_operand.hbm [shape: bf16[128,512], index: 3, kind: input, shape index: {}]
  %s4 = inlined_call_operand.vmem [shape: f32[1,512], index: 4, kind: input, shape index: {}]
  %s5 = inlined_call_operand.vmem [shape: f32[8,128], index: 5, kind: input, shape index: {}]
  %s6 = inlined_call_operand.vmem [shape: f32[8,128], index: 6, kind: input, shape index: {}]
  %s7 = inlined_call_operand.hbm [shape: f32[64,128], index: 7, kind: output, shape index: {0}]
  %s8 = inlined_call_operand.hbm [shape: f32[8,128], index: 8, kind: output, shape index: {1}]
  %s9 = inlined_call_operand.hbm [shape: f32[8,128], index: 9, kind: output, shape index: {2}]
  %10 = xla_tuple %s7, %s8, %s9
  %s11 = sld [smem:[#allocation0]]
  $region70: #{tpu_custom_call.1} parent=0
    _
  %s13 = ssub.s32 1, %s11
  %s14 = scalar_select 0, %s13, %s11
  $region1: #{tpu_custom_call.1} parent=0
    #allocation5 [shape = 'u8[32768]{0}', space=vmem, size = 0x8000, scoped, tag = 'input window, operand 1, single buffered']
    #allocation6 [shape = 's32[1]{0}', space=sflag, size = 0x4, scoped, tag = 'scoped memory for tpu_custom_call.1']
    #allocation7 [shape = 's32[1]{0}', space=sflag, size = 0x4, scoped, tag = 'scoped memory for tpu_custom_call.1']
    #allocation8 [shape = 'u8[32768]{0}', space=vmem, size = 0x8000, scoped, tag = 'input window, operand 2, single buffered']
    #allocation9 [shape = 's32[1]{0}', space=sflag, size = 0x4, scoped, tag = 'scoped memory for tpu_custom_call.1']
    #allocation10 [shape = 'u8[131072]{0}', space=vmem, size = 0x20000, scoped, tag = 'input window, operand 3, single buffered']
    #allocation11 [shape = 'u8[32768]{0}', space=vmem, size = 0x8000, scoped, tag = 'output window, operand 0, single buffered']
    #allocation12 [shape = 'u8[4096]{0}', space=vmem, size = 0x1000, scoped, tag = 'output window, operand 1, single buffered']
    #allocation13 [shape = 's32[1]{0}', space=sflag, size = 0x4, scoped, tag = 'scoped memory for tpu_custom_call.1']
    #allocation14 [shape = 'u8[4096]{0}', space=vmem, size = 0x1000, scoped, tag = 'output window, operand 2, single buffered']
    %15 = vsyncpa [#allocation6], 0
    %16 = vsyncpa [#allocation9], 0
    %17 = vsyncpa [#allocation7], 0
    %18 = vsyncpa [#allocation13], 0
    // Predicated region
    $region2: #{tpu_custom_call.1} parent=1 // pred_check
      _
    $region3: #{tpu_custom_call.1} parent=1 // pred_check_branch
      %20 = sbr.rel (0) target = $region5
    $region4: #{tpu_custom_call.1} parent=1 // pred_region
      _
    $region5: #{tpu_custom_call.1} parent=1 // pred_fallthru
      _
    // Predicated region
    $region6: #{tpu_custom_call.1} parent=1 // pred_check
      _
    $region7: #{tpu_custom_call.1} parent=1 // pred_check_branch
      %22 = sbr.rel (0) target = $region9
    $region8: #{tpu_custom_call.1} parent=1 // pred_region
      %24 = vsyncadd [#allocation6], 0
      %s25 = sshll.u32 %s1, 4
      %s26 = int_to_ptr.hbm [resolvable:$true] %s25
      %s27 = sshll.u32 [#allocation5], 4
      %s28 = int_to_ptr.vmem [resolvable:$true] %s27
      %33 = dma.hbm_to_vmem [thread:$0]  %s26, 1024, %s28, [#allocation6], 128, 128, 8
    $region9: #{tpu_custom_call.1} parent=1 // pred_fallthru
      _
    // Predicated region
    $region10: #{tpu_custom_call.1} parent=1 // pred_check
      _
    $region11: #{tpu_custom_call.1} parent=1 // pred_check_branch
      %35 = sbr.rel (0) target = $region13
    $region12: #{tpu_custom_call.1} parent=1 // pred_region
      %37 = vsyncadd [#allocation9], 0
      %s38 = sshll.u32 %s2, 4
      %s39 = int_to_ptr.hbm [resolvable:$true] %s38
      %s40 = sshll.u32 [#allocation8], 4
      %s41 = int_to_ptr.vmem [resolvable:$true] %s40
      %46 = dma.hbm_to_vmem [thread:$0]  %s39, 1024, %s41, [#allocation9], 256, 256, 16
    $region13: #{tpu_custom_call.1} parent=1 // pred_fallthru
      _
    // Predicated region
    $region14: #{tpu_custom_call.1} parent=1 // pred_check
      _
    $region15: #{tpu_custom_call.1} parent=1 // pred_check_branch
      %48 = sbr.rel (0) target = $region17
    $region16: #{tpu_custom_call.1} parent=1 // pred_region
      %50 = vsyncadd [#allocation9], 0
      %s51 = sshll.u32 %s3, 4
      %s52 = int_to_ptr.hbm [resolvable:$true] %s51
      %s53 = sshll.u32 [#allocation10], 4
      %s54 = int_to_ptr.vmem [resolvable:$true] %s53
      %59 = dma.hbm_to_vmem [thread:$0]  %s52, 4096, %s54, [#allocation9], 256, 256, 16
    $region17: #{tpu_custom_call.1} parent=1 // pred_fallthru
      _
    // Predicated region
    $region18: #{tpu_custom_call.1} parent=1 // pred_check
      _
    $region19: #{tpu_custom_call.1} parent=1 // pred_check_branch
      %61 = sbr.rel (0) target = $region21
    $region20: #{tpu_custom_call.1} parent=1 // pred_region
      _
    $region21: #{tpu_custom_call.1} parent=1 // pred_fallthru
      _
    // Predicated region
    $region22: #{tpu_custom_call.1} parent=1 // pred_check
      _
    $region23: #{tpu_custom_call.1} parent=1 // pred_check_branch
      %63 = sbr.rel (0) target = $region25
    $region24: #{tpu_custom_call.1} parent=1 // pred_region
      _
    $region25: #{tpu_custom_call.1} parent=1 // pred_fallthru
      _
    // Predicated region
    $region26: #{tpu_custom_call.1} parent=1 // pred_check
      _
    $region27: #{tpu_custom_call.1} parent=1 // pred_check_branch
      %65 = sbr.rel (0) target = $region29
    $region28: #{tpu_custom_call.1} parent=1 // pred_region
      _
    $region29: #{tpu_custom_call.1} parent=1 // pred_fallthru
      _
    // Predicated region
    $region30: #{tpu_custom_call.1} parent=1 // pred_check
      _
    $region31: #{tpu_custom_call.1} parent=1 // pred_check_branch
      %67 = sbr.rel (0) target = $region33
    $region32: #{tpu_custom_call.1} parent=1 // pred_region
      %69 = dma.done [#allocation6], 1024
    $region33: #{tpu_custom_call.1} parent=1 // pred_fallthru
      _
    // Predicated region
    $region34: #{tpu_custom_call.1} parent=1 // pred_check
      _
    $region35: #{tpu_custom_call.1} parent=1 // pred_check_branch
      %71 = sbr.rel (0) target = $region37
    $region36: #{tpu_custom_call.1} parent=1 // pred_region
      %73 = dma.done [#allocation9], 1024
    $region37: #{tpu_custom_call.1} parent=1 // pred_fallthru
      _
    // Predicated region
    $region38: #{tpu_custom_call.1} parent=1 // pred_check
      _
    $region39: #{tpu_custom_call.1} parent=1 // pred_check_branch
      %75 = sbr.rel (0) target = $region41
    $region40: #{tpu_custom_call.1} parent=1 // pred_region
      %77 = dma.done [#allocation9], 4096
    $region41: #{tpu_custom_call.1} parent=1 // pred_fallthru
      _
    %p79 = scmp.eq.s32.totalorder 0, 0
    // Predicated region
    $region42: #{tpu_custom_call.1} parent=1 // pred_check
      %p80 = pneg %p79
    $region43: #{tpu_custom_call.1} parent=1 // pred_check_branch
      %82 = sbr.rel (%p80) target = $region45
    $region44: #{tpu_custom_call.1} parent=1 // pred_region
      %v83 = vld [vmem:[%s5] sm:$0xff]
      %84 = vst [vmem:[#allocation2] sm:$0xff] %v83
      %v85 = vld [vmem:[%s6] sm:$0xff]
      %86 = vst [vmem:[#allocation3] sm:$0xff] %v85
    $region45: #{tpu_custom_call.1} parent=1 // pred_fallthru
      _
    %v87 = vld [vmem:[%s0] sm:$0xf]
    %v88 = vld [vmem:[%s0 + $0x4] sm:$0xf]
    %v89 = vld [vmem:[%s0 + $0x8] sm:$0xf]
    %v90 = vld [vmem:[%s0 + $0xc] sm:$0xf]
    %v91 = vld [vmem:[%s0 + $0x10] sm:$0xf]
    %v92 = vld [vmem:[%s0 + $0x14] sm:$0xf]
    %v93 = vld [vmem:[%s0 + $0x18] sm:$0xf]
    %v94 = vld [vmem:[%s0 + $0x1c] sm:$0xf]
    %v95 = vld [vmem:[#allocation8] sm:$0xff]
    %v96 = vld [vmem:[#allocation8 + $0x8] sm:$0xff]
    %v97 = vld [vmem:[#allocation8 + $0x10] sm:$0xff]
    %v98 = vld [vmem:[#allocation8 + $0x18] sm:$0xff]
    %v99 = vld [vmem:[#allocation8 + $0x20] sm:$0xff]
    %v100 = vld [vmem:[#allocation8 + $0x28] sm:$0xff]
    %v101 = vld [vmem:[#allocation8 + $0x30] sm:$0xff]
    %v102 = vld [vmem:[#allocation8 + $0x38] sm:$0xff]
    %v103 = vld [vmem:[%s4] sm:$0xf]
    %v105 = vperm.slane %v103, 0
    %v106 = vperm.slane %v103, 1
    %v107 = vperm.slane %v103, 2
    %v108 = vperm.slane %v103, 3
    %v121 = vunpack.c.l.b16 %v87
    %v122 = vunpack.c.l.b16 %v88
    %v123 = vunpack.c.l.b16 %v89
    %v124 = vunpack.c.l.b16 %v90
    %v125 = vunpack.c.l.b16 %v91
    %v126 = vunpack.c.l.b16 %v92
    %v127 = vunpack.c.l.b16 %v93
    %v128 = vunpack.c.l.b16 %v94
    %v129 = vpack.c.b16 %v122, %v121
    %v130 = vpack.c.b16 %v124, %v123
    %v131 = vpack.c.b16 %v126, %v125
    %v132 = vpack.c.b16 %v128, %v127
    %v141 = vunpack.c.l.b16 %v95
    %v142 = vunpack.c.h.b16 %v95
    %v143 = vunpack.c.l.b16 %v96
    %v144 = vunpack.c.h.b16 %v96
    %v145 = vunpack.c.l.b16 %v97
    %v146 = vunpack.c.h.b16 %v97
    %v147 = vunpack.c.l.b16 %v98
    %v148 = vunpack.c.h.b16 %v98
    %v149 = vunpack.c.l.b16 %v99
    %v150 = vunpack.c.h.b16 %v99
    %v151 = vunpack.c.l.b16 %v100
    %v152 = vunpack.c.h.b16 %v100
    %v153 = vunpack.c.l.b16 %v101
    %v154 = vunpack.c.h.b16 %v101
    %v155 = vunpack.c.l.b16 %v102
    %v156 = vunpack.c.h.b16 %v102
    %v157 = vpack.c.b16 %v145, %v141
    %v158 = vpack.c.b16 %v146, %v142
    %v159 = vpack.c.b16 %v147, %v143
    %v160 = vpack.c.b16 %v148, %v144
    %v161 = vpack.c.b16 %v153, %v149
    %v162 = vpack.c.b16 %v154, %v150
    %v163 = vpack.c.b16 %v155, %v151
    %v164 = vpack.c.b16 %v156, %v152
    %vm173 = vcmask 261120
    %v175 = vsel %vm173, %v129, 0
    %v178 = vsel %vm173, %v130, 0
    %v181 = vsel %vm173, %v131, 0
    %v184 = vsel %vm173, %v132, 0
    %186 = vmatpush.bf16.msra.mxu0 0
    %187 = vmatpush.bf16.msra.mxu0 0
    %188 = vmatpush.bf16.msra.mxu0 0
    %189 = vmatpush.bf16.msra.mxu0 0
    %190 = vmatpush.bf16.msra.mxu0 0
    %191 = vmatpush.bf16.msra.mxu0 0
    %192 = vmatpush.bf16.msra.mxu0 %v161
    %193 = vmatpush.bf16.msra.mxu0 %v157
    %194 = vmatmul.bf16.gmra.mxu0 %v175
    %v195 = vpop.f32.mrf.mxu0
    %v196 = vadd.f32 %v105, %v195
    %v197 = vpop.f32.mrf.mxu0
    %v198 = vadd.f32 %v105, %v197
    %199 = vmatmul.bf16.gmra.mxu0 %v178
    %v200 = vpop.f32.mrf.mxu0
    %v201 = vadd.f32 %v105, %v200
    %v202 = vpop.f32.mrf.mxu0
    %v203 = vadd.f32 %v105, %v202
    %204 = vmatmul.bf16.gmra.mxu0 %v181
    %v205 = vpop.f32.mrf.mxu0
    %v206 = vadd.f32 %v105, %v205
    %v207 = vpop.f32.mrf.mxu0
    %v208 = vadd.f32 %v105, %v207
    %209 = vmatmul.bf16.gmra.mxu0 %v184
    %v210 = vpop.f32.mrf.mxu0
    %v211 = vadd.f32 %v105, %v210
    %v212 = vpop.f32.mrf.mxu0
    %v213 = vadd.f32 %v105, %v212
    %214 = vdwg.mxu0
    %215 = vmatpush.bf16.msra.mxu0 0
    %216 = vmatpush.bf16.msra.mxu0 0
    %217 = vmatpush.bf16.msra.mxu0 0
    %218 = vmatpush.bf16.msra.mxu0 0
    %219 = vmatpush.bf16.msra.mxu0 0
    %220 = vmatpush.bf16.msra.mxu0 0
    %221 = vmatpush.bf16.msra.mxu0 %v162
    %222 = vmatpush.bf16.msra.mxu0 %v158
    %223 = vmatmul.bf16.gmra.mxu0 %v175
    %v224 = vpop.f32.mrf.mxu0
    %v225 = vadd.f32 %v106, %v224
    %v226 = vpop.f32.mrf.mxu0
    %v227 = vadd.f32 %v106, %v226
    %228 = vmatmul.bf16.gmra.mxu0 %v178
    %v229 = vpop.f32.mrf.mxu0
    %v230 = vadd.f32 %v106, %v229
    %v231 = vpop.f32.mrf.mxu0
    %v232 = vadd.f32 %v106, %v231
    %233 = vmatmul.bf16.gmra.mxu0 %v181
    %v234 = vpop.f32.mrf.mxu0
    %v235 = vadd.f32 %v106, %v234
    %v236 = vpop.f32.mrf.mxu0
    %v237 = vadd.f32 %v106, %v236
    %238 = vmatmul.bf16.gmra.mxu0 %v184
    %v239 = vpop.f32.mrf.mxu0
    %v240 = vadd.f32 %v106, %v239
    %v241 = vpop.f32.mrf.mxu0
    %v242 = vadd.f32 %v106, %v241
    %243 = vdwg.mxu0
    %244 = vmatpush.bf16.msra.mxu0 0
    %245 = vmatpush.bf16.msra.mxu0 0
    %246 = vmatpush.bf16.msra.mxu0 0
    %247 = vmatpush.bf16.msra.mxu0 0
    %248 = vmatpush.bf16.msra.mxu0 0
    %249 = vmatpush.bf16.msra.mxu0 0
    %250 = vmatpush.bf16.msra.mxu0 %v163
    %251 = vmatpush.bf16.msra.mxu0 %v159
    %252 = vmatmul.bf16.gmra.mxu0 %v175
    %v253 = vpop.f32.mrf.mxu0
    %v254 = vadd.f32 %v107, %v253
    %v255 = vpop.f32.mrf.mxu0
    %v256 = vadd.f32 %v107, %v255
    %257 = vmatmul.bf16.gmra.mxu0 %v178
    %v258 = vpop.f32.mrf.mxu0
    %v259 = vadd.f32 %v107, %v258
    %v260 = vpop.f32.mrf.mxu0
    %v261 = vadd.f32 %v107, %v260
    %262 = vmatmul.bf16.gmra.mxu0 %v181
    %v263 = vpop.f32.mrf.mxu0
    %v264 = vadd.f32 %v107, %v263
    %v265 = vpop.f32.mrf.mxu0
    %v266 = vadd.f32 %v107, %v265
    %267 = vmatmul.bf16.gmra.mxu0 %v184
    %v268 = vpop.f32.mrf.mxu0
    %v269 = vadd.f32 %v107, %v268
    %v270 = vpop.f32.mrf.mxu0
    %v271 = vadd.f32 %v107, %v270
    %272 = vdwg.mxu0
    %273 = vmatpush.bf16.msra.mxu0 0
    %274 = vmatpush.bf16.msra.mxu0 0
    %275 = vmatpush.bf16.msra.mxu0 0
    %276 = vmatpush.bf16.msra.mxu0 0
    %277 = vmatpush.bf16.msra.mxu0 0
    %278 = vmatpush.bf16.msra.mxu0 0
    %279 = vmatpush.bf16.msra.mxu0 %v164
    %280 = vmatpush.bf16.msra.mxu0 %v160
    %281 = vmatmul.bf16.gmra.mxu0 %v175
    %v282 = vpop.f32.mrf.mxu0
    %v283 = vadd.f32 %v108, %v282
    %v284 = vpop.f32.mrf.mxu0
    %v285 = vadd.f32 %v108, %v284
    %286 = vmatmul.bf16.gmra.mxu0 %v178
    %v287 = vpop.f32.mrf.mxu0
    %v288 = vadd.f32 %v108, %v287
    %v289 = vpop.f32.mrf.mxu0
    %v290 = vadd.f32 %v108, %v289
    %291 = vmatmul.bf16.gmra.mxu0 %v181
    %v292 = vpop.f32.mrf.mxu0
    %v293 = vadd.f32 %v108, %v292
    %v294 = vpop.f32.mrf.mxu0
    %v295 = vadd.f32 %v108, %v294
    %296 = vmatmul.bf16.gmra.mxu0 %v184
    %v297 = vpop.f32.mrf.mxu0
    %v298 = vadd.f32 %v108, %v297
    %v299 = vpop.f32.mrf.mxu0
    %v300 = vadd.f32 %v108, %v299
    %301 = vdwg.mxu0
    %302 = vst [vmem:[#allocation4] sm:$0xff] %v196
    %303 = vst [vmem:[#allocation4 + $0x8] sm:$0xff] %v225
    %304 = vst [vmem:[#allocation4 + $0x10] sm:$0xff] %v254
    %305 = vst [vmem:[#allocation4 + $0x18] sm:$0xff] %v283
    %306 = vst [vmem:[#allocation4 + $0x20] sm:$0xff] %v198
    %307 = vst [vmem:[#allocation4 + $0x28] sm:$0xff] %v227
    %308 = vst [vmem:[#allocation4 + $0x30] sm:$0xff] %v256
    %309 = vst [vmem:[#allocation4 + $0x38] sm:$0xff] %v285
    %310 = vst [vmem:[#allocation4 + $0x40] sm:$0xff] %v201
    %311 = vst [vmem:[#allocation4 + $0x48] sm:$0xff] %v230
    %312 = vst [vmem:[#allocation4 + $0x50] sm:$0xff] %v259
    %313 = vst [vmem:[#allocation4 + $0x58] sm:$0xff] %v288
    %314 = vst [vmem:[#allocation4 + $0x60] sm:$0xff] %v203
    %315 = vst [vmem:[#allocation4 + $0x68] sm:$0xff] %v232
    %316 = vst [vmem:[#allocation4 + $0x70] sm:$0xff] %v261
    %317 = vst [vmem:[#allocation4 + $0x78] sm:$0xff] %v290
    %318 = vst [vmem:[#allocation4 + $0x80] sm:$0xff] %v206
    %319 = vst [vmem:[#allocation4 + $0x88] sm:$0xff] %v235
    %320 = vst [vmem:[#allocation4 + $0x90] sm:$0xff] %v264
    %321 = vst [vmem:[#allocation4 + $0x98] sm:$0xff] %v293
    %322 = vst [vmem:[#allocation4 + $0xa0] sm:$0xff] %v208
    %323 = vst [vmem:[#allocation4 + $0xa8] sm:$0xff] %v237
    %324 = vst [vmem:[#allocation4 + $0xb0] sm:$0xff] %v266
    %325 = vst [vmem:[#allocation4 + $0xb8] sm:$0xff] %v295
    %326 = vst [vmem:[#allocation4 + $0xc0] sm:$0xff] %v211
    %327 = vst [vmem:[#allocation4 + $0xc8] sm:$0xff] %v240
    %328 = vst [vmem:[#allocation4 + $0xd0] sm:$0xff] %v269
    %329 = vst [vmem:[#allocation4 + $0xd8] sm:$0xff] %v298
    %330 = vst [vmem:[#allocation4 + $0xe0] sm:$0xff] %v213
    %331 = vst [vmem:[#allocation4 + $0xe8] sm:$0xff] %v242
    %332 = vst [vmem:[#allocation4 + $0xf0] sm:$0xff] %v271
    %333 = vst [vmem:[#allocation4 + $0xf8] sm:$0xff] %v300
    %v334 = vld [vmem:[#allocation2] sm:$0xff]
    %v335 = vld [vmem:[#allocation3] sm:$0xff]
    %s336 = smul.u32 0, 4
    %s337 = smul.addr %s336, 8
    %s338 = scalar_lea.vmem [#allocation4], %s337
    %v339 = vld [vmem:[%s338] sm:$0xff]
    %v340 = vld [vmem:[%s338 + $0x8] sm:$0xff]
    %v341 = vld [vmem:[%s338 + $0x10] sm:$0xff]
    %v342 = vld [vmem:[%s338 + $0x18] sm:$0xff]
    %v343 = vpack.c.bf16 %v334, %v334
    %v344 = vld [vmem:[#allocation10] sm:$0xff]
    %v345 = vld [vmem:[#allocation10 + $0x8] sm:$0xff]
    %v346 = vld [vmem:[#allocation10 + $0x10] sm:$0xff]
    %v347 = vld [vmem:[#allocation10 + $0x18] sm:$0xff]
    %v348 = vld [vmem:[#allocation10 + $0x20] sm:$0xff]
    %v349 = vld [vmem:[#allocation10 + $0x28] sm:$0xff]
    %v350 = vld [vmem:[#allocation10 + $0x30] sm:$0xff]
    %v351 = vld [vmem:[#allocation10 + $0x38] sm:$0xff]
    %v352 = vld [vmem:[#allocation10 + $0x40] sm:$0xff]
    %v353 = vld [vmem:[#allocation10 + $0x48] sm:$0xff]
    %v354 = vld [vmem:[#allocation10 + $0x50] sm:$0xff]
    %v355 = vld [vmem:[#allocation10 + $0x58] sm:$0xff]
    %v356 = vld [vmem:[#allocation10 + $0x60] sm:$0xff]
    %v357 = vld [vmem:[#allocation10 + $0x68] sm:$0xff]
    %v358 = vld [vmem:[#allocation10 + $0x70] sm:$0xff]
    %v359 = vld [vmem:[#allocation10 + $0x78] sm:$0xff]
    %v360 = vld [vmem:[#allocation10 + $0x80] sm:$0xff]
    %v361 = vld [vmem:[#allocation10 + $0x88] sm:$0xff]
    %v362 = vld [vmem:[#allocation10 + $0x90] sm:$0xff]
    %v363 = vld [vmem:[#allocation10 + $0x98] sm:$0xff]
    %v364 = vld [vmem:[#allocation10 + $0xa0] sm:$0xff]
    %v365 = vld [vmem:[#allocation10 + $0xa8] sm:$0xff]
    %v366 = vld [vmem:[#allocation10 + $0xb0] sm:$0xff]
    %v367 = vld [vmem:[#allocation10 + $0xb8] sm:$0xff]
    %v368 = vld [vmem:[#allocation10 + $0xc0] sm:$0xff]
    %v369 = vld [vmem:[#allocation10 + $0xc8] sm:$0xff]
    %v370 = vld [vmem:[#allocation10 + $0xd0] sm:$0xff]
    %v371 = vld [vmem:[#allocation10 + $0xd8] sm:$0xff]
    %v372 = vld [vmem:[#allocation10 + $0xe0] sm:$0xff]
    %v373 = vld [vmem:[#allocation10 + $0xe8] sm:$0xff]
    %v374 = vld [vmem:[#allocation10 + $0xf0] sm:$0xff]
    %v375 = vld [vmem:[#allocation10 + $0xf8] sm:$0xff]
    %v408 = vunpack.c.l.b16 %v344
    %v409 = vunpack.c.h.b16 %v344
    %v410 = vunpack.c.l.b16 %v345
    %v411 = vunpack.c.h.b16 %v345
    %v412 = vunpack.c.l.b16 %v346
    %v413 = vunpack.c.h.b16 %v346
    %v414 = vunpack.c.l.b16 %v347
    %v415 = vunpack.c.h.b16 %v347
    %v416 = vunpack.c.l.b16 %v348
    %v417 = vunpack.c.h.b16 %v348
    %v418 = vunpack.c.l.b16 %v349
    %v419 = vunpack.c.h.b16 %v349
    %v420 = vunpack.c.l.b16 %v350
    %v421 = vunpack.c.h.b16 %v350
    %v422 = vunpack.c.l.b16 %v351
    %v423 = vunpack.c.h.b16 %v351
    %v424 = vunpack.c.l.b16 %v352
    %v425 = vunpack.c.h.b16 %v352
    %v426 = vunpack.c.l.b16 %v353
    %v427 = vunpack.c.h.b16 %v353
    %v428 = vunpack.c.l.b16 %v354
    %v429 = vunpack.c.h.b16 %v354
    %v430 = vunpack.c.l.b16 %v355
    %v431 = vunpack.c.h.b16 %v355
    %v432 = vunpack.c.l.b16 %v356
    %v433 = vunpack.c.h.b16 %v356
    %v434 = vunpack.c.l.b16 %v357
    %v435 = vunpack.c.h.b16 %v357
    %v436 = vunpack.c.l.b16 %v358
    %v437 = vunpack.c.h.b16 %v358
    %v438 = vunpack.c.l.b16 %v359
    %v439 = vunpack.c.h.b16 %v359
    %v440 = vunpack.c.l.b16 %v360
    %v441 = vunpack.c.h.b16 %v360
    %v442 = vunpack.c.l.b16 %v361
    %v443 = vunpack.c.h.b16 %v361
    %v444 = vunpack.c.l.b16 %v362
    %v445 = vunpack.c.h.b16 %v362
    %v446 = vunpack.c.l.b16 %v363
    %v447 = vunpack.c.h.b16 %v363
    %v448 = vunpack.c.l.b16 %v364
    %v449 = vunpack.c.h.b16 %v364
    %v450 = vunpack.c.l.b16 %v365
    %v451 = vunpack.c.h.b16 %v365
    %v452 = vunpack.c.l.b16 %v366
    %v453 = vunpack.c.h.b16 %v366
    %v454 = vunpack.c.l.b16 %v367
    %v455 = vunpack.c.h.b16 %v367
    %v456 = vunpack.c.l.b16 %v368
    %v457 = vunpack.c.h.b16 %v368
    %v458 = vunpack.c.l.b16 %v369
    %v459 = vunpack.c.h.b16 %v369
    %v460 = vunpack.c.l.b16 %v370
    %v461 = vunpack.c.h.b16 %v370
    %v462 = vunpack.c.l.b16 %v371
    %v463 = vunpack.c.h.b16 %v371
    %v464 = vunpack.c.l.b16 %v372
    %v465 = vunpack.c.h.b16 %v372
    %v466 = vunpack.c.l.b16 %v373
    %v467 = vunpack.c.h.b16 %v373
    %v468 = vunpack.c.l.b16 %v374
    %v469 = vunpack.c.h.b16 %v374
    %v470 = vunpack.c.l.b16 %v375
    %v471 = vunpack.c.h.b16 %v375
    %v472 = vpack.c.b16 %v412, %v408
    %v473 = vpack.c.b16 %v413, %v409
    %v474 = vpack.c.b16 %v414, %v410
    %v475 = vpack.c.b16 %v415, %v411
    %v476 = vpack.c.b16 %v420, %v416
    %v477 = vpack.c.b16 %v421, %v417
    %v478 = vpack.c.b16 %v422, %v418
    %v479 = vpack.c.b16 %v423, %v419
    %v480 = vpack.c.b16 %v428, %v424
    %v481 = vpack.c.b16 %v429, %v425
    %v482 = vpack.c.b16 %v430, %v426
    %v483 = vpack.c.b16 %v431, %v427
    %v484 = vpack.c.b16 %v436, %v432
    %v485 = vpack.c.b16 %v437, %v433
    %v486 = vpack.c.b16 %v438, %v434
    %v487 = vpack.c.b16 %v439, %v435
    %v488 = vpack.c.b16 %v444, %v440
    %v489 = vpack.c.b16 %v445, %v441
    %v490 = vpack.c.b16 %v446, %v442
    %v491 = vpack.c.b16 %v447, %v443
    %v492 = vpack.c.b16 %v452, %v448
    %v493 = vpack.c.b16 %v453, %v449
    %v494 = vpack.c.b16 %v454, %v450
    %v495 = vpack.c.b16 %v455, %v451
    %v496 = vpack.c.b16 %v460, %v456
    %v497 = vpack.c.b16 %v461, %v457
    %v498 = vpack.c.b16 %v462, %v458
    %v499 = vpack.c.b16 %v463, %v459
    %v500 = vpack.c.b16 %v468, %v464
    %v501 = vpack.c.b16 %v469, %v465
    %v502 = vpack.c.b16 %v470, %v466
    %v503 = vpack.c.b16 %v471, %v467
    %536 = vmatpush.bf16.msra.mxu0 %v500
    %537 = vmatpush.bf16.msra.mxu0 %v496
    %538 = vmatpush.bf16.msra.mxu0 %v492
    %539 = vmatpush.bf16.msra.mxu0 %v488
    %540 = vmatpush.bf16.msra.mxu0 %v484
    %541 = vmatpush.bf16.msra.mxu0 %v480
    %542 = vmatpush.bf16.msra.mxu0 %v476
    %543 = vmatpush.bf16.msra.mxu0 %v472
    %544 = vmatmul.bf16.gmra.mxu0 %v343
    %v545 = vpop.f32.mrf.mxu0
    %v546 = vadd.f32 0.0, %v545
    %v547 = vpop.f32.mrf.mxu0
    %548 = vdwg.mxu0
    %549 = vmatpush.bf16.msra.mxu0 %v501
    %550 = vmatpush.bf16.msra.mxu0 %v497
    %551 = vmatpush.bf16.msra.mxu0 %v493
    %552 = vmatpush.bf16.msra.mxu0 %v489
    %553 = vmatpush.bf16.msra.mxu0 %v485
    %554 = vmatpush.bf16.msra.mxu0 %v481
    %555 = vmatpush.bf16.msra.mxu0 %v477
    %556 = vmatpush.bf16.msra.mxu0 %v473
    %557 = vmatmul.bf16.gmra.mxu0 %v343
    %v558 = vpop.f32.mrf.mxu0
    %v559 = vadd.f32 0.0, %v558
    %v560 = vpop.f32.mrf.mxu0
    %561 = vdwg.mxu0
    %562 = vmatpush.bf16.msra.mxu0 %v502
    %563 = vmatpush.bf16.msra.mxu0 %v498
    %564 = vmatpush.bf16.msra.mxu0 %v494
    %565 = vmatpush.bf16.msra.mxu0 %v490
    %566 = vmatpush.bf16.msra.mxu0 %v486
    %567 = vmatpush.bf16.msra.mxu0 %v482
    %568 = vmatpush.bf16.msra.mxu0 %v478
    %569 = vmatpush.bf16.msra.mxu0 %v474
    %570 = vmatmul.bf16.gmra.mxu0 %v343
    %v571 = vpop.f32.mrf.mxu0
    %v572 = vadd.f32 0.0, %v571
    %v573 = vpop.f32.mrf.mxu0
    %574 = vdwg.mxu0
    %575 = vmatpush.bf16.msra.mxu0 %v503
    %576 = vmatpush.bf16.msra.mxu0 %v499
    %577 = vmatpush.bf16.msra.mxu0 %v495
    %578 = vmatpush.bf16.msra.mxu0 %v491
    %579 = vmatpush.bf16.msra.mxu0 %v487
    %580 = vmatpush.bf16.msra.mxu0 %v483
    %581 = vmatpush.bf16.msra.mxu0 %v479
    %582 = vmatpush.bf16.msra.mxu0 %v475
    %583 = vmatmul.bf16.gmra.mxu0 %v343
    %v584 = vpop.f32.mrf.mxu0
    %v585 = vadd.f32 0.0, %v584
    %v586 = vpop.f32.mrf.mxu0
    %587 = vdwg.mxu0
    %v588 = vadd.f32 %v339, %v546
    %v589 = vadd.f32 %v340, %v559
    %v590 = vadd.f32 %v341, %v572
    %v591 = vadd.f32 %v342, %v585
    %v592 = vxor.u32 %v588, 2147483648
    %v593 = vmul.f32 %v592, 1.442695
    %v594 = vpow.pop %v593
    %v595 = vadd.f32 %v594, 1.0
    %v596 = vrcp.pop %v595
    %v597 = vmul.f32 %v595, %v596
    %v598 = vsub.f32 1.0, %v597
    %v599 = vmul.f32 %v596, %v598
    %v600 = vadd.f32 %v596, %v599
    %vm601 = vweird.f32 %v595
    %vm602 = vweird.f32 %v596
    %vm603 = vmor %vm601, %vm602
    %v604 = vsel %vm603, %v596, %v600
    %v605 = vand.u32 2147483647, %v595
    %vm606 = vcmp.eq.f32.partialorder %v605, 8.507059e+37
    %v607 = vand.u32 %v595, 2147483648
    %v608 = vor.u32 1.1754944e-38, %v607
    %v609 = vsel %vm606, %v608, %v604
    %v610 = vmul.f32 1.0, %v609
    %v611 = vxor.u32 %v589, 2147483648
    %v612 = vmul.f32 %v611, 1.442695
    %v613 = vpow.pop %v612
    %v614 = vadd.f32 %v613, 1.0
    %v615 = vrcp.pop %v614
    %v616 = vmul.f32 %v614, %v615
    %v617 = vsub.f32 1.0, %v616
    %v618 = vmul.f32 %v615, %v617
    %v619 = vadd.f32 %v615, %v618
    %vm620 = vweird.f32 %v614
    %vm621 = vweird.f32 %v615
    %vm622 = vmor %vm620, %vm621
    %v623 = vsel %vm622, %v615, %v619
    %v624 = vand.u32 2147483647, %v614
    %vm625 = vcmp.eq.f32.partialorder %v624, 8.507059e+37
    %v626 = vand.u32 %v614, 2147483648
    %v627 = vor.u32 1.1754944e-38, %v626
    %v628 = vsel %vm625, %v627, %v623
    %v629 = vmul.f32 1.0, %v628
    %v630 = vtanh.pop %v590
    %v631 = vxor.u32 %v591, 2147483648
    %v632 = vmul.f32 %v631, 1.442695
    %v633 = vpow.pop %v632
    %v634 = vadd.f32 %v633, 1.0
    %v635 = vrcp.pop %v634
    %v636 = vmul.f32 %v634, %v635
    %v637 = vsub.f32 1.0, %v636
    %v638 = vmul.f32 %v635, %v637
    %v639 = vadd.f32 %v635, %v638
    %vm640 = vweird.f32 %v634
    %vm641 = vweird.f32 %v635
    %vm642 = vmor %vm640, %vm641
    %v643 = vsel %vm642, %v635, %v639
    %v644 = vand.u32 2147483647, %v634
    %vm645 = vcmp.eq.f32.partialorder %v644, 8.507059e+37
    %v646 = vand.u32 %v634, 2147483648
    %v647 = vor.u32 1.1754944e-38, %v646
    %v648 = vsel %vm645, %v647, %v643
    %v649 = vmul.f32 1.0, %v648
    %v650 = vmul.f32 %v629, %v335
    %v651 = vmul.f32 %v610, %v630
    %v652 = vadd.f32 %v650, %v651
    %v653 = vtanh.pop %v652
    %v654 = vmul.f32 %v649, %v653
    %v655 = vld [vmem:[#allocation5] sm:$0xff]
    %v656 = vmul.f32 %v654, %v655
    %657 = vst [vmem:[#allocation11] sm:$0xff] %v656
    %s658 = smul.u32 1, 4
    %s659 = smul.addr %s658, 8
    %s660 = scalar_lea.vmem [#allocation4], %s659
    %v661 = vld [vmem:[%s660] sm:$0xff]
    %v662 = vld [vmem:[%s660 + $0x8] sm:$0xff]
    %v663 = vld [vmem:[%s660 + $0x10] sm:$0xff]
    %v664 = vld [vmem:[%s660 + $0x18] sm:$0xff]
    %v665 = vpack.c.bf16 %v654, %v654
    %v666 = vld [vmem:[#allocation10] sm:$0xff]
    %v667 = vld [vmem:[#allocation10 + $0x8] sm:$0xff]
    %v668 = vld [vmem:[#allocation10 + $0x10] sm:$0xff]
    %v669 = vld [vmem:[#allocation10 + $0x18] sm:$0xff]
    %v670 = vld [vmem:[#allocation10 + $0x20] sm:$0xff]
    %v671 = vld [vmem:[#allocation10 + $0x28] sm:$0xff]
    %v672 = vld [vmem:[#allocation10 + $0x30] sm:$0xff]
    %v673 = vld [vmem:[#allocation10 + $0x38] sm:$0xff]
    %v674 = vld [vmem:[#allocation10 + $0x40] sm:$0xff]
    %v675 = vld [vmem:[#allocation10 + $0x48] sm:$0xff]
    %v676 = vld [vmem:[#allocation10 + $0x50] sm:$0xff]
    %v677 = vld [vmem:[#allocation10 + $0x58] sm:$0xff]
    %v678 = vld [vmem:[#allocation10 + $0x60] sm:$0xff]
    %v679 = vld [vmem:[#allocation10 + $0x68] sm:$0xff]
    %v680 = vld [vmem:[#allocation10 + $0x70] sm:$0xff]
    %v681 = vld [vmem:[#allocation10 + $0x78] sm:$0xff]
    %v682 = vld [vmem:[#allocation10 + $0x80] sm:$0xff]
    %v683 = vld [vmem:[#allocation10 + $0x88] sm:$0xff]
    %v684 = vld [vmem:[#allocation10 + $0x90] sm:$0xff]
    %v685 = vld [vmem:[#allocation10 + $0x98] sm:$0xff]
    %v686 = vld [vmem:[#allocation10 + $0xa0] sm:$0xff]
    %v687 = vld [vmem:[#allocation10 + $0xa8] sm:$0xff]
    %v688 = vld [vmem:[#allocation10 + $0xb0] sm:$0xff]
    %v689 = vld [vmem:[#allocation10 + $0xb8] sm:$0xff]
    %v690 = vld [vmem:[#allocation10 + $0xc0] sm:$0xff]
    %v691 = vld [vmem:[#allocation10 + $0xc8] sm:$0xff]
    %v692 = vld [vmem:[#allocation10 + $0xd0] sm:$0xff]
    %v693 = vld [vmem:[#allocation10 + $0xd8] sm:$0xff]
    %v694 = vld [vmem:[#allocation10 + $0xe0] sm:$0xff]
    %v695 = vld [vmem:[#allocation10 + $0xe8] sm:$0xff]
    %v696 = vld [vmem:[#allocation10 + $0xf0] sm:$0xff]
    %v697 = vld [vmem:[#allocation10 + $0xf8] sm:$0xff]
    %v730 = vunpack.c.l.b16 %v666
    %v731 = vunpack.c.h.b16 %v666
    %v732 = vunpack.c.l.b16 %v667
    %v733 = vunpack.c.h.b16 %v667
    %v734 = vunpack.c.l.b16 %v668
    %v735 = vunpack.c.h.b16 %v668
    %v736 = vunpack.c.l.b16 %v669
    %v737 = vunpack.c.h.b16 %v669
    %v738 = vunpack.c.l.b16 %v670
    %v739 = vunpack.c.h.b16 %v670
    %v740 = vunpack.c.l.b16 %v671
    %v741 = vunpack.c.h.b16 %v671
    %v742 = vunpack.c.l.b16 %v672
    %v743 = vunpack.c.h.b16 %v672
    %v744 = vunpack.c.l.b16 %v673
    %v745 = vunpack.c.h.b16 %v673
    %v746 = vunpack.c.l.b16 %v674
    %v747 = vunpack.c.h.b16 %v674
    %v748 = vunpack.c.l.b16 %v675
    %v749 = vunpack.c.h.b16 %v675
    %v750 = vunpack.c.l.b16 %v676
    %v751 = vunpack.c.h.b16 %v676
    %v752 = vunpack.c.l.b16 %v677
    %v753 = vunpack.c.h.b16 %v677
    %v754 = vunpack.c.l.b16 %v678
    %v755 = vunpack.c.h.b16 %v678
    %v756 = vunpack.c.l.b16 %v679
    %v757 = vunpack.c.h.b16 %v679
    %v758 = vunpack.c.l.b16 %v680
    %v759 = vunpack.c.h.b16 %v680
    %v760 = vunpack.c.l.b16 %v681
    %v761 = vunpack.c.h.b16 %v681
    %v762 = vunpack.c.l.b16 %v682
    %v763 = vunpack.c.h.b16 %v682
    %v764 = vunpack.c.l.b16 %v683
    %v765 = vunpack.c.h.b16 %v683
    %v766 = vunpack.c.l.b16 %v684
    %v767 = vunpack.c.h.b16 %v684
    %v768 = vunpack.c.l.b16 %v685
    %v769 = vunpack.c.h.b16 %v685
    %v770 = vunpack.c.l.b16 %v686
    %v771 = vunpack.c.h.b16 %v686
    %v772 = vunpack.c.l.b16 %v687
    %v773 = vunpack.c.h.b16 %v687
    %v774 = vunpack.c.l.b16 %v688
    %v775 = vunpack.c.h.b16 %v688
    %v776 = vunpack.c.l.b16 %v689
    %v777 = vunpack.c.h.b16 %v689
    %v778 = vunpack.c.l.b16 %v690
    %v779 = vunpack.c.h.b16 %v690
    %v780 = vunpack.c.l.b16 %v691
    %v781 = vunpack.c.h.b16 %v691
    %v782 = vunpack.c.l.b16 %v692
    %v783 = vunpack.c.h.b16 %v692
    %v784 = vunpack.c.l.b16 %v693
    %v785 = vunpack.c.h.b16 %v693
    %v786 = vunpack.c.l.b16 %v694
    %v787 = vunpack.c.h.b16 %v694
    %v788 = vunpack.c.l.b16 %v695
    %v789 = vunpack.c.h.b16 %v695
    %v790 = vunpack.c.l.b16 %v696
    %v791 = vunpack.c.h.b16 %v696
    %v792 = vunpack.c.l.b16 %v697
    %v793 = vunpack.c.h.b16 %v697
    %v794 = vpack.c.b16 %v734, %v730
    %v795 = vpack.c.b16 %v735, %v731
    %v796 = vpack.c.b16 %v736, %v732
    %v797 = vpack.c.b16 %v737, %v733
    %v798 = vpack.c.b16 %v742, %v738
    %v799 = vpack.c.b16 %v743, %v739
    %v800 = vpack.c.b16 %v744, %v740
    %v801 = vpack.c.b16 %v745, %v741
    %v802 = vpack.c.b16 %v750, %v746
    %v803 = vpack.c.b16 %v751, %v747
    %v804 = vpack.c.b16 %v752, %v748
    %v805 = vpack.c.b16 %v753, %v749
    %v806 = vpack.c.b16 %v758, %v754
    %v807 = vpack.c.b16 %v759, %v755
    %v808 = vpack.c.b16 %v760, %v756
    %v809 = vpack.c.b16 %v761, %v757
    %v810 = vpack.c.b16 %v766, %v762
    %v811 = vpack.c.b16 %v767, %v763
    %v812 = vpack.c.b16 %v768, %v764
    %v813 = vpack.c.b16 %v769, %v765
    %v814 = vpack.c.b16 %v774, %v770
    %v815 = vpack.c.b16 %v775, %v771
    %v816 = vpack.c.b16 %v776, %v772
    %v817 = vpack.c.b16 %v777, %v773
    %v818 = vpack.c.b16 %v782, %v778
    %v819 = vpack.c.b16 %v783, %v779
    %v820 = vpack.c.b16 %v784, %v780
    %v821 = vpack.c.b16 %v785, %v781
    %v822 = vpack.c.b16 %v790, %v786
    %v823 = vpack.c.b16 %v791, %v787
    %v824 = vpack.c.b16 %v792, %v788
    %v825 = vpack.c.b16 %v793, %v789
    %858 = vmatpush.bf16.msra.mxu0 %v822
    %859 = vmatpush.bf16.msra.mxu0 %v818
    %860 = vmatpush.bf16.msra.mxu0 %v814
    %861 = vmatpush.bf16.msra.mxu0 %v810
    %862 = vmatpush.bf16.msra.mxu0 %v806
    %863 = vmatpush.bf16.msra.mxu0 %v802
    %864 = vmatpush.bf16.msra.mxu0 %v798
    %865 = vmatpush.bf16.msra.mxu0 %v794
    %866 = vmatmul.bf16.gmra.mxu0 %v665
    %v867 = vpop.f32.mrf.mxu0
    %v868 = vadd.f32 0.0, %v867
    %v869 = vpop.f32.mrf.mxu0
    %870 = vdwg.mxu0
    %871 = vmatpush.bf16.msra.mxu0 %v823
    %872 = vmatpush.bf16.msra.mxu0 %v819
    %873 = vmatpush.bf16.msra.mxu0 %v815
    %874 = vmatpush.bf16.msra.mxu0 %v811
    %875 = vmatpush.bf16.msra.mxu0 %v807
    %876 = vmatpush.bf16.msra.mxu0 %v803
    %877 = vmatpush.bf16.msra.mxu0 %v799
    %878 = vmatpush.bf16.msra.mxu0 %v795
    %879 = vmatmul.bf16.gmra.mxu0 %v665
    %v880 = vpop.f32.mrf.mxu0
    %v881 = vadd.f32 0.0, %v880
    %v882 = vpop.f32.mrf.mxu0
    %883 = vdwg.mxu0
    %884 = vmatpush.bf16.msra.mxu0 %v824
    %885 = vmatpush.bf16.msra.mxu0 %v820
    %886 = vmatpush.bf16.msra.mxu0 %v816
    %887 = vmatpush.bf16.msra.mxu0 %v812
    %888 = vmatpush.bf16.msra.mxu0 %v808
    %889 = vmatpush.bf16.msra.mxu0 %v804
    %890 = vmatpush.bf16.msra.mxu0 %v800
    %891 = vmatpush.bf16.msra.mxu0 %v796
    %892 = vmatmul.bf16.gmra.mxu0 %v665
    %v893 = vpop.f32.mrf.mxu0
    %v894 = vadd.f32 0.0, %v893
    %v895 = vpop.f32.mrf.mxu0
    %896 = vdwg.mxu0
    %897 = vmatpush.bf16.msra.mxu0 %v825
    %898 = vmatpush.bf16.msra.mxu0 %v821
    %899 = vmatpush.bf16.msra.mxu0 %v817
    %900 = vmatpush.bf16.msra.mxu0 %v813
    %901 = vmatpush.bf16.msra.mxu0 %v809
    %902 = vmatpush.bf16.msra.mxu0 %v805
    %903 = vmatpush.bf16.msra.mxu0 %v801
    %904 = vmatpush.bf16.msra.mxu0 %v797
    %905 = vmatmul.bf16.gmra.mxu0 %v665
    %v906 = vpop.f32.mrf.mxu0
    %v907 = vadd.f32 0.0, %v906
    %v908 = vpop.f32.mrf.mxu0
    %909 = vdwg.mxu0
    %v910 = vadd.f32 %v661, %v868
    %v911 = vadd.f32 %v662, %v881
    %v912 = vadd.f32 %v663, %v894
    %v913 = vadd.f32 %v664, %v907
    %v914 = vxor.u32 %v910, 2147483648
    %v915 = vmul.f32 %v914, 1.442695
    %v916 = vpow.pop %v915
    %v917 = vadd.f32 %v916, 1.0
    %v918 = vrcp.pop %v917
    %v919 = vmul.f32 %v917, %v918
    %v920 = vsub.f32 1.0, %v919
    %v921 = vmul.f32 %v918, %v920
    %v922 = vadd.f32 %v918, %v921
    %vm923 = vweird.f32 %v917
    %vm924 = vweird.f32 %v918
    %vm925 = vmor %vm923, %vm924
    %v926 = vsel %vm925, %v918, %v922
    %v927 = vand.u32 2147483647, %v917
    %vm928 = vcmp.eq.f32.partialorder %v927, 8.507059e+37
    %v929 = vand.u32 %v917, 2147483648
    %v930 = vor.u32 1.1754944e-38, %v929
    %v931 = vsel %vm928, %v930, %v926
    %v932 = vmul.f32 1.0, %v931
    %v933 = vxor.u32 %v911, 2147483648
    %v934 = vmul.f32 %v933, 1.442695
    %v935 = vpow.pop %v934
    %v936 = vadd.f32 %v935, 1.0
    %v937 = vrcp.pop %v936
    %v938 = vmul.f32 %v936, %v937
    %v939 = vsub.f32 1.0, %v938
    %v940 = vmul.f32 %v937, %v939
    %v941 = vadd.f32 %v937, %v940
    %vm942 = vweird.f32 %v936
    %vm943 = vweird.f32 %v937
    %vm944 = vmor %vm942, %vm943
    %v945 = vsel %vm944, %v937, %v941
    %v946 = vand.u32 2147483647, %v936
    %vm947 = vcmp.eq.f32.partialorder %v946, 8.507059e+37
    %v948 = vand.u32 %v936, 2147483648
    %v949 = vor.u32 1.1754944e-38, %v948
    %v950 = vsel %vm947, %v949, %v945
    %v951 = vmul.f32 1.0, %v950
    %v952 = vtanh.pop %v912
    %v953 = vxor.u32 %v913, 2147483648
    %v954 = vmul.f32 %v953, 1.442695
    %v955 = vpow.pop %v954
    %v956 = vadd.f32 %v955, 1.0
    %v957 = vrcp.pop %v956
    %v958 = vmul.f32 %v956, %v957
    %v959 = vsub.f32 1.0, %v958
    %v960 = vmul.f32 %v957, %v959
    %v961 = vadd.f32 %v957, %v960
    %vm962 = vweird.f32 %v956
    %vm963 = vweird.f32 %v957
    %vm964 = vmor %vm962, %vm963
    %v965 = vsel %vm964, %v957, %v961
    %v966 = vand.u32 2147483647, %v956
    %vm967 = vcmp.eq.f32.partialorder %v966, 8.507059e+37
    %v968 = vand.u32 %v956, 2147483648
    %v969 = vor.u32 1.1754944e-38, %v968
    %v970 = vsel %vm967, %v969, %v965
    %v971 = vmul.f32 1.0, %v970
    %v972 = vmul.f32 %v951, %v652
    %v973 = vmul.f32 %v932, %v952
    %v974 = vadd.f32 %v972, %v973
    %v975 = vtanh.pop %v974
    %v976 = vmul.f32 %v971, %v975
    %s977 = scalar_lea.vmem [#allocation5], 8
    %v978 = vld [vmem:[%s977] sm:$0xff]
    %v979 = vmul.f32 %v976, %v978
    %s980 = scalar_lea.vmem [#allocation11], 8
    %981 = vst [vmem:[%s980] sm:$0xff] %v979
    %s982 = smul.u32 2, 4
    %s983 = smul.addr %s982, 8
    %s984 = scalar_lea.vmem [#allocation4], %s983
    %v985 = vld [vmem:[%s984] sm:$0xff]
    %v986 = vld [vmem:[%s984 + $0x8] sm:$0xff]
    %v987 = vld [vmem:[%s984 + $0x10] sm:$0xff]
    %v988 = vld [vmem:[%s984 + $0x18] sm:$0xff]
    %v989 = vpack.c.bf16 %v976, %v976
    %v990 = vld [vmem:[#allocation10] sm:$0xff]
    %v991 = vld [vmem:[#allocation10 + $0x8] sm:$0xff]
    %v992 = vld [vmem:[#allocation10 + $0x10] sm:$0xff]
    %v993 = vld [vmem:[#allocation10 + $0x18] sm:$0xff]
    %v994 = vld [vmem:[#allocation10 + $0x20] sm:$0xff]
    %v995 = vld [vmem:[#allocation10 + $0x28] sm:$0xff]
    %v996 = vld [vmem:[#allocation10 + $0x30] sm:$0xff]
    %v997 = vld [vmem:[#allocation10 + $0x38] sm:$0xff]
    %v998 = vld [vmem:[#allocation10 + $0x40] sm:$0xff]
    %v999 = vld [vmem:[#allocation10 + $0x48] sm:$0xff]
    %v1000 = vld [vmem:[#allocation10 + $0x50] sm:$0xff]
    %v1001 = vld [vmem:[#allocation10 + $0x58] sm:$0xff]
    %v1002 = vld [vmem:[#allocation10 + $0x60] sm:$0xff]
    %v1003 = vld [vmem:[#allocation10 + $0x68] sm:$0xff]
    %v1004 = vld [vmem:[#allocation10 + $0x70] sm:$0xff]
    %v1005 = vld [vmem:[#allocation10 + $0x78] sm:$0xff]
    %v1006 = vld [vmem:[#allocation10 + $0x80] sm:$0xff]
    %v1007 = vld [vmem:[#allocation10 + $0x88] sm:$0xff]
    %v1008 = vld [vmem:[#allocation10 + $0x90] sm:$0xff]
    %v1009 = vld [vmem:[#allocation10 + $0x98] sm:$0xff]
    %v1010 = vld [vmem:[#allocation10 + $0xa0] sm:$0xff]
    %v1011 = vld [vmem:[#allocation10 + $0xa8] sm:$0xff]
    %v1012 = vld [vmem:[#allocation10 + $0xb0] sm:$0xff]
    %v1013 = vld [vmem:[#allocation10 + $0xb8] sm:$0xff]
    %v1014 = vld [vmem:[#allocation10 + $0xc0] sm:$0xff]
    %v1015 = vld [vmem:[#allocation10 + $0xc8] sm:$0xff]
    %v1016 = vld [vmem:[#allocation10 + $0xd0] sm:$0xff]
    %v1017 = vld [vmem:[#allocation10 + $0xd8] sm:$0xff]
    %v1018 = vld [vmem:[#allocation10 + $0xe0] sm:$0xff]
    %v1019 = vld [vmem:[#allocation10 + $0xe8] sm:$0xff]
    %v1020 = vld [vmem:[#allocation10 + $0xf0] sm:$0xff]
    %v1021 = vld [vmem:[#allocation10 + $0xf8] sm:$0xff]
    %v1054 = vunpack.c.l.b16 %v990
    %v1055 = vunpack.c.h.b16 %v990
    %v1056 = vunpack.c.l.b16 %v991
    %v1057 = vunpack.c.h.b16 %v991
    %v1058 = vunpack.c.l.b16 %v992
    %v1059 = vunpack.c.h.b16 %v992
    %v1060 = vunpack.c.l.b16 %v993
    %v1061 = vunpack.c.h.b16 %v993
    %v1062 = vunpack.c.l.b16 %v994
    %v1063 = vunpack.c.h.b16 %v994
    %v1064 = vunpack.c.l.b16 %v995
    %v1065 = vunpack.c.h.b16 %v995
    %v1066 = vunpack.c.l.b16 %v996
    %v1067 = vunpack.c.h.b16 %v996
    %v1068 = vunpack.c.l.b16 %v997
    %v1069 = vunpack.c.h.b16 %v997
    %v1070 = vunpack.c.l.b16 %v998
    %v1071 = vunpack.c.h.b16 %v998
    %v1072 = vunpack.c.l.b16 %v999
    %v1073 = vunpack.c.h.b16 %v999
    %v1074 = vunpack.c.l.b16 %v1000
    %v1075 = vunpack.c.h.b16 %v1000
    %v1076 = vunpack.c.l.b16 %v1001
    %v1077 = vunpack.c.h.b16 %v1001
    %v1078 = vunpack.c.l.b16 %v1002
    %v1079 = vunpack.c.h.b16 %v1002
    %v1080 = vunpack.c.l.b16 %v1003
    %v1081 = vunpack.c.h.b16 %v1003
    %v1082 = vunpack.c.l.b16 %v1004
    %v1083 = vunpack.c.h.b16 %v1004
    %v1084 = vunpack.c.l.b16 %v1005
    %v1085 = vunpack.c.h.b16 %v1005
    %v1086 = vunpack.c.l.b16 %v1006
    %v1087 = vunpack.c.h.b16 %v1006
    %v1088 = vunpack.c.l.b16 %v1007
    %v1089 = vunpack.c.h.b16 %v1007
    %v1090 = vunpack.c.l.b16 %v1008
    %v1091 = vunpack.c.h.b16 %v1008
    %v1092 = vunpack.c.l.b16 %v1009
    %v1093 = vunpack.c.h.b16 %v1009
    %v1094 = vunpack.c.l.b16 %v1010
    %v1095 = vunpack.c.h.b16 %v1010
    %v1096 = vunpack.c.l.b16 %v1011
    %v1097 = vunpack.c.h.b16 %v1011
    %v1098 = vunpack.c.l.b16 %v1012
    %v1099 = vunpack.c.h.b16 %v1012
    %v1100 = vunpack.c.l.b16 %v1013
    %v1101 = vunpack.c.h.b16 %v1013
    %v1102 = vunpack.c.l.b16 %v1014
    %v1103 = vunpack.c.h.b16 %v1014
    %v1104 = vunpack.c.l.b16 %v1015
    %v1105 = vunpack.c.h.b16 %v1015
    %v1106 = vunpack.c.l.b16 %v1016
    %v1107 = vunpack.c.h.b16 %v1016
    %v1108 = vunpack.c.l.b16 %v1017
    %v1109 = vunpack.c.h.b16 %v1017
    %v1110 = vunpack.c.l.b16 %v1018
    %v1111 = vunpack.c.h.b16 %v1018
    %v1112 = vunpack.c.l.b16 %v1019
    %v1113 = vunpack.c.h.b16 %v1019
    %v1114 = vunpack.c.l.b16 %v1020
    %v1115 = vunpack.c.h.b16 %v1020
    %v1116 = vunpack.c.l.b16 %v1021
    %v1117 = vunpack.c.h.b16 %v1021
    %v1118 = vpack.c.b16 %v1058, %v1054
    %v1119 = vpack.c.b16 %v1059, %v1055
    %v1120 = vpack.c.b16 %v1060, %v1056
    %v1121 = vpack.c.b16 %v1061, %v1057
    %v1122 = vpack.c.b16 %v1066, %v1062
    %v1123 = vpack.c.b16 %v1067, %v1063
    %v1124 = vpack.c.b16 %v1068, %v1064
    %v1125 = vpack.c.b16 %v1069, %v1065
    %v1126 = vpack.c.b16 %v1074, %v1070
    %v1127 = vpack.c.b16 %v1075, %v1071
    %v1128 = vpack.c.b16 %v1076, %v1072
    %v1129 = vpack.c.b16 %v1077, %v1073
    %v1130 = vpack.c.b16 %v1082, %v1078
    %v1131 = vpack.c.b16 %v1083, %v1079
    %v1132 = vpack.c.b16 %v1084, %v1080
    %v1133 = vpack.c.b16 %v1085, %v1081
    %v1134 = vpack.c.b16 %v1090, %v1086
    %v1135 = vpack.c.b16 %v1091, %v1087
    %v1136 = vpack.c.b16 %v1092, %v1088
    %v1137 = vpack.c.b16 %v1093, %v1089
    %v1138 = vpack.c.b16 %v1098, %v1094
    %v1139 = vpack.c.b16 %v1099, %v1095
    %v1140 = vpack.c.b16 %v1100, %v1096
    %v1141 = vpack.c.b16 %v1101, %v1097
    %v1142 = vpack.c.b16 %v1106, %v1102
    %v1143 = vpack.c.b16 %v1107, %v1103
    %v1144 = vpack.c.b16 %v1108, %v1104
    %v1145 = vpack.c.b16 %v1109, %v1105
    %v1146 = vpack.c.b16 %v1114, %v1110
    %v1147 = vpack.c.b16 %v1115, %v1111
    %v1148 = vpack.c.b16 %v1116, %v1112
    %v1149 = vpack.c.b16 %v1117, %v1113
    %1182 = vmatpush.bf16.msra.mxu0 %v1146
    %1183 = vmatpush.bf16.msra.mxu0 %v1142
    %1184 = vmatpush.bf16.msra.mxu0 %v1138
    %1185 = vmatpush.bf16.msra.mxu0 %v1134
    %1186 = vmatpush.bf16.msra.mxu0 %v1130
    %1187 = vmatpush.bf16.msra.mxu0 %v1126
    %1188 = vmatpush.bf16.msra.mxu0 %v1122
    %1189 = vmatpush.bf16.msra.mxu0 %v1118
    %1190 = vmatmul.bf16.gmra.mxu0 %v989
    %v1191 = vpop.f32.mrf.mxu0
    %v1192 = vadd.f32 0.0, %v1191
    %v1193 = vpop.f32.mrf.mxu0
    %1194 = vdwg.mxu0
    %1195 = vmatpush.bf16.msra.mxu0 %v1147
    %1196 = vmatpush.bf16.msra.mxu0 %v1143
    %1197 = vmatpush.bf16.msra.mxu0 %v1139
    %1198 = vmatpush.bf16.msra.mxu0 %v1135
    %1199 = vmatpush.bf16.msra.mxu0 %v1131
    %1200 = vmatpush.bf16.msra.mxu0 %v1127
    %1201 = vmatpush.bf16.msra.mxu0 %v1123
    %1202 = vmatpush.bf16.msra.mxu0 %v1119
    %1203 = vmatmul.bf16.gmra.mxu0 %v989
    %v1204 = vpop.f32.mrf.mxu0
    %v1205 = vadd.f32 0.0, %v1204
    %v1206 = vpop.f32.mrf.mxu0
    %1207 = vdwg.mxu0
    %1208 = vmatpush.bf16.msra.mxu0 %v1148
    %1209 = vmatpush.bf16.msra.mxu0 %v1144
    %1210 = vmatpush.bf16.msra.mxu0 %v1140
    %1211 = vmatpush.bf16.msra.mxu0 %v1136
    %1212 = vmatpush.bf16.msra.mxu0 %v1132
    %1213 = vmatpush.bf16.msra.mxu0 %v1128
    %1214 = vmatpush.bf16.msra.mxu0 %v1124
    %1215 = vmatpush.bf16.msra.mxu0 %v1120
    %1216 = vmatmul.bf16.gmra.mxu0 %v989
    %v1217 = vpop.f32.mrf.mxu0
    %v1218 = vadd.f32 0.0, %v1217
    %v1219 = vpop.f32.mrf.mxu0
    %1220 = vdwg.mxu0
    %1221 = vmatpush.bf16.msra.mxu0 %v1149
    %1222 = vmatpush.bf16.msra.mxu0 %v1145
    %1223 = vmatpush.bf16.msra.mxu0 %v1141
    %1224 = vmatpush.bf16.msra.mxu0 %v1137
    %1225 = vmatpush.bf16.msra.mxu0 %v1133
    %1226 = vmatpush.bf16.msra.mxu0 %v1129
    %1227 = vmatpush.bf16.msra.mxu0 %v1125
    %1228 = vmatpush.bf16.msra.mxu0 %v1121
    %1229 = vmatmul.bf16.gmra.mxu0 %v989
    %v1230 = vpop.f32.mrf.mxu0
    %v1231 = vadd.f32 0.0, %v1230
    %v1232 = vpop.f32.mrf.mxu0
    %1233 = vdwg.mxu0
    %v1234 = vadd.f32 %v985, %v1192
    %v1235 = vadd.f32 %v986, %v1205
    %v1236 = vadd.f32 %v987, %v1218
    %v1237 = vadd.f32 %v988, %v1231
    %v1238 = vxor.u32 %v1234, 2147483648
    %v1239 = vmul.f32 %v1238, 1.442695
    %v1240 = vpow.pop %v1239
    %v1241 = vadd.f32 %v1240, 1.0
    %v1242 = vrcp.pop %v1241
    %v1243 = vmul.f32 %v1241, %v1242
    %v1244 = vsub.f32 1.0, %v1243
    %v1245 = vmul.f32 %v1242, %v1244
    %v1246 = vadd.f32 %v1242, %v1245
    %vm1247 = vweird.f32 %v1241
    %vm1248 = vweird.f32 %v1242
    %vm1249 = vmor %vm1247, %vm1248
    %v1250 = vsel %vm1249, %v1242, %v1246
    %v1251 = vand.u32 2147483647, %v1241
    %vm1252 = vcmp.eq.f32.partialorder %v1251, 8.507059e+37
    %v1253 = vand.u32 %v1241, 2147483648
    %v1254 = vor.u32 1.1754944e-38, %v1253
    %v1255 = vsel %vm1252, %v1254, %v1250
    %v1256 = vmul.f32 1.0, %v1255
    %v1257 = vxor.u32 %v1235, 2147483648
    %v1258 = vmul.f32 %v1257, 1.442695
    %v1259 = vpow.pop %v1258
    %v1260 = vadd.f32 %v1259, 1.0
    %v1261 = vrcp.pop %v1260
    %v1262 = vmul.f32 %v1260, %v1261
    %v1263 = vsub.f32 1.0, %v1262
    %v1264 = vmul.f32 %v1261, %v1263
    %v1265 = vadd.f32 %v1261, %v1264
    %vm1266 = vweird.f32 %v1260
    %vm1267 = vweird.f32 %v1261
    %vm1268 = vmor %vm1266, %vm1267
    %v1269 = vsel %vm1268, %v1261, %v1265
    %v1270 = vand.u32 2147483647, %v1260
    %vm1271 = vcmp.eq.f32.partialorder %v1270, 8.507059e+37
    %v1272 = vand.u32 %v1260, 2147483648
    %v1273 = vor.u32 1.1754944e-38, %v1272
    %v1274 = vsel %vm1271, %v1273, %v1269
    %v1275 = vmul.f32 1.0, %v1274
    %v1276 = vtanh.pop %v1236
    %v1277 = vxor.u32 %v1237, 2147483648
    %v1278 = vmul.f32 %v1277, 1.442695
    %v1279 = vpow.pop %v1278
    %v1280 = vadd.f32 %v1279, 1.0
    %v1281 = vrcp.pop %v1280
    %v1282 = vmul.f32 %v1280, %v1281
    %v1283 = vsub.f32 1.0, %v1282
    %v1284 = vmul.f32 %v1281, %v1283
    %v1285 = vadd.f32 %v1281, %v1284
    %vm1286 = vweird.f32 %v1280
    %vm1287 = vweird.f32 %v1281
    %vm1288 = vmor %vm1286, %vm1287
    %v1289 = vsel %vm1288, %v1281, %v1285
    %v1290 = vand.u32 2147483647, %v1280
    %vm1291 = vcmp.eq.f32.partialorder %v1290, 8.507059e+37
    %v1292 = vand.u32 %v1280, 2147483648
    %v1293 = vor.u32 1.1754944e-38, %v1292
    %v1294 = vsel %vm1291, %v1293, %v1289
    %v1295 = vmul.f32 1.0, %v1294
    %v1296 = vmul.f32 %v1275, %v974
    %v1297 = vmul.f32 %v1256, %v1276
    %v1298 = vadd.f32 %v1296, %v1297
    %v1299 = vtanh.pop %v1298
    %v1300 = vmul.f32 %v1295, %v1299
    %s1301 = scalar_lea.vmem [#allocation5], 16
    %v1302 = vld [vmem:[%s1301] sm:$0xff]
    %v1303 = vmul.f32 %v1300, %v1302
    %s1304 = scalar_lea.vmem [#allocation11], 16
    %1305 = vst [vmem:[%s1304] sm:$0xff] %v1303
    %s1306 = smul.u32 3, 4
    %s1307 = smul.addr %s1306, 8
    %s1308 = scalar_lea.vmem [#allocation4], %s1307
    %v1309 = vld [vmem:[%s1308] sm:$0xff]
    %v1310 = vld [vmem:[%s1308 + $0x8] sm:$0xff]
    %v1311 = vld [vmem:[%s1308 + $0x10] sm:$0xff]
    %v1312 = vld [vmem:[%s1308 + $0x18] sm:$0xff]
    %v1313 = vpack.c.bf16 %v1300, %v1300
    %v1314 = vld [vmem:[#allocation10] sm:$0xff]
    %v1315 = vld [vmem:[#allocation10 + $0x8] sm:$0xff]
    %v1316 = vld [vmem:[#allocation10 + $0x10] sm:$0xff]
    %v1317 = vld [vmem:[#allocation10 + $0x18] sm:$0xff]
    %v1318 = vld [vmem:[#allocation10 + $0x20] sm:$0xff]
    %v1319 = vld [vmem:[#allocation10 + $0x28] sm:$0xff]
    %v1320 = vld [vmem:[#allocation10 + $0x30] sm:$0xff]
    %v1321 = vld [vmem:[#allocation10 + $0x38] sm:$0xff]
    %v1322 = vld [vmem:[#allocation10 + $0x40] sm:$0xff]
    %v1323 = vld [vmem:[#allocation10 + $0x48] sm:$0xff]
    %v1324 = vld [vmem:[#allocation10 + $0x50] sm:$0xff]
    %v1325 = vld [vmem:[#allocation10 + $0x58] sm:$0xff]
    %v1326 = vld [vmem:[#allocation10 + $0x60] sm:$0xff]
    %v1327 = vld [vmem:[#allocation10 + $0x68] sm:$0xff]
    %v1328 = vld [vmem:[#allocation10 + $0x70] sm:$0xff]
    %v1329 = vld [vmem:[#allocation10 + $0x78] sm:$0xff]
    %v1330 = vld [vmem:[#allocation10 + $0x80] sm:$0xff]
    %v1331 = vld [vmem:[#allocation10 + $0x88] sm:$0xff]
    %v1332 = vld [vmem:[#allocation10 + $0x90] sm:$0xff]
    %v1333 = vld [vmem:[#allocation10 + $0x98] sm:$0xff]
    %v1334 = vld [vmem:[#allocation10 + $0xa0] sm:$0xff]
    %v1335 = vld [vmem:[#allocation10 + $0xa8] sm:$0xff]
    %v1336 = vld [vmem:[#allocation10 + $0xb0] sm:$0xff]
    %v1337 = vld [vmem:[#allocation10 + $0xb8] sm:$0xff]
    %v1338 = vld [vmem:[#allocation10 + $0xc0] sm:$0xff]
    %v1339 = vld [vmem:[#allocation10 + $0xc8] sm:$0xff]
    %v1340 = vld [vmem:[#allocation10 + $0xd0] sm:$0xff]
    %v1341 = vld [vmem:[#allocation10 + $0xd8] sm:$0xff]
    %v1342 = vld [vmem:[#allocation10 + $0xe0] sm:$0xff]
    %v1343 = vld [vmem:[#allocation10 + $0xe8] sm:$0xff]
    %v1344 = vld [vmem:[#allocation10 + $0xf0] sm:$0xff]
    %v1345 = vld [vmem:[#allocation10 + $0xf8] sm:$0xff]
    %v1378 = vunpack.c.l.b16 %v1314
    %v1379 = vunpack.c.h.b16 %v1314
    %v1380 = vunpack.c.l.b16 %v1315
    %v1381 = vunpack.c.h.b16 %v1315
    %v1382 = vunpack.c.l.b16 %v1316
    %v1383 = vunpack.c.h.b16 %v1316
    %v1384 = vunpack.c.l.b16 %v1317
    %v1385 = vunpack.c.h.b16 %v1317
    %v1386 = vunpack.c.l.b16 %v1318
    %v1387 = vunpack.c.h.b16 %v1318
    %v1388 = vunpack.c.l.b16 %v1319
    %v1389 = vunpack.c.h.b16 %v1319
    %v1390 = vunpack.c.l.b16 %v1320
    %v1391 = vunpack.c.h.b16 %v1320
    %v1392 = vunpack.c.l.b16 %v1321
    %v1393 = vunpack.c.h.b16 %v1321
    %v1394 = vunpack.c.l.b16 %v1322
    %v1395 = vunpack.c.h.b16 %v1322
    %v1396 = vunpack.c.l.b16 %v1323
    %v1397 = vunpack.c.h.b16 %v1323
    %v1398 = vunpack.c.l.b16 %v1324
    %v1399 = vunpack.c.h.b16 %v1324
    %v1400 = vunpack.c.l.b16 %v1325
    %v1401 = vunpack.c.h.b16 %v1325
    %v1402 = vunpack.c.l.b16 %v1326
    %v1403 = vunpack.c.h.b16 %v1326
    %v1404 = vunpack.c.l.b16 %v1327
    %v1405 = vunpack.c.h.b16 %v1327
    %v1406 = vunpack.c.l.b16 %v1328
    %v1407 = vunpack.c.h.b16 %v1328
    %v1408 = vunpack.c.l.b16 %v1329
    %v1409 = vunpack.c.h.b16 %v1329
    %v1410 = vunpack.c.l.b16 %v1330
    %v1411 = vunpack.c.h.b16 %v1330
    %v1412 = vunpack.c.l.b16 %v1331
    %v1413 = vunpack.c.h.b16 %v1331
    %v1414 = vunpack.c.l.b16 %v1332
    %v1415 = vunpack.c.h.b16 %v1332
    %v1416 = vunpack.c.l.b16 %v1333
    %v1417 = vunpack.c.h.b16 %v1333
    %v1418 = vunpack.c.l.b16 %v1334
    %v1419 = vunpack.c.h.b16 %v1334
    %v1420 = vunpack.c.l.b16 %v1335
    %v1421 = vunpack.c.h.b16 %v1335
    %v1422 = vunpack.c.l.b16 %v1336
    %v1423 = vunpack.c.h.b16 %v1336
    %v1424 = vunpack.c.l.b16 %v1337
    %v1425 = vunpack.c.h.b16 %v1337
    %v1426 = vunpack.c.l.b16 %v1338
    %v1427 = vunpack.c.h.b16 %v1338
    %v1428 = vunpack.c.l.b16 %v1339
    %v1429 = vunpack.c.h.b16 %v1339
    %v1430 = vunpack.c.l.b16 %v1340
    %v1431 = vunpack.c.h.b16 %v1340
    %v1432 = vunpack.c.l.b16 %v1341
    %v1433 = vunpack.c.h.b16 %v1341
    %v1434 = vunpack.c.l.b16 %v1342
    %v1435 = vunpack.c.h.b16 %v1342
    %v1436 = vunpack.c.l.b16 %v1343
    %v1437 = vunpack.c.h.b16 %v1343
    %v1438 = vunpack.c.l.b16 %v1344
    %v1439 = vunpack.c.h.b16 %v1344
    %v1440 = vunpack.c.l.b16 %v1345
    %v1441 = vunpack.c.h.b16 %v1345
    %v1442 = vpack.c.b16 %v1382, %v1378
    %v1443 = vpack.c.b16 %v1383, %v1379
    %v1444 = vpack.c.b16 %v1384, %v1380
    %v1445 = vpack.c.b16 %v1385, %v1381
    %v1446 = vpack.c.b16 %v1390, %v1386
    %v1447 = vpack.c.b16 %v1391, %v1387
    %v1448 = vpack.c.b16 %v1392, %v1388
    %v1449 = vpack.c.b16 %v1393, %v1389
    %v1450 = vpack.c.b16 %v1398, %v1394
    %v1451 = vpack.c.b16 %v1399, %v1395
    %v1452 = vpack.c.b16 %v1400, %v1396
    %v1453 = vpack.c.b16 %v1401, %v1397
    %v1454 = vpack.c.b16 %v1406, %v1402
    %v1455 = vpack.c.b16 %v1407, %v1403
    %v1456 = vpack.c.b16 %v1408, %v1404
    %v1457 = vpack.c.b16 %v1409, %v1405
    %v1458 = vpack.c.b16 %v1414, %v1410
    %v1459 = vpack.c.b16 %v1415, %v1411
    %v1460 = vpack.c.b16 %v1416, %v1412
    %v1461 = vpack.c.b16 %v1417, %v1413
    %v1462 = vpack.c.b16 %v1422, %v1418
    %v1463 = vpack.c.b16 %v1423, %v1419
    %v1464 = vpack.c.b16 %v1424, %v1420
    %v1465 = vpack.c.b16 %v1425, %v1421
    %v1466 = vpack.c.b16 %v1430, %v1426
    %v1467 = vpack.c.b16 %v1431, %v1427
    %v1468 = vpack.c.b16 %v1432, %v1428
    %v1469 = vpack.c.b16 %v1433, %v1429
    %v1470 = vpack.c.b16 %v1438, %v1434
    %v1471 = vpack.c.b16 %v1439, %v1435
    %v1472 = vpack.c.b16 %v1440, %v1436
    %v1473 = vpack.c.b16 %v1441, %v1437
    %1506 = vmatpush.bf16.msra.mxu0 %v1470
    %1507 = vmatpush.bf16.msra.mxu0 %v1466
    %1508 = vmatpush.bf16.msra.mxu0 %v1462
    %1509 = vmatpush.bf16.msra.mxu0 %v1458
    %1510 = vmatpush.bf16.msra.mxu0 %v1454
    %1511 = vmatpush.bf16.msra.mxu0 %v1450
    %1512 = vmatpush.bf16.msra.mxu0 %v1446
    %1513 = vmatpush.bf16.msra.mxu0 %v1442
    %1514 = vmatmul.bf16.gmra.mxu0 %v1313
    %v1515 = vpop.f32.mrf.mxu0
    %v1516 = vadd.f32 0.0, %v1515
    %v1517 = vpop.f32.mrf.mxu0
    %1518 = vdwg.mxu0
    %1519 = vmatpush.bf16.msra.mxu0 %v1471
    %1520 = vmatpush.bf16.msra.mxu0 %v1467
    %1521 = vmatpush.bf16.msra.mxu0 %v1463
    %1522 = vmatpush.bf16.msra.mxu0 %v1459
    %1523 = vmatpush.bf16.msra.mxu0 %v1455
    %1524 = vmatpush.bf16.msra.mxu0 %v1451
    %1525 = vmatpush.bf16.msra.mxu0 %v1447
    %1526 = vmatpush.bf16.msra.mxu0 %v1443
    %1527 = vmatmul.bf16.gmra.mxu0 %v1313
    %v1528 = vpop.f32.mrf.mxu0
    %v1529 = vadd.f32 0.0, %v1528
    %v1530 = vpop.f32.mrf.mxu0
    %1531 = vdwg.mxu0
    %1532 = vmatpush.bf16.msra.mxu0 %v1472
    %1533 = vmatpush.bf16.msra.mxu0 %v1468
    %1534 = vmatpush.bf16.msra.mxu0 %v1464
    %1535 = vmatpush.bf16.msra.mxu0 %v1460
    %1536 = vmatpush.bf16.msra.mxu0 %v1456
    %1537 = vmatpush.bf16.msra.mxu0 %v1452
    %1538 = vmatpush.bf16.msra.mxu0 %v1448
    %1539 = vmatpush.bf16.msra.mxu0 %v1444
    %1540 = vmatmul.bf16.gmra.mxu0 %v1313
    %v1541 = vpop.f32.mrf.mxu0
    %v1542 = vadd.f32 0.0, %v1541
    %v1543 = vpop.f32.mrf.mxu0
    %1544 = vdwg.mxu0
    %1545 = vmatpush.bf16.msra.mxu0 %v1473
    %1546 = vmatpush.bf16.msra.mxu0 %v1469
    %1547 = vmatpush.bf16.msra.mxu0 %v1465
    %1548 = vmatpush.bf16.msra.mxu0 %v1461
    %1549 = vmatpush.bf16.msra.mxu0 %v1457
    %1550 = vmatpush.bf16.msra.mxu0 %v1453
    %1551 = vmatpush.bf16.msra.mxu0 %v1449
    %1552 = vmatpush.bf16.msra.mxu0 %v1445
    %1553 = vmatmul.bf16.gmra.mxu0 %v1313
    %v1554 = vpop.f32.mrf.mxu0
    %v1555 = vadd.f32 0.0, %v1554
    %v1556 = vpop.f32.mrf.mxu0
    %1557 = vdwg.mxu0
    %v1558 = vadd.f32 %v1309, %v1516
    %v1559 = vadd.f32 %v1310, %v1529
    %v1560 = vadd.f32 %v1311, %v1542
    %v1561 = vadd.f32 %v1312, %v1555
    %v1562 = vxor.u32 %v1558, 2147483648
    %v1563 = vmul.f32 %v1562, 1.442695
    %v1564 = vpow.pop %v1563
    %v1565 = vadd.f32 %v1564, 1.0
    %v1566 = vrcp.pop %v1565
    %v1567 = vmul.f32 %v1565, %v1566
    %v1568 = vsub.f32 1.0, %v1567
    %v1569 = vmul.f32 %v1566, %v1568
    %v1570 = vadd.f32 %v1566, %v1569
    %vm1571 = vweird.f32 %v1565
    %vm1572 = vweird.f32 %v1566
    %vm1573 = vmor %vm1571, %vm1572
    %v1574 = vsel %vm1573, %v1566, %v1570
    %v1575 = vand.u32 2147483647, %v1565
    %vm1576 = vcmp.eq.f32.partialorder %v1575, 8.507059e+37
    %v1577 = vand.u32 %v1565, 2147483648
    %v1578 = vor.u32 1.1754944e-38, %v1577
    %v1579 = vsel %vm1576, %v1578, %v1574
    %v1580 = vmul.f32 1.0, %v1579
    %v1581 = vxor.u32 %v1559, 2147483648
    %v1582 = vmul.f32 %v1581, 1.442695
    %v1583 = vpow.pop %v1582
    %v1584 = vadd.f32 %v1583, 1.0
    %v1585 = vrcp.pop %v1584
    %v1586 = vmul.f32 %v1584, %v1585
    %v1587 = vsub.f32 1.0, %v1586
    %v1588 = vmul.f32 %v1585, %v1587
    %v1589 = vadd.f32 %v1585, %v1588
    %vm1590 = vweird.f32 %v1584
    %vm1591 = vweird.f32 %v1585
    %vm1592 = vmor %vm1590, %vm1591
    %v1593 = vsel %vm1592, %v1585, %v1589
    %v1594 = vand.u32 2147483647, %v1584
    %vm1595 = vcmp.eq.f32.partialorder %v1594, 8.507059e+37
    %v1596 = vand.u32 %v1584, 2147483648
    %v1597 = vor.u32 1.1754944e-38, %v1596
    %v1598 = vsel %vm1595, %v1597, %v1593
    %v1599 = vmul.f32 1.0, %v1598
    %v1600 = vtanh.pop %v1560
    %v1601 = vxor.u32 %v1561, 2147483648
    %v1602 = vmul.f32 %v1601, 1.442695
    %v1603 = vpow.pop %v1602
    %v1604 = vadd.f32 %v1603, 1.0
    %v1605 = vrcp.pop %v1604
    %v1606 = vmul.f32 %v1604, %v1605
    %v1607 = vsub.f32 1.0, %v1606
    %v1608 = vmul.f32 %v1605, %v1607
    %v1609 = vadd.f32 %v1605, %v1608
    %vm1610 = vweird.f32 %v1604
    %vm1611 = vweird.f32 %v1605
    %vm1612 = vmor %vm1610, %vm1611
    %v1613 = vsel %vm1612, %v1605, %v1609
    %v1614 = vand.u32 2147483647, %v1604
    %vm1615 = vcmp.eq.f32.partialorder %v1614, 8.507059e+37
    %v1616 = vand.u32 %v1604, 2147483648
    %v1617 = vor.u32 1.1754944e-38, %v1616
    %v1618 = vsel %vm1615, %v1617, %v1613
    %v1619 = vmul.f32 1.0, %v1618
    %v1620 = vmul.f32 %v1599, %v1298
    %v1621 = vmul.f32 %v1580, %v1600
    %v1622 = vadd.f32 %v1620, %v1621
    %v1623 = vtanh.pop %v1622
    %v1624 = vmul.f32 %v1619, %v1623
    %s1625 = scalar_lea.vmem [#allocation5], 24
    %v1626 = vld [vmem:[%s1625] sm:$0xff]
    %v1627 = vmul.f32 %v1624, %v1626
    %s1628 = scalar_lea.vmem [#allocation11], 24
    %1629 = vst [vmem:[%s1628] sm:$0xff] %v1627
    %s1630 = smul.u32 4, 4
    %s1631 = smul.addr %s1630, 8
    %s1632 = scalar_lea.vmem [#allocation4], %s1631
    %v1633 = vld [vmem:[%s1632] sm:$0xff]
    %v1634 = vld [vmem:[%s1632 + $0x8] sm:$0xff]
    %v1635 = vld [vmem:[%s1632 + $0x10] sm:$0xff]
    %v1636 = vld [vmem:[%s1632 + $0x18] sm:$0xff]
    %v1637 = vpack.c.bf16 %v1624, %v1624
    %v1638 = vld [vmem:[#allocation10] sm:$0xff]
    %v1639 = vld [vmem:[#allocation10 + $0x8] sm:$0xff]
    %v1640 = vld [vmem:[#allocation10 + $0x10] sm:$0xff]
    %v1641 = vld [vmem:[#allocation10 + $0x18] sm:$0xff]
    %v1642 = vld [vmem:[#allocation10 + $0x20] sm:$0xff]
    %v1643 = vld [vmem:[#allocation10 + $0x28] sm:$0xff]
    %v1644 = vld [vmem:[#allocation10 + $0x30] sm:$0xff]
    %v1645 = vld [vmem:[#allocation10 + $0x38] sm:$0xff]
    %v1646 = vld [vmem:[#allocation10 + $0x40] sm:$0xff]
    %v1647 = vld [vmem:[#allocation10 + $0x48] sm:$0xff]
    %v1648 = vld [vmem:[#allocation10 + $0x50] sm:$0xff]
    %v1649 = vld [vmem:[#allocation10 + $0x58] sm:$0xff]
    %v1650 = vld [vmem:[#allocation10 + $0x60] sm:$0xff]
    %v1651 = vld [vmem:[#allocation10 + $0x68] sm:$0xff]
    %v1652 = vld [vmem:[#allocation10 + $0x70] sm:$0xff]
    %v1653 = vld [vmem:[#allocation10 + $0x78] sm:$0xff]
    %v1654 = vld [vmem:[#allocation10 + $0x80] sm:$0xff]
    %v1655 = vld [vmem:[#allocation10 + $0x88] sm:$0xff]
    %v1656 = vld [vmem:[#allocation10 + $0x90] sm:$0xff]
    %v1657 = vld [vmem:[#allocation10 + $0x98] sm:$0xff]
    %v1658 = vld [vmem:[#allocation10 + $0xa0] sm:$0xff]
    %v1659 = vld [vmem:[#allocation10 + $0xa8] sm:$0xff]
    %v1660 = vld [vmem:[#allocation10 + $0xb0] sm:$0xff]
    %v1661 = vld [vmem:[#allocation10 + $0xb8] sm:$0xff]
    %v1662 = vld [vmem:[#allocation10 + $0xc0] sm:$0xff]
    %v1663 = vld [vmem:[#allocation10 + $0xc8] sm:$0xff]
    %v1664 = vld [vmem:[#allocation10 + $0xd0] sm:$0xff]
    %v1665 = vld [vmem:[#allocation10 + $0xd8] sm:$0xff]
    %v1666 = vld [vmem:[#allocation10 + $0xe0] sm:$0xff]
    %v1667 = vld [vmem:[#allocation10 + $0xe8] sm:$0xff]
    %v1668 = vld [vmem:[#allocation10 + $0xf0] sm:$0xff]
    %v1669 = vld [vmem:[#allocation10 + $0xf8] sm:$0xff]
    %v1702 = vunpack.c.l.b16 %v1638
    %v1703 = vunpack.c.h.b16 %v1638
    %v1704 = vunpack.c.l.b16 %v1639
    %v1705 = vunpack.c.h.b16 %v1639
    %v1706 = vunpack.c.l.b16 %v1640
    %v1707 = vunpack.c.h.b16 %v1640
    %v1708 = vunpack.c.l.b16 %v1641
    %v1709 = vunpack.c.h.b16 %v1641
    %v1710 = vunpack.c.l.b16 %v1642
    %v1711 = vunpack.c.h.b16 %v1642
    %v1712 = vunpack.c.l.b16 %v1643
    %v1713 = vunpack.c.h.b16 %v1643
    %v1714 = vunpack.c.l.b16 %v1644
    %v1715 = vunpack.c.h.b16 %v1644
    %v1716 = vunpack.c.l.b16 %v1645
    %v1717 = vunpack.c.h.b16 %v1645
    %v1718 = vunpack.c.l.b16 %v1646
    %v1719 = vunpack.c.h.b16 %v1646
    %v1720 = vunpack.c.l.b16 %v1647
    %v1721 = vunpack.c.h.b16 %v1647
    %v1722 = vunpack.c.l.b16 %v1648
    %v1723 = vunpack.c.h.b16 %v1648
    %v1724 = vunpack.c.l.b16 %v1649
    %v1725 = vunpack.c.h.b16 %v1649
    %v1726 = vunpack.c.l.b16 %v1650
    %v1727 = vunpack.c.h.b16 %v1650
    %v1728 = vunpack.c.l.b16 %v1651
    %v1729 = vunpack.c.h.b16 %v1651
    %v1730 = vunpack.c.l.b16 %v1652
    %v1731 = vunpack.c.h.b16 %v1652
    %v1732 = vunpack.c.l.b16 %v1653
    %v1733 = vunpack.c.h.b16 %v1653
    %v1734 = vunpack.c.l.b16 %v1654
    %v1735 = vunpack.c.h.b16 %v1654
    %v1736 = vunpack.c.l.b16 %v1655
    %v1737 = vunpack.c.h.b16 %v1655
    %v1738 = vunpack.c.l.b16 %v1656
    %v1739 = vunpack.c.h.b16 %v1656
    %v1740 = vunpack.c.l.b16 %v1657
    %v1741 = vunpack.c.h.b16 %v1657
    %v1742 = vunpack.c.l.b16 %v1658
    %v1743 = vunpack.c.h.b16 %v1658
    %v1744 = vunpack.c.l.b16 %v1659
    %v1745 = vunpack.c.h.b16 %v1659
    %v1746 = vunpack.c.l.b16 %v1660
    %v1747 = vunpack.c.h.b16 %v1660
    %v1748 = vunpack.c.l.b16 %v1661
    %v1749 = vunpack.c.h.b16 %v1661
    %v1750 = vunpack.c.l.b16 %v1662
    %v1751 = vunpack.c.h.b16 %v1662
    %v1752 = vunpack.c.l.b16 %v1663
    %v1753 = vunpack.c.h.b16 %v1663
    %v1754 = vunpack.c.l.b16 %v1664
    %v1755 = vunpack.c.h.b16 %v1664
    %v1756 = vunpack.c.l.b16 %v1665
    %v1757 = vunpack.c.h.b16 %v1665
    %v1758 = vunpack.c.l.b16 %v1666
    %v1759 = vunpack.c.h.b16 %v1666
    %v1760 = vunpack.c.l.b16 %v1667
    %v1761 = vunpack.c.h.b16 %v1667
    %v1762 = vunpack.c.l.b16 %v1668
    %v1763 = vunpack.c.h.b16 %v1668
    %v1764 = vunpack.c.l.b16 %v1669
    %v1765 = vunpack.c.h.b16 %v1669
    %v1766 = vpack.c.b16 %v1706, %v1702
    %v1767 = vpack.c.b16 %v1707, %v1703
    %v1768 = vpack.c.b16 %v1708, %v1704
    %v1769 = vpack.c.b16 %v1709, %v1705
    %v1770 = vpack.c.b16 %v1714, %v1710
    %v1771 = vpack.c.b16 %v1715, %v1711
    %v1772 = vpack.c.b16 %v1716, %v1712
    %v1773 = vpack.c.b16 %v1717, %v1713
    %v1774 = vpack.c.b16 %v1722, %v1718
    %v1775 = vpack.c.b16 %v1723, %v1719
    %v1776 = vpack.c.b16 %v1724, %v1720
    %v1777 = vpack.c.b16 %v1725, %v1721
    %v1778 = vpack.c.b16 %v1730, %v1726
    %v1779 = vpack.c.b16 %v1731, %v1727
    %v1780 = vpack.c.b16 %v1732, %v1728
    %v1781 = vpack.c.b16 %v1733, %v1729
    %v1782 = vpack.c.b16 %v1738, %v1734
    %v1783 = vpack.c.b16 %v1739, %v1735
    %v1784 = vpack.c.b16 %v1740, %v1736
    %v1785 = vpack.c.b16 %v1741, %v1737
    %v1786 = vpack.c.b16 %v1746, %v1742
    %v1787 = vpack.c.b16 %v1747, %v1743
    %v1788 = vpack.c.b16 %v1748, %v1744
    %v1789 = vpack.c.b16 %v1749, %v1745
    %v1790 = vpack.c.b16 %v1754, %v1750
    %v1791 = vpack.c.b16 %v1755, %v1751
    %v1792 = vpack.c.b16 %v1756, %v1752
    %v1793 = vpack.c.b16 %v1757, %v1753
    %v1794 = vpack.c.b16 %v1762, %v1758
    %v1795 = vpack.c.b16 %v1763, %v1759
    %v1796 = vpack.c.b16 %v1764, %v1760
    %v1797 = vpack.c.b16 %v1765, %v1761
    %1830 = vmatpush.bf16.msra.mxu0 %v1794
    %1831 = vmatpush.bf16.msra.mxu0 %v1790
    %1832 = vmatpush.bf16.msra.mxu0 %v1786
    %1833 = vmatpush.bf16.msra.mxu0 %v1782
    %1834 = vmatpush.bf16.msra.mxu0 %v1778
    %1835 = vmatpush.bf16.msra.mxu0 %v1774
    %1836 = vmatpush.bf16.msra.mxu0 %v1770
    %1837 = vmatpush.bf16.msra.mxu0 %v1766
    %1838 = vmatmul.bf16.gmra.mxu0 %v1637
    %v1839 = vpop.f32.mrf.mxu0
    %v1840 = vadd.f32 0.0, %v1839
    %v1841 = vpop.f32.mrf.mxu0
    %1842 = vdwg.mxu0
    %1843 = vmatpush.bf16.msra.mxu0 %v1795
    %1844 = vmatpush.bf16.msra.mxu0 %v1791
    %1845 = vmatpush.bf16.msra.mxu0 %v1787
    %1846 = vmatpush.bf16.msra.mxu0 %v1783
    %1847 = vmatpush.bf16.msra.mxu0 %v1779
    %1848 = vmatpush.bf16.msra.mxu0 %v1775
    %1849 = vmatpush.bf16.msra.mxu0 %v1771
    %1850 = vmatpush.bf16.msra.mxu0 %v1767
    %1851 = vmatmul.bf16.gmra.mxu0 %v1637
    %v1852 = vpop.f32.mrf.mxu0
    %v1853 = vadd.f32 0.0, %v1852
    %v1854 = vpop.f32.mrf.mxu0
    %1855 = vdwg.mxu0
    %1856 = vmatpush.bf16.msra.mxu0 %v1796
    %1857 = vmatpush.bf16.msra.mxu0 %v1792
    %1858 = vmatpush.bf16.msra.mxu0 %v1788
    %1859 = vmatpush.bf16.msra.mxu0 %v1784
    %1860 = vmatpush.bf16.msra.mxu0 %v1780
    %1861 = vmatpush.bf16.msra.mxu0 %v1776
    %1862 = vmatpush.bf16.msra.mxu0 %v1772
    %1863 = vmatpush.bf16.msra.mxu0 %v1768
    %1864 = vmatmul.bf16.gmra.mxu0 %v1637
    %v1865 = vpop.f32.mrf.mxu0
    %v1866 = vadd.f32 0.0, %v1865
    %v1867 = vpop.f32.mrf.mxu0
    %1868 = vdwg.mxu0
    %1869 = vmatpush.bf16.msra.mxu0 %v1797
    %1870 = vmatpush.bf16.msra.mxu0 %v1793
    %1871 = vmatpush.bf16.msra.mxu0 %v1789
    %1872 = vmatpush.bf16.msra.mxu0 %v1785
    %1873 = vmatpush.bf16.msra.mxu0 %v1781
    %1874 = vmatpush.bf16.msra.mxu0 %v1777
    %1875 = vmatpush.bf16.msra.mxu0 %v1773
    %1876 = vmatpush.bf16.msra.mxu0 %v1769
    %1877 = vmatmul.bf16.gmra.mxu0 %v1637
    %v1878 = vpop.f32.mrf.mxu0
    %v1879 = vadd.f32 0.0, %v1878
    %v1880 = vpop.f32.mrf.mxu0
    %1881 = vdwg.mxu0
    %v1882 = vadd.f32 %v1633, %v1840
    %v1883 = vadd.f32 %v1634, %v1853
    %v1884 = vadd.f32 %v1635, %v1866
    %v1885 = vadd.f32 %v1636, %v1879
    %v1886 = vxor.u32 %v1882, 2147483648
    %v1887 = vmul.f32 %v1886, 1.442695
    %v1888 = vpow.pop %v1887
    %v1889 = vadd.f32 %v1888, 1.0
    %v1890 = vrcp.pop %v1889
    %v1891 = vmul.f32 %v1889, %v1890
    %v1892 = vsub.f32 1.0, %v1891
    %v1893 = vmul.f32 %v1890, %v1892
    %v1894 = vadd.f32 %v1890, %v1893
    %vm1895 = vweird.f32 %v1889
    %vm1896 = vweird.f32 %v1890
    %vm1897 = vmor %vm1895, %vm1896
    %v1898 = vsel %vm1897, %v1890, %v1894
    %v1899 = vand.u32 2147483647, %v1889
    %vm1900 = vcmp.eq.f32.partialorder %v1899, 8.507059e+37
    %v1901 = vand.u32 %v1889, 2147483648
    %v1902 = vor.u32 1.1754944e-38, %v1901
    %v1903 = vsel %vm1900, %v1902, %v1898
    %v1904 = vmul.f32 1.0, %v1903
    %v1905 = vxor.u32 %v1883, 2147483648
    %v1906 = vmul.f32 %v1905, 1.442695
    %v1907 = vpow.pop %v1906
    %v1908 = vadd.f32 %v1907, 1.0
    %v1909 = vrcp.pop %v1908
    %v1910 = vmul.f32 %v1908, %v1909
    %v1911 = vsub.f32 1.0, %v1910
    %v1912 = vmul.f32 %v1909, %v1911
    %v1913 = vadd.f32 %v1909, %v1912
    %vm1914 = vweird.f32 %v1908
    %vm1915 = vweird.f32 %v1909
    %vm1916 = vmor %vm1914, %vm1915
    %v1917 = vsel %vm1916, %v1909, %v1913
    %v1918 = vand.u32 2147483647, %v1908
    %vm1919 = vcmp.eq.f32.partialorder %v1918, 8.507059e+37
    %v1920 = vand.u32 %v1908, 2147483648
    %v1921 = vor.u32 1.1754944e-38, %v1920
    %v1922 = vsel %vm1919, %v1921, %v1917
    %v1923 = vmul.f32 1.0, %v1922
    %v1924 = vtanh.pop %v1884
    %v1925 = vxor.u32 %v1885, 2147483648
    %v1926 = vmul.f32 %v1925, 1.442695
    %v1927 = vpow.pop %v1926
    %v1928 = vadd.f32 %v1927, 1.0
    %v1929 = vrcp.pop %v1928
    %v1930 = vmul.f32 %v1928, %v1929
    %v1931 = vsub.f32 1.0, %v1930
    %v1932 = vmul.f32 %v1929, %v1931
    %v1933 = vadd.f32 %v1929, %v1932
    %vm1934 = vweird.f32 %v1928
    %vm1935 = vweird.f32 %v1929
    %vm1936 = vmor %vm1934, %vm1935
    %v1937 = vsel %vm1936, %v1929, %v1933
    %v1938 = vand.u32 2147483647, %v1928
    %vm1939 = vcmp.eq.f32.partialorder %v1938, 8.507059e+37
    %v1940 = vand.u32 %v1928, 2147483648
    %v1941 = vor.u32 1.1754944e-38, %v1940
    %v1942 = vsel %vm1939, %v1941, %v1937
    %v1943 = vmul.f32 1.0, %v1942
    %v1944 = vmul.f32 %v1923, %v1622
    %v1945 = vmul.f32 %v1904, %v1924
    %v1946 = vadd.f32 %v1944, %v1945
    %v1947 = vtanh.pop %v1946
    %v1948 = vmul.f32 %v1943, %v1947
    %s1949 = scalar_lea.vmem [#allocation5], 32
    %v1950 = vld [vmem:[%s1949] sm:$0xff]
    %v1951 = vmul.f32 %v1948, %v1950
    %s1952 = scalar_lea.vmem [#allocation11], 32
    %1953 = vst [vmem:[%s1952] sm:$0xff] %v1951
    %s1954 = smul.u32 5, 4
    %s1955 = smul.addr %s1954, 8
    %s1956 = scalar_lea.vmem [#allocation4], %s1955
    %v1957 = vld [vmem:[%s1956] sm:$0xff]
    %v1958 = vld [vmem:[%s1956 + $0x8] sm:$0xff]
    %v1959 = vld [vmem:[%s1956 + $0x10] sm:$0xff]
    %v1960 = vld [vmem:[%s1956 + $0x18] sm:$0xff]
    %v1961 = vpack.c.bf16 %v1948, %v1948
    %v1962 = vld [vmem:[#allocation10] sm:$0xff]
    %v1963 = vld [vmem:[#allocation10 + $0x8] sm:$0xff]
    %v1964 = vld [vmem:[#allocation10 + $0x10] sm:$0xff]
    %v1965 = vld [vmem:[#allocation10 + $0x18] sm:$0xff]
    %v1966 = vld [vmem:[#allocation10 + $0x20] sm:$0xff]
    %v1967 = vld [vmem:[#allocation10 + $0x28] sm:$0xff]
    %v1968 = vld [vmem:[#allocation10 + $0x30] sm:$0xff]
    %v1969 = vld [vmem:[#allocation10 + $0x38] sm:$0xff]
    %v1970 = vld [vmem:[#allocation10 + $0x40] sm:$0xff]
    %v1971 = vld [vmem:[#allocation10 + $0x48] sm:$0xff]
    %v1972 = vld [vmem:[#allocation10 + $0x50] sm:$0xff]
    %v1973 = vld [vmem:[#allocation10 + $0x58] sm:$0xff]
    %v1974 = vld [vmem:[#allocation10 + $0x60] sm:$0xff]
    %v1975 = vld [vmem:[#allocation10 + $0x68] sm:$0xff]
    %v1976 = vld [vmem:[#allocation10 + $0x70] sm:$0xff]
    %v1977 = vld [vmem:[#allocation10 + $0x78] sm:$0xff]
    %v1978 = vld [vmem:[#allocation10 + $0x80] sm:$0xff]
    %v1979 = vld [vmem:[#allocation10 + $0x88] sm:$0xff]
    %v1980 = vld [vmem:[#allocation10 + $0x90] sm:$0xff]
    %v1981 = vld [vmem:[#allocation10 + $0x98] sm:$0xff]
    %v1982 = vld [vmem:[#allocation10 + $0xa0] sm:$0xff]
    %v1983 = vld [vmem:[#allocation10 + $0xa8] sm:$0xff]
    %v1984 = vld [vmem:[#allocation10 + $0xb0] sm:$0xff]
    %v1985 = vld [vmem:[#allocation10 + $0xb8] sm:$0xff]
    %v1986 = vld [vmem:[#allocation10 + $0xc0] sm:$0xff]
    %v1987 = vld [vmem:[#allocation10 + $0xc8] sm:$0xff]
    %v1988 = vld [vmem:[#allocation10 + $0xd0] sm:$0xff]
    %v1989 = vld [vmem:[#allocation10 + $0xd8] sm:$0xff]
    %v1990 = vld [vmem:[#allocation10 + $0xe0] sm:$0xff]
    %v1991 = vld [vmem:[#allocation10 + $0xe8] sm:$0xff]
    %v1992 = vld [vmem:[#allocation10 + $0xf0] sm:$0xff]
    %v1993 = vld [vmem:[#allocation10 + $0xf8] sm:$0xff]
    %v2026 = vunpack.c.l.b16 %v1962
    %v2027 = vunpack.c.h.b16 %v1962
    %v2028 = vunpack.c.l.b16 %v1963
    %v2029 = vunpack.c.h.b16 %v1963
    %v2030 = vunpack.c.l.b16 %v1964
    %v2031 = vunpack.c.h.b16 %v1964
    %v2032 = vunpack.c.l.b16 %v1965
    %v2033 = vunpack.c.h.b16 %v1965
    %v2034 = vunpack.c.l.b16 %v1966
    %v2035 = vunpack.c.h.b16 %v1966
    %v2036 = vunpack.c.l.b16 %v1967
    %v2037 = vunpack.c.h.b16 %v1967
    %v2038 = vunpack.c.l.b16 %v1968
    %v2039 = vunpack.c.h.b16 %v1968
    %v2040 = vunpack.c.l.b16 %v1969
    %v2041 = vunpack.c.h.b16 %v1969
    %v2042 = vunpack.c.l.b16 %v1970
    %v2043 = vunpack.c.h.b16 %v1970
    %v2044 = vunpack.c.l.b16 %v1971
    %v2045 = vunpack.c.h.b16 %v1971
    %v2046 = vunpack.c.l.b16 %v1972
    %v2047 = vunpack.c.h.b16 %v1972
    %v2048 = vunpack.c.l.b16 %v1973
    %v2049 = vunpack.c.h.b16 %v1973
    %v2050 = vunpack.c.l.b16 %v1974
    %v2051 = vunpack.c.h.b16 %v1974
    %v2052 = vunpack.c.l.b16 %v1975
    %v2053 = vunpack.c.h.b16 %v1975
    %v2054 = vunpack.c.l.b16 %v1976
    %v2055 = vunpack.c.h.b16 %v1976
    %v2056 = vunpack.c.l.b16 %v1977
    %v2057 = vunpack.c.h.b16 %v1977
    %v2058 = vunpack.c.l.b16 %v1978
    %v2059 = vunpack.c.h.b16 %v1978
    %v2060 = vunpack.c.l.b16 %v1979
    %v2061 = vunpack.c.h.b16 %v1979
    %v2062 = vunpack.c.l.b16 %v1980
    %v2063 = vunpack.c.h.b16 %v1980
    %v2064 = vunpack.c.l.b16 %v1981
    %v2065 = vunpack.c.h.b16 %v1981
    %v2066 = vunpack.c.l.b16 %v1982
    %v2067 = vunpack.c.h.b16 %v1982
    %v2068 = vunpack.c.l.b16 %v1983
    %v2069 = vunpack.c.h.b16 %v1983
    %v2070 = vunpack.c.l.b16 %v1984
    %v2071 = vunpack.c.h.b16 %v1984
    %v2072 = vunpack.c.l.b16 %v1985
    %v2073 = vunpack.c.h.b16 %v1985
    %v2074 = vunpack.c.l.b16 %v1986
    %v2075 = vunpack.c.h.b16 %v1986
    %v2076 = vunpack.c.l.b16 %v1987
    %v2077 = vunpack.c.h.b16 %v1987
    %v2078 = vunpack.c.l.b16 %v1988
    %v2079 = vunpack.c.h.b16 %v1988
    %v2080 = vunpack.c.l.b16 %v1989
    %v2081 = vunpack.c.h.b16 %v1989
    %v2082 = vunpack.c.l.b16 %v1990
    %v2083 = vunpack.c.h.b16 %v1990
    %v2084 = vunpack.c.l.b16 %v1991
    %v2085 = vunpack.c.h.b16 %v1991
    %v2086 = vunpack.c.l.b16 %v1992
    %v2087 = vunpack.c.h.b16 %v1992
    %v2088 = vunpack.c.l.b16 %v1993
    %v2089 = vunpack.c.h.b16 %v1993
    %v2090 = vpack.c.b16 %v2030, %v2026
    %v2091 = vpack.c.b16 %v2031, %v2027
    %v2092 = vpack.c.b16 %v2032, %v2028
    %v2093 = vpack.c.b16 %v2033, %v2029
    %v2094 = vpack.c.b16 %v2038, %v2034
    %v2095 = vpack.c.b16 %v2039, %v2035
    %v2096 = vpack.c.b16 %v2040, %v2036
    %v2097 = vpack.c.b16 %v2041, %v2037
    %v2098 = vpack.c.b16 %v2046, %v2042
    %v2099 = vpack.c.b16 %v2047, %v2043
    %v2100 = vpack.c.b16 %v2048, %v2044
    %v2101 = vpack.c.b16 %v2049, %v2045
    %v2102 = vpack.c.b16 %v2054, %v2050
    %v2103 = vpack.c.b16 %v2055, %v2051
    %v2104 = vpack.c.b16 %v2056, %v2052
    %v2105 = vpack.c.b16 %v2057, %v2053
    %v2106 = vpack.c.b16 %v2062, %v2058
    %v2107 = vpack.c.b16 %v2063, %v2059
    %v2108 = vpack.c.b16 %v2064, %v2060
    %v2109 = vpack.c.b16 %v2065, %v2061
    %v2110 = vpack.c.b16 %v2070, %v2066
    %v2111 = vpack.c.b16 %v2071, %v2067
    %v2112 = vpack.c.b16 %v2072, %v2068
    %v2113 = vpack.c.b16 %v2073, %v2069
    %v2114 = vpack.c.b16 %v2078, %v2074
    %v2115 = vpack.c.b16 %v2079, %v2075
    %v2116 = vpack.c.b16 %v2080, %v2076
    %v2117 = vpack.c.b16 %v2081, %v2077
    %v2118 = vpack.c.b16 %v2086, %v2082
    %v2119 = vpack.c.b16 %v2087, %v2083
    %v2120 = vpack.c.b16 %v2088, %v2084
    %v2121 = vpack.c.b16 %v2089, %v2085
    %2154 = vmatpush.bf16.msra.mxu0 %v2118
    %2155 = vmatpush.bf16.msra.mxu0 %v2114
    %2156 = vmatpush.bf16.msra.mxu0 %v2110
    %2157 = vmatpush.bf16.msra.mxu0 %v2106
    %2158 = vmatpush.bf16.msra.mxu0 %v2102
    %2159 = vmatpush.bf16.msra.mxu0 %v2098
    %2160 = vmatpush.bf16.msra.mxu0 %v2094
    %2161 = vmatpush.bf16.msra.mxu0 %v2090
    %2162 = vmatmul.bf16.gmra.mxu0 %v1961
    %v2163 = vpop.f32.mrf.mxu0
    %v2164 = vadd.f32 0.0, %v2163
    %v2165 = vpop.f32.mrf.mxu0
    %2166 = vdwg.mxu0
    %2167 = vmatpush.bf16.msra.mxu0 %v2119
    %2168 = vmatpush.bf16.msra.mxu0 %v2115
    %2169 = vmatpush.bf16.msra.mxu0 %v2111
    %2170 = vmatpush.bf16.msra.mxu0 %v2107
    %2171 = vmatpush.bf16.msra.mxu0 %v2103
    %2172 = vmatpush.bf16.msra.mxu0 %v2099
    %2173 = vmatpush.bf16.msra.mxu0 %v2095
    %2174 = vmatpush.bf16.msra.mxu0 %v2091
    %2175 = vmatmul.bf16.gmra.mxu0 %v1961
    %v2176 = vpop.f32.mrf.mxu0
    %v2177 = vadd.f32 0.0, %v2176
    %v2178 = vpop.f32.mrf.mxu0
    %2179 = vdwg.mxu0
    %2180 = vmatpush.bf16.msra.mxu0 %v2120
    %2181 = vmatpush.bf16.msra.mxu0 %v2116
    %2182 = vmatpush.bf16.msra.mxu0 %v2112
    %2183 = vmatpush.bf16.msra.mxu0 %v2108
    %2184 = vmatpush.bf16.msra.mxu0 %v2104
    %2185 = vmatpush.bf16.msra.mxu0 %v2100
    %2186 = vmatpush.bf16.msra.mxu0 %v2096
    %2187 = vmatpush.bf16.msra.mxu0 %v2092
    %2188 = vmatmul.bf16.gmra.mxu0 %v1961
    %v2189 = vpop.f32.mrf.mxu0
    %v2190 = vadd.f32 0.0, %v2189
    %v2191 = vpop.f32.mrf.mxu0
    %2192 = vdwg.mxu0
    %2193 = vmatpush.bf16.msra.mxu0 %v2121
    %2194 = vmatpush.bf16.msra.mxu0 %v2117
    %2195 = vmatpush.bf16.msra.mxu0 %v2113
    %2196 = vmatpush.bf16.msra.mxu0 %v2109
    %2197 = vmatpush.bf16.msra.mxu0 %v2105
    %2198 = vmatpush.bf16.msra.mxu0 %v2101
    %2199 = vmatpush.bf16.msra.mxu0 %v2097
    %2200 = vmatpush.bf16.msra.mxu0 %v2093
    %2201 = vmatmul.bf16.gmra.mxu0 %v1961
    %v2202 = vpop.f32.mrf.mxu0
    %v2203 = vadd.f32 0.0, %v2202
    %v2204 = vpop.f32.mrf.mxu0
    %2205 = vdwg.mxu0
    %v2206 = vadd.f32 %v1957, %v2164
    %v2207 = vadd.f32 %v1958, %v2177
    %v2208 = vadd.f32 %v1959, %v2190
    %v2209 = vadd.f32 %v1960, %v2203
    %v2210 = vxor.u32 %v2206, 2147483648
    %v2211 = vmul.f32 %v2210, 1.442695
    %v2212 = vpow.pop %v2211
    %v2213 = vadd.f32 %v2212, 1.0
    %v2214 = vrcp.pop %v2213
    %v2215 = vmul.f32 %v2213, %v2214
    %v2216 = vsub.f32 1.0, %v2215
    %v2217 = vmul.f32 %v2214, %v2216
    %v2218 = vadd.f32 %v2214, %v2217
    %vm2219 = vweird.f32 %v2213
    %vm2220 = vweird.f32 %v2214
    %vm2221 = vmor %vm2219, %vm2220
    %v2222 = vsel %vm2221, %v2214, %v2218
    %v2223 = vand.u32 2147483647, %v2213
    %vm2224 = vcmp.eq.f32.partialorder %v2223, 8.507059e+37
    %v2225 = vand.u32 %v2213, 2147483648
    %v2226 = vor.u32 1.1754944e-38, %v2225
    %v2227 = vsel %vm2224, %v2226, %v2222
    %v2228 = vmul.f32 1.0, %v2227
    %v2229 = vxor.u32 %v2207, 2147483648
    %v2230 = vmul.f32 %v2229, 1.442695
    %v2231 = vpow.pop %v2230
    %v2232 = vadd.f32 %v2231, 1.0
    %v2233 = vrcp.pop %v2232
    %v2234 = vmul.f32 %v2232, %v2233
    %v2235 = vsub.f32 1.0, %v2234
    %v2236 = vmul.f32 %v2233, %v2235
    %v2237 = vadd.f32 %v2233, %v2236
    %vm2238 = vweird.f32 %v2232
    %vm2239 = vweird.f32 %v2233
    %vm2240 = vmor %vm2238, %vm2239
    %v2241 = vsel %vm2240, %v2233, %v2237
    %v2242 = vand.u32 2147483647, %v2232
    %vm2243 = vcmp.eq.f32.partialorder %v2242, 8.507059e+37
    %v2244 = vand.u32 %v2232, 2147483648
    %v2245 = vor.u32 1.1754944e-38, %v2244
    %v2246 = vsel %vm2243, %v2245, %v2241
    %v2247 = vmul.f32 1.0, %v2246
    %v2248 = vtanh.pop %v2208
    %v2249 = vxor.u32 %v2209, 2147483648
    %v2250 = vmul.f32 %v2249, 1.442695
    %v2251 = vpow.pop %v2250
    %v2252 = vadd.f32 %v2251, 1.0
    %v2253 = vrcp.pop %v2252
    %v2254 = vmul.f32 %v2252, %v2253
    %v2255 = vsub.f32 1.0, %v2254
    %v2256 = vmul.f32 %v2253, %v2255
    %v2257 = vadd.f32 %v2253, %v2256
    %vm2258 = vweird.f32 %v2252
    %vm2259 = vweird.f32 %v2253
    %vm2260 = vmor %vm2258, %vm2259
    %v2261 = vsel %vm2260, %v2253, %v2257
    %v2262 = vand.u32 2147483647, %v2252
    %vm2263 = vcmp.eq.f32.partialorder %v2262, 8.507059e+37
    %v2264 = vand.u32 %v2252, 2147483648
    %v2265 = vor.u32 1.1754944e-38, %v2264
    %v2266 = vsel %vm2263, %v2265, %v2261
    %v2267 = vmul.f32 1.0, %v2266
    %v2268 = vmul.f32 %v2247, %v1946
    %v2269 = vmul.f32 %v2228, %v2248
    %v2270 = vadd.f32 %v2268, %v2269
    %v2271 = vtanh.pop %v2270
    %v2272 = vmul.f32 %v2267, %v2271
    %s2273 = scalar_lea.vmem [#allocation5], 40
    %v2274 = vld [vmem:[%s2273] sm:$0xff]
    %v2275 = vmul.f32 %v2272, %v2274
    %s2276 = scalar_lea.vmem [#allocation11], 40
    %2277 = vst [vmem:[%s2276] sm:$0xff] %v2275
    %s2278 = smul.u32 6, 4
    %s2279 = smul.addr %s2278, 8
    %s2280 = scalar_lea.vmem [#allocation4], %s2279
    %v2281 = vld [vmem:[%s2280] sm:$0xff]
    %v2282 = vld [vmem:[%s2280 + $0x8] sm:$0xff]
    %v2283 = vld [vmem:[%s2280 + $0x10] sm:$0xff]
    %v2284 = vld [vmem:[%s2280 + $0x18] sm:$0xff]
    %v2285 = vpack.c.bf16 %v2272, %v2272
    %v2286 = vld [vmem:[#allocation10] sm:$0xff]
    %v2287 = vld [vmem:[#allocation10 + $0x8] sm:$0xff]
    %v2288 = vld [vmem:[#allocation10 + $0x10] sm:$0xff]
    %v2289 = vld [vmem:[#allocation10 + $0x18] sm:$0xff]
    %v2290 = vld [vmem:[#allocation10 + $0x20] sm:$0xff]
    %v2291 = vld [vmem:[#allocation10 + $0x28] sm:$0xff]
    %v2292 = vld [vmem:[#allocation10 + $0x30] sm:$0xff]
    %v2293 = vld [vmem:[#allocation10 + $0x38] sm:$0xff]
    %v2294 = vld [vmem:[#allocation10 + $0x40] sm:$0xff]
    %v2295 = vld [vmem:[#allocation10 + $0x48] sm:$0xff]
    %v2296 = vld [vmem:[#allocation10 + $0x50] sm:$0xff]
    %v2297 = vld [vmem:[#allocation10 + $0x58] sm:$0xff]
    %v2298 = vld [vmem:[#allocation10 + $0x60] sm:$0xff]
    %v2299 = vld [vmem:[#allocation10 + $0x68] sm:$0xff]
    %v2300 = vld [vmem:[#allocation10 + $0x70] sm:$0xff]
    %v2301 = vld [vmem:[#allocation10 + $0x78] sm:$0xff]
    %v2302 = vld [vmem:[#allocation10 + $0x80] sm:$0xff]
    %v2303 = vld [vmem:[#allocation10 + $0x88] sm:$0xff]
    %v2304 = vld [vmem:[#allocation10 + $0x90] sm:$0xff]
    %v2305 = vld [vmem:[#allocation10 + $0x98] sm:$0xff]
    %v2306 = vld [vmem:[#allocation10 + $0xa0] sm:$0xff]
    %v2307 = vld [vmem:[#allocation10 + $0xa8] sm:$0xff]
    %v2308 = vld [vmem:[#allocation10 + $0xb0] sm:$0xff]
    %v2309 = vld [vmem:[#allocation10 + $0xb8] sm:$0xff]
    %v2310 = vld [vmem:[#allocation10 + $0xc0] sm:$0xff]
    %v2311 = vld [vmem:[#allocation10 + $0xc8] sm:$0xff]
    %v2312 = vld [vmem:[#allocation10 + $0xd0] sm:$0xff]
    %v2313 = vld [vmem:[#allocation10 + $0xd8] sm:$0xff]
    %v2314 = vld [vmem:[#allocation10 + $0xe0] sm:$0xff]
    %v2315 = vld [vmem:[#allocation10 + $0xe8] sm:$0xff]
    %v2316 = vld [vmem:[#allocation10 + $0xf0] sm:$0xff]
    %v2317 = vld [vmem:[#allocation10 + $0xf8] sm:$0xff]
    %v2350 = vunpack.c.l.b16 %v2286
    %v2351 = vunpack.c.h.b16 %v2286
    %v2352 = vunpack.c.l.b16 %v2287
    %v2353 = vunpack.c.h.b16 %v2287
    %v2354 = vunpack.c.l.b16 %v2288
    %v2355 = vunpack.c.h.b16 %v2288
    %v2356 = vunpack.c.l.b16 %v2289
    %v2357 = vunpack.c.h.b16 %v2289
    %v2358 = vunpack.c.l.b16 %v2290
    %v2359 = vunpack.c.h.b16 %v2290
    %v2360 = vunpack.c.l.b16 %v2291
    %v2361 = vunpack.c.h.b16 %v2291
    %v2362 = vunpack.c.l.b16 %v2292
    %v2363 = vunpack.c.h.b16 %v2292
    %v2364 = vunpack.c.l.b16 %v2293
    %v2365 = vunpack.c.h.b16 %v2293
    %v2366 = vunpack.c.l.b16 %v2294
    %v2367 = vunpack.c.h.b16 %v2294
    %v2368 = vunpack.c.l.b16 %v2295
    %v2369 = vunpack.c.h.b16 %v2295
    %v2370 = vunpack.c.l.b16 %v2296
    %v2371 = vunpack.c.h.b16 %v2296
    %v2372 = vunpack.c.l.b16 %v2297
    %v2373 = vunpack.c.h.b16 %v2297
    %v2374 = vunpack.c.l.b16 %v2298
    %v2375 = vunpack.c.h.b16 %v2298
    %v2376 = vunpack.c.l.b16 %v2299
    %v2377 = vunpack.c.h.b16 %v2299
    %v2378 = vunpack.c.l.b16 %v2300
    %v2379 = vunpack.c.h.b16 %v2300
    %v2380 = vunpack.c.l.b16 %v2301
    %v2381 = vunpack.c.h.b16 %v2301
    %v2382 = vunpack.c.l.b16 %v2302
    %v2383 = vunpack.c.h.b16 %v2302
    %v2384 = vunpack.c.l.b16 %v2303
    %v2385 = vunpack.c.h.b16 %v2303
    %v2386 = vunpack.c.l.b16 %v2304
    %v2387 = vunpack.c.h.b16 %v2304
    %v2388 = vunpack.c.l.b16 %v2305
    %v2389 = vunpack.c.h.b16 %v2305
    %v2390 = vunpack.c.l.b16 %v2306
    %v2391 = vunpack.c.h.b16 %v2306
    %v2392 = vunpack.c.l.b16 %v2307
    %v2393 = vunpack.c.h.b16 %v2307
    %v2394 = vunpack.c.l.b16 %v2308
    %v2395 = vunpack.c.h.b16 %v2308
    %v2396 = vunpack.c.l.b16 %v2309
    %v2397 = vunpack.c.h.b16 %v2309
    %v2398 = vunpack.c.l.b16 %v2310
    %v2399 = vunpack.c.h.b16 %v2310
    %v2400 = vunpack.c.l.b16 %v2311
    %v2401 = vunpack.c.h.b16 %v2311
    %v2402 = vunpack.c.l.b16 %v2312
    %v2403 = vunpack.c.h.b16 %v2312
    %v2404 = vunpack.c.l.b16 %v2313
    %v2405 = vunpack.c.h.b16 %v2313
    %v2406 = vunpack.c.l.b16 %v2314
    %v2407 = vunpack.c.h.b16 %v2314
    %v2408 = vunpack.c.l.b16 %v2315
    %v2409 = vunpack.c.h.b16 %v2315
    %v2410 = vunpack.c.l.b16 %v2316
    %v2411 = vunpack.c.h.b16 %v2316
    %v2412 = vunpack.c.l.b16 %v2317
    %v2413 = vunpack.c.h.b16 %v2317
    %v2414 = vpack.c.b16 %v2354, %v2350
    %v2415 = vpack.c.b16 %v2355, %v2351
    %v2416 = vpack.c.b16 %v2356, %v2352
    %v2417 = vpack.c.b16 %v2357, %v2353
    %v2418 = vpack.c.b16 %v2362, %v2358
    %v2419 = vpack.c.b16 %v2363, %v2359
    %v2420 = vpack.c.b16 %v2364, %v2360
    %v2421 = vpack.c.b16 %v2365, %v2361
    %v2422 = vpack.c.b16 %v2370, %v2366
    %v2423 = vpack.c.b16 %v2371, %v2367
    %v2424 = vpack.c.b16 %v2372, %v2368
    %v2425 = vpack.c.b16 %v2373, %v2369
    %v2426 = vpack.c.b16 %v2378, %v2374
    %v2427 = vpack.c.b16 %v2379, %v2375
    %v2428 = vpack.c.b16 %v2380, %v2376
    %v2429 = vpack.c.b16 %v2381, %v2377
    %v2430 = vpack.c.b16 %v2386, %v2382
    %v2431 = vpack.c.b16 %v2387, %v2383
    %v2432 = vpack.c.b16 %v2388, %v2384
    %v2433 = vpack.c.b16 %v2389, %v2385
    %v2434 = vpack.c.b16 %v2394, %v2390
    %v2435 = vpack.c.b16 %v2395, %v2391
    %v2436 = vpack.c.b16 %v2396, %v2392
    %v2437 = vpack.c.b16 %v2397, %v2393
    %v2438 = vpack.c.b16 %v2402, %v2398
    %v2439 = vpack.c.b16 %v2403, %v2399
    %v2440 = vpack.c.b16 %v2404, %v2400
    %v2441 = vpack.c.b16 %v2405, %v2401
    %v2442 = vpack.c.b16 %v2410, %v2406
    %v2443 = vpack.c.b16 %v2411, %v2407
    %v2444 = vpack.c.b16 %v2412, %v2408
    %v2445 = vpack.c.b16 %v2413, %v2409
    %2478 = vmatpush.bf16.msra.mxu0 %v2442
    %2479 = vmatpush.bf16.msra.mxu0 %v2438
    %2480 = vmatpush.bf16.msra.mxu0 %v2434
    %2481 = vmatpush.bf16.msra.mxu0 %v2430
    %2482 = vmatpush.bf16.msra.mxu0 %v2426
    %2483 = vmatpush.bf16.msra.mxu0 %v2422
    %2484 = vmatpush.bf16.msra.mxu0 %v2418
    %2485 = vmatpush.bf16.msra.mxu0 %v2414
    %2486 = vmatmul.bf16.gmra.mxu0 %v2285
    %v2487 = vpop.f32.mrf.mxu0
    %v2488 = vadd.f32 0.0, %v2487
    %v2489 = vpop.f32.mrf.mxu0
    %2490 = vdwg.mxu0
    %2491 = vmatpush.bf16.msra.mxu0 %v2443
    %2492 = vmatpush.bf16.msra.mxu0 %v2439
    %2493 = vmatpush.bf16.msra.mxu0 %v2435
    %2494 = vmatpush.bf16.msra.mxu0 %v2431
    %2495 = vmatpush.bf16.msra.mxu0 %v2427
    %2496 = vmatpush.bf16.msra.mxu0 %v2423
    %2497 = vmatpush.bf16.msra.mxu0 %v2419
    %2498 = vmatpush.bf16.msra.mxu0 %v2415
    %2499 = vmatmul.bf16.gmra.mxu0 %v2285
    %v2500 = vpop.f32.mrf.mxu0
    %v2501 = vadd.f32 0.0, %v2500
    %v2502 = vpop.f32.mrf.mxu0
    %2503 = vdwg.mxu0
    %2504 = vmatpush.bf16.msra.mxu0 %v2444
    %2505 = vmatpush.bf16.msra.mxu0 %v2440
    %2506 = vmatpush.bf16.msra.mxu0 %v2436
    %2507 = vmatpush.bf16.msra.mxu0 %v2432
    %2508 = vmatpush.bf16.msra.mxu0 %v2428
    %2509 = vmatpush.bf16.msra.mxu0 %v2424
    %2510 = vmatpush.bf16.msra.mxu0 %v2420
    %2511 = vmatpush.bf16.msra.mxu0 %v2416
    %2512 = vmatmul.bf16.gmra.mxu0 %v2285
    %v2513 = vpop.f32.mrf.mxu0
    %v2514 = vadd.f32 0.0, %v2513
    %v2515 = vpop.f32.mrf.mxu0
    %2516 = vdwg.mxu0
    %2517 = vmatpush.bf16.msra.mxu0 %v2445
    %2518 = vmatpush.bf16.msra.mxu0 %v2441
    %2519 = vmatpush.bf16.msra.mxu0 %v2437
    %2520 = vmatpush.bf16.msra.mxu0 %v2433
    %2521 = vmatpush.bf16.msra.mxu0 %v2429
    %2522 = vmatpush.bf16.msra.mxu0 %v2425
    %2523 = vmatpush.bf16.msra.mxu0 %v2421
    %2524 = vmatpush.bf16.msra.mxu0 %v2417
    %2525 = vmatmul.bf16.gmra.mxu0 %v2285
    %v2526 = vpop.f32.mrf.mxu0
    %v2527 = vadd.f32 0.0, %v2526
    %v2528 = vpop.f32.mrf.mxu0
    %2529 = vdwg.mxu0
    %v2530 = vadd.f32 %v2281, %v2488
    %v2531 = vadd.f32 %v2282, %v2501
    %v2532 = vadd.f32 %v2283, %v2514
    %v2533 = vadd.f32 %v2284, %v2527
    %v2534 = vxor.u32 %v2530, 2147483648
    %v2535 = vmul.f32 %v2534, 1.442695
    %v2536 = vpow.pop %v2535
    %v2537 = vadd.f32 %v2536, 1.0
    %v2538 = vrcp.pop %v2537
    %v2539 = vmul.f32 %v2537, %v2538
    %v2540 = vsub.f32 1.0, %v2539
    %v2541 = vmul.f32 %v2538, %v2540
    %v2542 = vadd.f32 %v2538, %v2541
    %vm2543 = vweird.f32 %v2537
    %vm2544 = vweird.f32 %v2538
    %vm2545 = vmor %vm2543, %vm2544
    %v2546 = vsel %vm2545, %v2538, %v2542
    %v2547 = vand.u32 2147483647, %v2537
    %vm2548 = vcmp.eq.f32.partialorder %v2547, 8.507059e+37
    %v2549 = vand.u32 %v2537, 2147483648
    %v2550 = vor.u32 1.1754944e-38, %v2549
    %v2551 = vsel %vm2548, %v2550, %v2546
    %v2552 = vmul.f32 1.0, %v2551
    %v2553 = vxor.u32 %v2531, 2147483648
    %v2554 = vmul.f32 %v2553, 1.442695
    %v2555 = vpow.pop %v2554
    %v2556 = vadd.f32 %v2555, 1.0
    %v2557 = vrcp.pop %v2556
    %v2558 = vmul.f32 %v2556, %v2557
    %v2559 = vsub.f32 1.0, %v2558
    %v2560 = vmul.f32 %v2557, %v2559
    %v2561 = vadd.f32 %v2557, %v2560
    %vm2562 = vweird.f32 %v2556
    %vm2563 = vweird.f32 %v2557
    %vm2564 = vmor %vm2562, %vm2563
    %v2565 = vsel %vm2564, %v2557, %v2561
    %v2566 = vand.u32 2147483647, %v2556
    %vm2567 = vcmp.eq.f32.partialorder %v2566, 8.507059e+37
    %v2568 = vand.u32 %v2556, 2147483648
    %v2569 = vor.u32 1.1754944e-38, %v2568
    %v2570 = vsel %vm2567, %v2569, %v2565
    %v2571 = vmul.f32 1.0, %v2570
    %v2572 = vtanh.pop %v2532
    %v2573 = vxor.u32 %v2533, 2147483648
    %v2574 = vmul.f32 %v2573, 1.442695
    %v2575 = vpow.pop %v2574
    %v2576 = vadd.f32 %v2575, 1.0
    %v2577 = vrcp.pop %v2576
    %v2578 = vmul.f32 %v2576, %v2577
    %v2579 = vsub.f32 1.0, %v2578
    %v2580 = vmul.f32 %v2577, %v2579
    %v2581 = vadd.f32 %v2577, %v2580
    %vm2582 = vweird.f32 %v2576
    %vm2583 = vweird.f32 %v2577
    %vm2584 = vmor %vm2582, %vm2583
    %v2585 = vsel %vm2584, %v2577, %v2581
    %v2586 = vand.u32 2147483647, %v2576
    %vm2587 = vcmp.eq.f32.partialorder %v2586, 8.507059e+37
    %v2588 = vand.u32 %v2576, 2147483648
    %v2589 = vor.u32 1.1754944e-38, %v2588
    %v2590 = vsel %vm2587, %v2589, %v2585
    %v2591 = vmul.f32 1.0, %v2590
    %v2592 = vmul.f32 %v2571, %v2270
    %v2593 = vmul.f32 %v2552, %v2572
    %v2594 = vadd.f32 %v2592, %v2593
    %v2595 = vtanh.pop %v2594
    %v2596 = vmul.f32 %v2591, %v2595
    %s2597 = scalar_lea.vmem [#allocation5], 48
    %v2598 = vld [vmem:[%s2597] sm:$0xff]
    %v2599 = vmul.f32 %v2596, %v2598
    %s2600 = scalar_lea.vmem [#allocation11], 48
    %2601 = vst [vmem:[%s2600] sm:$0xff] %v2599
    %s2602 = smul.u32 7, 4
    %s2603 = smul.addr %s2602, 8
    %s2604 = scalar_lea.vmem [#allocation4], %s2603
    %v2605 = vld [vmem:[%s2604] sm:$0xff]
    %v2606 = vld [vmem:[%s2604 + $0x8] sm:$0xff]
    %v2607 = vld [vmem:[%s2604 + $0x10] sm:$0xff]
    %v2608 = vld [vmem:[%s2604 + $0x18] sm:$0xff]
    %v2609 = vpack.c.bf16 %v2596, %v2596
    %v2610 = vld [vmem:[#allocation10] sm:$0xff]
    %v2611 = vld [vmem:[#allocation10 + $0x8] sm:$0xff]
    %v2612 = vld [vmem:[#allocation10 + $0x10] sm:$0xff]
    %v2613 = vld [vmem:[#allocation10 + $0x18] sm:$0xff]
    %v2614 = vld [vmem:[#allocation10 + $0x20] sm:$0xff]
    %v2615 = vld [vmem:[#allocation10 + $0x28] sm:$0xff]
    %v2616 = vld [vmem:[#allocation10 + $0x30] sm:$0xff]
    %v2617 = vld [vmem:[#allocation10 + $0x38] sm:$0xff]
    %v2618 = vld [vmem:[#allocation10 + $0x40] sm:$0xff]
    %v2619 = vld [vmem:[#allocation10 + $0x48] sm:$0xff]
    %v2620 = vld [vmem:[#allocation10 + $0x50] sm:$0xff]
    %v2621 = vld [vmem:[#allocation10 + $0x58] sm:$0xff]
    %v2622 = vld [vmem:[#allocation10 + $0x60] sm:$0xff]
    %v2623 = vld [vmem:[#allocation10 + $0x68] sm:$0xff]
    %v2624 = vld [vmem:[#allocation10 + $0x70] sm:$0xff]
    %v2625 = vld [vmem:[#allocation10 + $0x78] sm:$0xff]
    %v2626 = vld [vmem:[#allocation10 + $0x80] sm:$0xff]
    %v2627 = vld [vmem:[#allocation10 + $0x88] sm:$0xff]
    %v2628 = vld [vmem:[#allocation10 + $0x90] sm:$0xff]
    %v2629 = vld [vmem:[#allocation10 + $0x98] sm:$0xff]
    %v2630 = vld [vmem:[#allocation10 + $0xa0] sm:$0xff]
    %v2631 = vld [vmem:[#allocation10 + $0xa8] sm:$0xff]
    %v2632 = vld [vmem:[#allocation10 + $0xb0] sm:$0xff]
    %v2633 = vld [vmem:[#allocation10 + $0xb8] sm:$0xff]
    %v2634 = vld [vmem:[#allocation10 + $0xc0] sm:$0xff]
    %v2635 = vld [vmem:[#allocation10 + $0xc8] sm:$0xff]
    %v2636 = vld [vmem:[#allocation10 + $0xd0] sm:$0xff]
    %v2637 = vld [vmem:[#allocation10 + $0xd8] sm:$0xff]
    %v2638 = vld [vmem:[#allocation10 + $0xe0] sm:$0xff]
    %v2639 = vld [vmem:[#allocation10 + $0xe8] sm:$0xff]
    %v2640 = vld [vmem:[#allocation10 + $0xf0] sm:$0xff]
    %v2641 = vld [vmem:[#allocation10 + $0xf8] sm:$0xff]
    %v2674 = vunpack.c.l.b16 %v2610
    %v2675 = vunpack.c.h.b16 %v2610
    %v2676 = vunpack.c.l.b16 %v2611
    %v2677 = vunpack.c.h.b16 %v2611
    %v2678 = vunpack.c.l.b16 %v2612
    %v2679 = vunpack.c.h.b16 %v2612
    %v2680 = vunpack.c.l.b16 %v2613
    %v2681 = vunpack.c.h.b16 %v2613
    %v2682 = vunpack.c.l.b16 %v2614
    %v2683 = vunpack.c.h.b16 %v2614
    %v2684 = vunpack.c.l.b16 %v2615
    %v2685 = vunpack.c.h.b16 %v2615
    %v2686 = vunpack.c.l.b16 %v2616
    %v2687 = vunpack.c.h.b16 %v2616
    %v2688 = vunpack.c.l.b16 %v2617
    %v2689 = vunpack.c.h.b16 %v2617
    %v2690 = vunpack.c.l.b16 %v2618
    %v2691 = vunpack.c.h.b16 %v2618
    %v2692 = vunpack.c.l.b16 %v2619
    %v2693 = vunpack.c.h.b16 %v2619
    %v2694 = vunpack.c.l.b16 %v2620
    %v2695 = vunpack.c.h.b16 %v2620
    %v2696 = vunpack.c.l.b16 %v2621
    %v2697 = vunpack.c.h.b16 %v2621
    %v2698 = vunpack.c.l.b16 %v2622
    %v2699 = vunpack.c.h.b16 %v2622
    %v2700 = vunpack.c.l.b16 %v2623
    %v2701 = vunpack.c.h.b16 %v2623
    %v2702 = vunpack.c.l.b16 %v2624
    %v2703 = vunpack.c.h.b16 %v2624
    %v2704 = vunpack.c.l.b16 %v2625
    %v2705 = vunpack.c.h.b16 %v2625
    %v2706 = vunpack.c.l.b16 %v2626
    %v2707 = vunpack.c.h.b16 %v2626
    %v2708 = vunpack.c.l.b16 %v2627
    %v2709 = vunpack.c.h.b16 %v2627
    %v2710 = vunpack.c.l.b16 %v2628
    %v2711 = vunpack.c.h.b16 %v2628
    %v2712 = vunpack.c.l.b16 %v2629
    %v2713 = vunpack.c.h.b16 %v2629
    %v2714 = vunpack.c.l.b16 %v2630
    %v2715 = vunpack.c.h.b16 %v2630
    %v2716 = vunpack.c.l.b16 %v2631
    %v2717 = vunpack.c.h.b16 %v2631
    %v2718 = vunpack.c.l.b16 %v2632
    %v2719 = vunpack.c.h.b16 %v2632
    %v2720 = vunpack.c.l.b16 %v2633
    %v2721 = vunpack.c.h.b16 %v2633
    %v2722 = vunpack.c.l.b16 %v2634
    %v2723 = vunpack.c.h.b16 %v2634
    %v2724 = vunpack.c.l.b16 %v2635
    %v2725 = vunpack.c.h.b16 %v2635
    %v2726 = vunpack.c.l.b16 %v2636
    %v2727 = vunpack.c.h.b16 %v2636
    %v2728 = vunpack.c.l.b16 %v2637
    %v2729 = vunpack.c.h.b16 %v2637
    %v2730 = vunpack.c.l.b16 %v2638
    %v2731 = vunpack.c.h.b16 %v2638
    %v2732 = vunpack.c.l.b16 %v2639
    %v2733 = vunpack.c.h.b16 %v2639
    %v2734 = vunpack.c.l.b16 %v2640
    %v2735 = vunpack.c.h.b16 %v2640
    %v2736 = vunpack.c.l.b16 %v2641
    %v2737 = vunpack.c.h.b16 %v2641
    %v2738 = vpack.c.b16 %v2678, %v2674
    %v2739 = vpack.c.b16 %v2679, %v2675
    %v2740 = vpack.c.b16 %v2680, %v2676
    %v2741 = vpack.c.b16 %v2681, %v2677
    %v2742 = vpack.c.b16 %v2686, %v2682
    %v2743 = vpack.c.b16 %v2687, %v2683
    %v2744 = vpack.c.b16 %v2688, %v2684
    %v2745 = vpack.c.b16 %v2689, %v2685
    %v2746 = vpack.c.b16 %v2694, %v2690
    %v2747 = vpack.c.b16 %v2695, %v2691
    %v2748 = vpack.c.b16 %v2696, %v2692
    %v2749 = vpack.c.b16 %v2697, %v2693
    %v2750 = vpack.c.b16 %v2702, %v2698
    %v2751 = vpack.c.b16 %v2703, %v2699
    %v2752 = vpack.c.b16 %v2704, %v2700
    %v2753 = vpack.c.b16 %v2705, %v2701
    %v2754 = vpack.c.b16 %v2710, %v2706
    %v2755 = vpack.c.b16 %v2711, %v2707
    %v2756 = vpack.c.b16 %v2712, %v2708
    %v2757 = vpack.c.b16 %v2713, %v2709
    %v2758 = vpack.c.b16 %v2718, %v2714
    %v2759 = vpack.c.b16 %v2719, %v2715
    %v2760 = vpack.c.b16 %v2720, %v2716
    %v2761 = vpack.c.b16 %v2721, %v2717
    %v2762 = vpack.c.b16 %v2726, %v2722
    %v2763 = vpack.c.b16 %v2727, %v2723
    %v2764 = vpack.c.b16 %v2728, %v2724
    %v2765 = vpack.c.b16 %v2729, %v2725
    %v2766 = vpack.c.b16 %v2734, %v2730
    %v2767 = vpack.c.b16 %v2735, %v2731
    %v2768 = vpack.c.b16 %v2736, %v2732
    %v2769 = vpack.c.b16 %v2737, %v2733
    %2802 = vmatpush.bf16.msra.mxu0 %v2766
    %2803 = vmatpush.bf16.msra.mxu0 %v2762
    %2804 = vmatpush.bf16.msra.mxu0 %v2758
    %2805 = vmatpush.bf16.msra.mxu0 %v2754
    %2806 = vmatpush.bf16.msra.mxu0 %v2750
    %2807 = vmatpush.bf16.msra.mxu0 %v2746
    %2808 = vmatpush.bf16.msra.mxu0 %v2742
    %2809 = vmatpush.bf16.msra.mxu0 %v2738
    %2810 = vmatmul.bf16.gmra.mxu0 %v2609
    %v2811 = vpop.f32.mrf.mxu0
    %v2812 = vadd.f32 0.0, %v2811
    %v2813 = vpop.f32.mrf.mxu0
    %2814 = vdwg.mxu0
    %2815 = vmatpush.bf16.msra.mxu0 %v2767
    %2816 = vmatpush.bf16.msra.mxu0 %v2763
    %2817 = vmatpush.bf16.msra.mxu0 %v2759
    %2818 = vmatpush.bf16.msra.mxu0 %v2755
    %2819 = vmatpush.bf16.msra.mxu0 %v2751
    %2820 = vmatpush.bf16.msra.mxu0 %v2747
    %2821 = vmatpush.bf16.msra.mxu0 %v2743
    %2822 = vmatpush.bf16.msra.mxu0 %v2739
    %2823 = vmatmul.bf16.gmra.mxu0 %v2609
    %v2824 = vpop.f32.mrf.mxu0
    %v2825 = vadd.f32 0.0, %v2824
    %v2826 = vpop.f32.mrf.mxu0
    %2827 = vdwg.mxu0
    %2828 = vmatpush.bf16.msra.mxu0 %v2768
    %2829 = vmatpush.bf16.msra.mxu0 %v2764
    %2830 = vmatpush.bf16.msra.mxu0 %v2760
    %2831 = vmatpush.bf16.msra.mxu0 %v2756
    %2832 = vmatpush.bf16.msra.mxu0 %v2752
    %2833 = vmatpush.bf16.msra.mxu0 %v2748
    %2834 = vmatpush.bf16.msra.mxu0 %v2744
    %2835 = vmatpush.bf16.msra.mxu0 %v2740
    %2836 = vmatmul.bf16.gmra.mxu0 %v2609
    %v2837 = vpop.f32.mrf.mxu0
    %v2838 = vadd.f32 0.0, %v2837
    %v2839 = vpop.f32.mrf.mxu0
    %2840 = vdwg.mxu0
    %2841 = vmatpush.bf16.msra.mxu0 %v2769
    %2842 = vmatpush.bf16.msra.mxu0 %v2765
    %2843 = vmatpush.bf16.msra.mxu0 %v2761
    %2844 = vmatpush.bf16.msra.mxu0 %v2757
    %2845 = vmatpush.bf16.msra.mxu0 %v2753
    %2846 = vmatpush.bf16.msra.mxu0 %v2749
    %2847 = vmatpush.bf16.msra.mxu0 %v2745
    %2848 = vmatpush.bf16.msra.mxu0 %v2741
    %2849 = vmatmul.bf16.gmra.mxu0 %v2609
    %v2850 = vpop.f32.mrf.mxu0
    %v2851 = vadd.f32 0.0, %v2850
    %v2852 = vpop.f32.mrf.mxu0
    %2853 = vdwg.mxu0
    %v2854 = vadd.f32 %v2605, %v2812
    %v2855 = vadd.f32 %v2606, %v2825
    %v2856 = vadd.f32 %v2607, %v2838
    %v2857 = vadd.f32 %v2608, %v2851
    %v2858 = vxor.u32 %v2854, 2147483648
    %v2859 = vmul.f32 %v2858, 1.442695
    %v2860 = vpow.pop %v2859
    %v2861 = vadd.f32 %v2860, 1.0
    %v2862 = vrcp.pop %v2861
    %v2863 = vmul.f32 %v2861, %v2862
    %v2864 = vsub.f32 1.0, %v2863
    %v2865 = vmul.f32 %v2862, %v2864
    %v2866 = vadd.f32 %v2862, %v2865
    %vm2867 = vweird.f32 %v2861
    %vm2868 = vweird.f32 %v2862
    %vm2869 = vmor %vm2867, %vm2868
    %v2870 = vsel %vm2869, %v2862, %v2866
    %v2871 = vand.u32 2147483647, %v2861
    %vm2872 = vcmp.eq.f32.partialorder %v2871, 8.507059e+37
    %v2873 = vand.u32 %v2861, 2147483648
    %v2874 = vor.u32 1.1754944e-38, %v2873
    %v2875 = vsel %vm2872, %v2874, %v2870
    %v2876 = vmul.f32 1.0, %v2875
    %v2877 = vxor.u32 %v2855, 2147483648
    %v2878 = vmul.f32 %v2877, 1.442695
    %v2879 = vpow.pop %v2878
    %v2880 = vadd.f32 %v2879, 1.0
    %v2881 = vrcp.pop %v2880
    %v2882 = vmul.f32 %v2880, %v2881
    %v2883 = vsub.f32 1.0, %v2882
    %v2884 = vmul.f32 %v2881, %v2883
    %v2885 = vadd.f32 %v2881, %v2884
    %vm2886 = vweird.f32 %v2880
    %vm2887 = vweird.f32 %v2881
    %vm2888 = vmor %vm2886, %vm2887
    %v2889 = vsel %vm2888, %v2881, %v2885
    %v2890 = vand.u32 2147483647, %v2880
    %vm2891 = vcmp.eq.f32.partialorder %v2890, 8.507059e+37
    %v2892 = vand.u32 %v2880, 2147483648
    %v2893 = vor.u32 1.1754944e-38, %v2892
    %v2894 = vsel %vm2891, %v2893, %v2889
    %v2895 = vmul.f32 1.0, %v2894
    %v2896 = vtanh.pop %v2856
    %v2897 = vxor.u32 %v2857, 2147483648
    %v2898 = vmul.f32 %v2897, 1.442695
    %v2899 = vpow.pop %v2898
    %v2900 = vadd.f32 %v2899, 1.0
    %v2901 = vrcp.pop %v2900
    %v2902 = vmul.f32 %v2900, %v2901
    %v2903 = vsub.f32 1.0, %v2902
    %v2904 = vmul.f32 %v2901, %v2903
    %v2905 = vadd.f32 %v2901, %v2904
    %vm2906 = vweird.f32 %v2900
    %vm2907 = vweird.f32 %v2901
    %vm2908 = vmor %vm2906, %vm2907
    %v2909 = vsel %vm2908, %v2901, %v2905
    %v2910 = vand.u32 2147483647, %v2900
    %vm2911 = vcmp.eq.f32.partialorder %v2910, 8.507059e+37
    %v2912 = vand.u32 %v2900, 2147483648
    %v2913 = vor.u32 1.1754944e-38, %v2912
    %v2914 = vsel %vm2911, %v2913, %v2909
    %v2915 = vmul.f32 1.0, %v2914
    %v2916 = vmul.f32 %v2895, %v2594
    %v2917 = vmul.f32 %v2876, %v2896
    %v2918 = vadd.f32 %v2916, %v2917
    %v2919 = vtanh.pop %v2918
    %v2920 = vmul.f32 %v2915, %v2919
    %s2921 = scalar_lea.vmem [#allocation5], 56
    %v2922 = vld [vmem:[%s2921] sm:$0xff]
    %v2923 = vmul.f32 %v2920, %v2922
    %s2924 = scalar_lea.vmem [#allocation11], 56
    %2925 = vst [vmem:[%s2924] sm:$0xff] %v2923
    %2926 = vst [vmem:[#allocation2] sm:$0xff] %v2920
    %2927 = vst [vmem:[#allocation3] sm:$0xff] %v2918
    %2928 = vst [vmem:[#allocation12] sm:$0xff] %v2920
    %2929 = vst [vmem:[#allocation14] sm:$0xff] %v2918
    // Predicated region
    $region46: #{tpu_custom_call.1} parent=1 // pred_check
      _
    $region47: #{tpu_custom_call.1} parent=1 // pred_check_branch
      %2931 = sbr.rel (0) target = $region49
    $region48: #{tpu_custom_call.1} parent=1 // pred_region
      %2933 = vsyncadd [#allocation7], 0
      %s2934 = sshll.u32 [#allocation11], 4
      %s2935 = int_to_ptr.vmem [resolvable:$true] %s2934
      %s2936 = sshll.u32 %s7, 4
      %s2937 = int_to_ptr.hbm [resolvable:$true] %s2936
      %2942 = dma.vmem_to_hbm [thread:$0]  %s2935, 1024, %s2937, [#allocation7], 128, 128, 8
    $region49: #{tpu_custom_call.1} parent=1 // pred_fallthru
      _
    // Predicated region
    $region50: #{tpu_custom_call.1} parent=1 // pred_check
      _
    $region51: #{tpu_custom_call.1} parent=1 // pred_check_branch
      %2944 = sbr.rel (0) target = $region53
    $region52: #{tpu_custom_call.1} parent=1 // pred_region
      %2946 = vsyncadd [#allocation13], 0
      %s2948 = sshll.u32 [#allocation12], 4
      %s2949 = int_to_ptr.vmem [resolvable:$true] %s2948
      %s2950 = sshll.u32 %s8, 4
      %s2951 = int_to_ptr.hbm [resolvable:$true] %s2950
      %2953 = dma.vmem_to_hbm [thread:$0]  %s2949, 128, %s2951, [#allocation13]
    $region53: #{tpu_custom_call.1} parent=1 // pred_fallthru
      _
    // Predicated region
    $region54: #{tpu_custom_call.1} parent=1 // pred_check
      _
    $region55: #{tpu_custom_call.1} parent=1 // pred_check_branch
      %2955 = sbr.rel (0) target = $region57
    $region56: #{tpu_custom_call.1} parent=1 // pred_region
      %2957 = vsyncadd [#allocation13], 0
      %s2959 = sshll.u32 [#allocation14], 4
      %s2960 = int_to_ptr.vmem [resolvable:$true] %s2959
      %s2961 = sshll.u32 %s9, 4
      %s2962 = int_to_ptr.hbm [resolvable:$true] %s2961
      %2964 = dma.vmem_to_hbm [thread:$0]  %s2960, 128, %s2962, [#allocation13]
    $region57: #{tpu_custom_call.1} parent=1 // pred_fallthru
      _
    // Predicated region
    $region58: #{tpu_custom_call.1} parent=1 // pred_check
      _
    $region59: #{tpu_custom_call.1} parent=1 // pred_check_branch
      %2966 = sbr.rel (0) target = $region61
    $region60: #{tpu_custom_call.1} parent=1 // pred_region
      %2968 = dma.done [#allocation7], 1024
    $region61: #{tpu_custom_call.1} parent=1 // pred_fallthru
      _
    // Predicated region
    $region62: #{tpu_custom_call.1} parent=1 // pred_check
      _
    $region63: #{tpu_custom_call.1} parent=1 // pred_check_branch
      %2970 = sbr.rel (0) target = $region65
    $region64: #{tpu_custom_call.1} parent=1 // pred_region
      %2972 = dma.done [#allocation13], 128
    $region65: #{tpu_custom_call.1} parent=1 // pred_fallthru
      _
    // Predicated region
    $region66: #{tpu_custom_call.1} parent=1 // pred_check
      _
    $region67: #{tpu_custom_call.1} parent=1 // pred_check_branch
      %2974 = sbr.rel (0) target = $region69
    $region68: #{tpu_custom_call.1} parent=1 // pred_region
      %2976 = dma.done [#allocation13], 128
    $region69: #{tpu_custom_call.1} parent=1 // pred_fallthru
      _
    %2977 = vsyncpa [#allocation6], 1
    %2978 = vsyncpa [#allocation9], 1
    %2979 = vsyncpa [#allocation7], 1
    %2980 = vsyncpa [#allocation13], 1

</llo_original>
